<compile_context>
chip_gen: v7x
topology: tpu7x:2x2x1
jax: 0.10.0
libtpu: 0.0.40
codegen_flags: <defaults>
</compile_context>

<pallas_src>
import math
import numpy as np
import jax
import jax.numpy as jnp
from jax import lax
from jax.experimental import pallas as pl
from jax.experimental.pallas import tpu as pltpu


# ---------------------------------------------------------------------------
# Static helpers
# ---------------------------------------------------------------------------
def _round_up(x, m):
    return ((x + m - 1) // m) * m


def _time_chunk(T, B, H, max_chunk=32, vmem_budget=32 * 1024 * 1024):
    """Largest divisor of T <= max_chunk whose double-buffered blocks fit VMEM."""
    best = 1
    for tcn in range(1, min(T, max_chunk) + 1):
        if T % tcn != 0:
            continue
        buf = 2 * (2 * tcn * B * 4 * H * 2      # gf + gb blocks (bf16), 2-buffered
                   + 2 * tcn * B * H * 2)       # yf + yb blocks (bf16), 2-buffered
        buf += H * 8 * H * 2                    # resident W_hh (bf16)
        buf += 2 * 2 * B * H * 4                # h/c scratch (f32)
        if buf <= vmem_budget:
            best = tcn
    return best


def _row_block(R, max_rows=512):
    """Row tile + padded row count for the hoisted input projection."""
    rb = min(max_rows, _round_up(R, 8))
    return rb, _round_up(R, rb)


def _col_block(G, max_cols=512):
    """Gate-column tile for the projection (keeps resident weight small)."""
    if G <= max_cols:
        return G
    for tn in range(max_cols, 127, -128):
        if tn % 128 == 0 and G % tn == 0:
            return tn
    return G            # fallback: full width (full-dim blocks are always legal)


def _head_chunk(T, max_chunk=512):
    """Time tile for the head; must be a multiple of 128 (lane dim) or full T."""
    if T <= max_chunk:
        return T
    for tcn in range(max_chunk, 127, -128):
        if tcn % 128 == 0 and T % tcn == 0:
            return tcn
    return T


# ---------------------------------------------------------------------------
# Pallas kernels
# ---------------------------------------------------------------------------
def _make_proj_kernel(n_in):
    """gates = sum_i x_i @ W_i + b for both directions (bf16 MXU, f32 acc)."""
    def kernel(*args):
        x_refs = args[:n_in]
        w_refs = args[n_in:2 * n_in]
        b_ref = args[2 * n_in]
        out_ref = args[2 * n_in + 1]
        acc = jnp.dot(x_refs[0][...], w_refs[0][...],
                      preferred_element_type=jnp.float32)
        for x_ref, w_ref in zip(x_refs[1:], w_refs[1:]):
            acc = acc + jnp.dot(x_ref[...], w_ref[...],
                                preferred_element_type=jnp.float32)
        out_ref[...] = (acc + b_ref[...]).astype(out_ref.dtype)
    return kernel


def _lstm_cell(gates, c_prev, hidden):
    """Gate order (i, f, g, o), matching torch.nn.LSTM. All math in f32."""
    i = jax.nn.sigmoid(gates[:, 0 * hidden:1 * hidden])
    f = jax.nn.sigmoid(gates[:, 1 * hidden:2 * hidden])
    g = jnp.tanh(gates[:, 2 * hidden:3 * hidden])
    o = jax.nn.sigmoid(gates[:, 3 * hidden:4 * hidden])
    c_new = f * c_prev + i * g
    return c_new, o * jnp.tanh(c_new)


def _bilstm_recurrent_kernel(gf_ref, gb_ref, whh_ref, yf_ref, yb_ref,
                             h_scr, c_scr):
    """Fused fwd+bwd LSTM recurrence over one time chunk.

    gf_ref: (TC, Bp, 4H) bf16 precomputed input gates, fwd dir, time block c.
    gb_ref: (TC, Bp, 4H) bf16 precomputed input gates, bwd dir, block nC-1-c.
    whh_ref: (H, 8H) bf16 = [W_hh_fwd | W_hh_bwd] along output columns.
    yf_ref / yb_ref: (TC, Bp, H) bf16 hidden outputs (bwd written in reverse).
    h_scr / c_scr: (2Bp, H) f32 state, rows 0:Bp fwd, Bp:2Bp bwd.
    """
    c_idx = pl.program_id(0)

    @pl.when(c_idx == 0)
    def _():
        h_scr[...] = jnp.zeros_like(h_scr)
        c_scr[...] = jnp.zeros_like(c_scr)

    TC, Bp, G4 = gf_ref.shape
    H = whh_ref.shape[0]
    wh = whh_ref[...]                                 # (H, 8H) bf16, resident

    # State carried in registers across the whole chunk (one scratch read /
    # write per grid step instead of per time step).
    h0 = h_scr[...]
    c0 = c_scr[...]

    def step(s, carry):
        h, cc = carry                                 # (2Bp, H) f32 each
        # One MXU op per step for both directions: (2Bp, H) @ (H, 8H), bf16.
        gh = jnp.dot(h.astype(jnp.bfloat16), wh,
                     preferred_element_type=jnp.float32)            # (2Bp, 8H)
        gates_f = gf_ref[s].astype(jnp.float32) + gh[:Bp, :G4]
        gates_b = gb_ref[TC - 1 - s].astype(jnp.float32) + gh[Bp:, G4:]
        c_f, h_f = _lstm_cell(gates_f, cc[:Bp], H)
        c_b, h_b = _lstm_cell(gates_b, cc[Bp:], H)
        yf_ref[s] = h_f.astype(yf_ref.dtype)
        yb_ref[TC - 1 - s] = h_b.astype(yb_ref.dtype)
        return (jnp.concatenate([h_f, h_b], axis=0),
                jnp.concatenate([c_f, c_b], axis=0))

    h_last, c_last = lax.fori_loop(0, TC, step, (h0, c0), unroll=True)
    h_scr[...] = h_last
    c_scr[...] = c_last


def _head_kernel(yf_ref, yb_ref, wf_ref, wb_ref, b_ref, out_ref):
    """Linear(2H -> 1) + sigmoid; writes a lane-dense (Bp, tc) block."""
    # TODO(synk): with H not a multiple of 128 the per-gate / per-H slices are
    # sub-128-lane; a (B, 4, H_pad) gate layout would make them lane-aligned.
    zf = jnp.sum(yf_ref[...] * wf_ref[...].reshape(1, 1, -1), axis=-1)  # (tc,Bp)
    zb = jnp.sum(yb_ref[...] * wb_ref[...].reshape(1, 1, -1), axis=-1)
    z = zf + zb + b_ref[0, 0]
    out_ref[...] = jax.nn.sigmoid(z).T                                  # (Bp,tc)


# ---------------------------------------------------------------------------
# pallas_call wrappers
# ---------------------------------------------------------------------------
def input_projection(xs_2d, ws, b_cat):
    """xs_2d: list of (R, D_i) bf16; ws: list of (D_i, 8H) bf16; b_cat: (1, 8H)
    f32. Returns (R, 8H) bf16 gates for both directions."""
    R = xs_2d[0].shape[0]
    G = ws[0].shape[1]
    n_in = len(xs_2d)
    rb, R_pad = _row_block(R)
    if R_pad != R:
        xs_2d = [jnp.pad(x, ((0, R_pad - R), (0, 0))) for x in xs_2d]
    tn = _col_block(G)
    nR, nN = R_pad // rb, G // tn

    in_specs = ([pl.BlockSpec((rb, x.shape[1]), lambda r, n: (r, 0))
                 for x in xs_2d]
                + [pl.BlockSpec((w.shape[0], tn), lambda r, n: (0, n))
                   for w in ws]
                + [pl.BlockSpec((1, tn), lambda r, n: (0, n))])
    out = pl.pallas_call(
        _make_proj_kernel(n_in),
        out_shape=jax.ShapeDtypeStruct((R_pad, G), jnp.bfloat16),
        grid=(nR, nN),
        in_specs=in_specs,
        out_specs=pl.BlockSpec((rb, tn), lambda r, n: (r, n)),
        compiler_params=pltpu.CompilerParams(
            dimension_semantics=("parallel", "parallel"),
            vmem_limit_bytes=48 * 1024 * 1024),
    )(*xs_2d, *ws, b_cat)
    return out[:R] if R_pad != R else out


def bilstm_layer(gates_cat, whh_cat, *, tc):
    """gates_cat: (T, Bp, 8H) bf16 = [fwd gates | bwd gates]; whh_cat: (H, 8H)
    bf16. Returns (y_f, y_b), each (T, Bp, H) bf16."""
    T, Bp, G8 = gates_cat.shape
    H = whh_cat.shape[0]
    G4 = 4 * H
    nC = T // tc
    return pl.pallas_call(
        _bilstm_recurrent_kernel,
        out_shape=(jax.ShapeDtypeStruct((T, Bp, H), jnp.bfloat16),
                   jax.ShapeDtypeStruct((T, Bp, H), jnp.bfloat16)),
        grid=(nC,),
        in_specs=[
            # fwd gates: time block c, column half 0
            pl.BlockSpec((tc, Bp, G4), lambda c: (c, 0, 0)),
            # bwd gates: time block nC-1-c, column half 1 (reversal via index_map)
            pl.BlockSpec((tc, Bp, G4), lambda c: (nC - 1 - c, 0, 1)),
            pl.BlockSpec((H, G8), lambda c: (0, 0)),
        ],
        out_specs=(
            pl.BlockSpec((tc, Bp, H), lambda c: (c, 0, 0)),
            pl.BlockSpec((tc, Bp, H), lambda c: (nC - 1 - c, 0, 0)),
        ),
        scratch_shapes=[pltpu.VMEM((2 * Bp, H), jnp.float32),
                        pltpu.VMEM((2 * Bp, H), jnp.float32)],
        compiler_params=pltpu.CompilerParams(
            dimension_semantics=("arbitrary",),     # sequential recurrence
            vmem_limit_bytes=48 * 1024 * 1024),
    )(gates_cat, gates_cat, whh_cat)


def linear_sigmoid_head(y_f, y_b, w_f, w_b, b):
    """y_f / y_b: (T, Bp, H) bf16 -> sigmoid(Linear) as (Bp, T) f32."""
    T, Bp, H = y_f.shape
    tc = _head_chunk(T)
    nC = T // tc
    return pl.pallas_call(
        _head_kernel,
        out_shape=jax.ShapeDtypeStruct((Bp, T), jnp.float32),
        grid=(nC,),
        in_specs=[pl.BlockSpec((tc, Bp, H), lambda c: (c, 0, 0)),
                  pl.BlockSpec((tc, Bp, H), lambda c: (c, 0, 0)),
                  pl.BlockSpec((1, H), lambda c: (0, 0)),
                  pl.BlockSpec((1, H), lambda c: (0, 0)),
                  pl.BlockSpec((1, 1), lambda c: (0, 0))],
        out_specs=pl.BlockSpec((Bp, tc), lambda c: (0, c)),
        compiler_params=pltpu.CompilerParams(
            dimension_semantics=("parallel",)),
    )(y_f, y_b, w_f, w_b, b)


def blstm_forward(x_btf, packed):
    """x_btf: (B, T, n_features) -> predictions (B, T)."""
    x = jnp.transpose(x_btf, (1, 0, 2))                     # (T, B, F)
    T, B, _ = x.shape
    H = packed["layers"][0]["w_hh"].shape[0]

    # Pad batch once so every state / gate tile is sublane-aligned.
    Bp = _round_up(max(B, 8), 8)
    if Bp != B:
        x = jnp.pad(x, ((0, 0), (0, Bp - B), (0, 0)))
    x = x.astype(jnp.bfloat16)

    tc = _time_chunk(T, Bp, H)

    feats = [x]                      # per-layer input, kept as separate halves
    for layer in packed["layers"]:
        # Hoisted input projection: one big (T*Bp, D) @ (D, 8H) bf16 matmul.
        xs_2d = [f.reshape(T * Bp, f.shape[-1]) for f in feats]
        gates2d = input_projection(xs_2d, layer["w_ih"], layer["b"])
        gates = gates2d.reshape(T, Bp, 8 * H)
        y_f, y_b = bilstm_layer(gates, layer["w_hh"], tc=tc)
        feats = [y_f, y_b]           # no (T, Bp, 2H) concatenation between layers
        # TODO(synk): nn.LSTM inter-layer dropout only applies in training mode;
        # eval-mode (identity) semantics are used here.

    preds = linear_sigmoid_head(feats[0], feats[1], packed["head_wf"],
                                packed["head_wb"], packed["head_b"])   # (Bp, T)
    # Note: torch's .squeeze() would also drop a size-1 batch/time dim; we
    # always return (B, T).
    return preds[:B]


# ---------------------------------------------------------------------------
# Parameter init (shapes follow torch.nn.LSTM / nn.Linear) + Pallas packing
# ---------------------------------------------------------------------------
def init_params(key, n_features, hidden, layers):
    params = {"lstm": []}
    k = 1.0 / math.sqrt(hidden)
    for layer_idx in range(layers):
        d_in = n_features if layer_idx == 0 else 2 * hidden
        directions = []
        for _ in range(2):  # forward, backward
            key, k1, k2, k3, k4 = jax.random.split(key, 5)
            w_ih = jax.random.uniform(k1, (d_in, 4 * hidden), jnp.float32, -k, k)
            w_hh = jax.random.uniform(k2, (hidden, 4 * hidden), jnp.float32, -k, k)
            b_ih = jax.random.uniform(k3, (4 * hidden,), jnp.float32, -k, k)
            b_hh = jax.random.uniform(k4, (4 * hidden,), jnp.float32, -k, k)
            directions.append((w_ih, w_hh, (b_ih + b_hh).reshape(1, 4 * hidden)))
        params["lstm"].append(tuple(directions))
    kl = 1.0 / math.sqrt(2 * hidden)
    key, k1, k2 = jax.random.split(key, 3)
    params["linear_w"] = jax.random.uniform(k1, (1, 2 * hidden), jnp.float32, -kl, kl)
    params["linear_b"] = jax.random.uniform(k2, (1, 1), jnp.float32, -kl, kl)
    return params


def pack_params(params, hidden):
    """Pack per-direction weights into the fused bf16 layout used by the kernels."""
    H = hidden
    layers = []
    for li, (fwd, bwd) in enumerate(params["lstm"]):
        w_ih_f, w_hh_f, b_f = fwd
        w_ih_b, w_hh_b, b_b = bwd
        w_ih_cat = jnp.concatenate([w_ih_f, w_ih_b], axis=1).astype(jnp.bfloat16)
        if li == 0:
            w_ih_list = [w_ih_cat]                                    # (D_in, 8H)
        else:
            # Split the input-feature rows into the y_f / y_b halves so the
            # previous layer's outputs are never concatenated in HBM.
            w_ih_list = [w_ih_cat[:H], w_ih_cat[H:]]
        layers.append(dict(
            w_ih=w_ih_list,
            b=jnp.concatenate([b_f, b_b], axis=1),                    # (1, 8H) f32
            w_hh=jnp.concatenate([w_hh_f, w_hh_b],
                                 axis=1).astype(jnp.bfloat16),        # (H, 8H)
        ))
    w = params["linear_w"]                                            # (1, 2H)
    return dict(layers=layers,
                head_wf=w[:, :H], head_wb=w[:, H:],
                head_b=params["linear_b"])


# ---------------------------------------------------------------------------
# Pure-JAX f32 reference (for correctness check)
# ---------------------------------------------------------------------------
def _lstm_ref(x_seq, w_ih, w_hh, b, reverse):
    T, B, _ = x_seq.shape
    H = w_hh.shape[0]
    xs = x_seq[::-1] if reverse else x_seq

    def step(carry, x_t):
        h, c = carry
        g = x_t @ w_ih + h @ w_hh + b
        i = jax.nn.sigmoid(g[:, :H])
        f = jax.nn.sigmoid(g[:, H:2 * H])
        gg = jnp.tanh(g[:, 2 * H:3 * H])
        o = jax.nn.sigmoid(g[:, 3 * H:])
        c = f * c + i * gg
        h = o * jnp.tanh(c)
        return (h, c), h

    init = (jnp.zeros((B, H), jnp.float32), jnp.zeros((B, H), jnp.float32))
    _, ys = jax.lax.scan(step, init, xs)
    return ys[::-1] if reverse else ys


def blstm_ref(x_btf, params):
    h = jnp.transpose(x_btf, (1, 0, 2)).astype(jnp.float32)
    for fwd_p, bwd_p in params["lstm"]:
        yf = _lstm_ref(h, *fwd_p, reverse=False)
        yb = _lstm_ref(h, *bwd_p, reverse=True)
        h = jnp.concatenate([yf, yb], axis=-1)
    z = jnp.einsum("tbh,h->tb", h, params["linear_w"][0]) + params["linear_b"][0, 0]
    return jax.nn.sigmoid(z).T


# ---------------------------------------------------------------------------
if __name__ == "__main__":
    BATCH, SEQ, N_FEATURES, HIDDEN = 2, 8, 4, 32

    key = jax.random.PRNGKey(0)
    key, xkey = jax.random.split(key)
    x = jax.random.normal(xkey, (BATCH, SEQ, N_FEATURES), jnp.float32)
    params = init_params(key, N_FEATURES, HIDDEN, layers=2)
    packed = pack_params(params, HIDDEN)

    fwd = jax.jit(blstm_forward)
    out = jax.block_until_ready(fwd(x, packed))
    assert out.shape == (BATCH, SEQ), out.shape

    ref = blstm_ref(x, params)
    # bf16 MXU operands + bf16 gate/activation storage vs. the f32 reference.
    np.testing.assert_allclose(np.asarray(out), np.asarray(ref),
                               rtol=2e-2, atol=2e-2)
    print("KERNEL_OK")
</pallas_src>

<mosaic_0001>
module attributes {stable_mosaic.version = 11 : i64} {
  func.func @kernel(%arg0: i32, %arg1: i32, %arg2: memref<64x4xbf16, #tpu.memory_space<vmem>>, %arg3: memref<4x256xbf16, #tpu.memory_space<vmem>>, %arg4: memref<1x256xf32, #tpu.memory_space<vmem>>, %arg5: memref<64x256xbf16, #tpu.memory_space<vmem>>) attributes {dimension_semantics = [#tpu.dimension_semantics<parallel>, #tpu.dimension_semantics<parallel>], iteration_bounds = array<i64: 1, 1>, scalar_prefetch = 0 : i64, scratch_operands = 0 : i64, tpu.core_type = #tpu.core_type<tc>, window_params = [{transform_indices = @transform_0, window_bounds = array<i64: 64, 4>}, {transform_indices = @transform_1, window_bounds = array<i64: 4, 256>}, {transform_indices = @transform_2, window_bounds = array<i64: 1, 256>}, {transform_indices = @transform_3, window_bounds = array<i64: 64, 256>}]} {
    %c0 = arith.constant 0 : index
    %c0_0 = arith.constant 0 : index
    %0 = vector.load %arg2[%c0, %c0_0] : memref<64x4xbf16, #tpu.memory_space<vmem>>, vector<64x4xbf16>
    %c0_1 = arith.constant 0 : index
    %c0_2 = arith.constant 0 : index
    %1 = vector.load %arg3[%c0_1, %c0_2] : memref<4x256xbf16, #tpu.memory_space<vmem>>, vector<4x256xbf16>
    %cst = arith.constant dense<0.000000e+00> : vector<64x256xf32>
    %2 = tpu.matmul %0, %1, %cst {dimension_numbers = #tpu.dot_dimension_numbers<[1], [0], [0], [1], [0, 0, 1, 1], [], []>} : vector<64x4xbf16>, vector<4x256xbf16>, vector<64x256xf32> -> vector<64x256xf32>
    %c0_3 = arith.constant 0 : index
    %c0_4 = arith.constant 0 : index
    %3 = vector.load %arg4[%c0_3, %c0_4] : memref<1x256xf32, #tpu.memory_space<vmem>>, vector<1x256xf32>
    %4 = vector.broadcast %3 : vector<1x256xf32> to vector<64x256xf32>
    %5 = arith.addf %2, %4 : vector<64x256xf32>
    %6 = arith.truncf %5 : vector<64x256xf32> to vector<64x256xbf16>
    %c0_5 = arith.constant 0 : index
    %c0_6 = arith.constant 0 : index
    %7 = vector.load %arg5[%c0_5, %c0_6] : memref<64x256xbf16, #tpu.memory_space<vmem>>, vector<64x256xbf16>
    tpu.vector_store %arg5[%c0_5, %c0_6], %6 {strides = array<i32>} : memref<64x256xbf16, #tpu.memory_space<vmem>>, vector<64x256xbf16>,
    return
  }
  func.func @transform_0(%arg0: i32, %arg1: i32) -> (i32, i32) {
    %c0_i32 = arith.constant 0 : i32
    %c0_i32_0 = arith.constant 0 : i32
    return %arg0, %c0_i32 : i32, i32
  }
  func.func @transform_1(%arg0: i32, %arg1: i32) -> (i32, i32) {
    %c0_i32 = arith.constant 0 : i32
    %c0_i32_0 = arith.constant 0 : i32
    return %c0_i32, %arg1 : i32, i32
  }
  func.func @transform_2(%arg0: i32, %arg1: i32) -> (i32, i32) {
    %c0_i32 = arith.constant 0 : i32
    %c0_i32_0 = arith.constant 0 : i32
    return %c0_i32, %arg1 : i32, i32
  }
  func.func @transform_3(%arg0: i32, %arg1: i32) -> (i32, i32) {
    %c0_i32 = arith.constant 0 : i32
    return %arg0, %arg1 : i32, i32
  }
}

module attributes {stable_mosaic.version = 11 : i64} {
  func.func @kernel(%arg0: i32, %arg1: i32, %arg2: memref<64x32xbf16, #tpu.memory_space<vmem>>, %arg3: memref<64x32xbf16, #tpu.memory_space<vmem>>, %arg4: memref<32x256xbf16, #tpu.memory_space<vmem>>, %arg5: memref<32x256xbf16, #tpu.memory_space<vmem>>, %arg6: memref<1x256xf32, #tpu.memory_space<vmem>>, %arg7: memref<64x256xbf16, #tpu.memory_space<vmem>>) attributes {dimension_semantics = [#tpu.dimension_semantics<parallel>, #tpu.dimension_semantics<parallel>], iteration_bounds = array<i64: 1, 1>, scalar_prefetch = 0 : i64, scratch_operands = 0 : i64, tpu.core_type = #tpu.core_type<tc>, window_params = [{transform_indices = @transform_0, window_bounds = array<i64: 64, 32>}, {transform_indices = @transform_1, window_bounds = array<i64: 64, 32>}, {transform_indices = @transform_2, window_bounds = array<i64: 32, 256>}, {transform_indices = @transform_3, window_bounds = array<i64: 32, 256>}, {transform_indices = @transform_4, window_bounds = array<i64: 1, 256>}, {transform_indices = @transform_5, window_bounds = array<i64: 64, 256>}]} {
    %c0 = arith.constant 0 : index
    %c0_0 = arith.constant 0 : index
    %0 = vector.load %arg2[%c0, %c0_0] : memref<64x32xbf16, #tpu.memory_space<vmem>>, vector<64x32xbf16>
    %c0_1 = arith.constant 0 : index
    %c0_2 = arith.constant 0 : index
    %1 = vector.load %arg4[%c0_1, %c0_2] : memref<32x256xbf16, #tpu.memory_space<vmem>>, vector<32x256xbf16>
    %cst = arith.constant dense<0.000000e+00> : vector<64x256xf32>
    %2 = tpu.matmul %0, %1, %cst {dimension_numbers = #tpu.dot_dimension_numbers<[1], [0], [0], [1], [0, 0, 1, 1], [], []>} : vector<64x32xbf16>, vector<32x256xbf16>, vector<64x256xf32> -> vector<64x256xf32>
    %c0_3 = arith.constant 0 : index
    %c0_4 = arith.constant 0 : index
    %3 = vector.load %arg3[%c0_3, %c0_4] : memref<64x32xbf16, #tpu.memory_space<vmem>>, vector<64x32xbf16>
    %c0_5 = arith.constant 0 : index
    %c0_6 = arith.constant 0 : index
    %4 = vector.load %arg5[%c0_5, %c0_6] : memref<32x256xbf16, #tpu.memory_space<vmem>>, vector<32x256xbf16>
    %cst_7 = arith.constant dense<0.000000e+00> : vector<64x256xf32>
    %5 = tpu.matmul %3, %4, %cst_7 {dimension_numbers = #tpu.dot_dimension_numbers<[1], [0], [0], [1], [0, 0, 1, 1], [], []>} : vector<64x32xbf16>, vector<32x256xbf16>, vector<64x256xf32> -> vector<64x256xf32>
    %6 = arith.addf %2, %5 : vector<64x256xf32>
    %c0_8 = arith.constant 0 : index
    %c0_9 = arith.constant 0 : index
    %7 = vector.load %arg6[%c0_8, %c0_9] : memref<1x256xf32, #tpu.memory_space<vmem>>, vector<1x256xf32>
    %8 = vector.broadcast %7 : vector<1x256xf32> to vector<64x256xf32>
    %9 = arith.addf %6, %8 : vector<64x256xf32>
    %10 = arith.truncf %9 : vector<64x256xf32> to vector<64x256xbf16>
    %c0_10 = arith.constant 0 : index
    %c0_11 = arith.constant 0 : index
    %11 = vector.load %arg7[%c0_10, %c0_11] : memref<64x256xbf16, #tpu.memory_space<vmem>>, vector<64x256xbf16>
    tpu.vector_store %arg7[%c0_10, %c0_11], %10 {strides = array<i32>} : memref<64x256xbf16, #tpu.memory_space<vmem>>, vector<64x256xbf16>,
    return
  }
  func.func @transform_0(%arg0: i32, %arg1: i32) -> (i32, i32) {
    %c0_i32 = arith.constant 0 : i32
    %c0_i32_0 = arith.constant 0 : i32
    return %arg0, %c0_i32 : i32, i32
  }
  func.func @transform_1(%arg0: i32, %arg1: i32) -> (i32, i32) {
    %c0_i32 = arith.constant 0 : i32
    %c0_i32_0 = arith.constant 0 : i32
    return %arg0, %c0_i32 : i32, i32
  }
  func.func @transform_2(%arg0: i32, %arg1: i32) -> (i32, i32) {
    %c0_i32 = arith.constant 0 : i32
    %c0_i32_0 = arith.constant 0 : i32
    return %c0_i32, %arg1 : i32, i32
  }
  func.func @transform_3(%arg0: i32, %arg1: i32) -> (i32, i32) {
    %c0_i32 = arith.constant 0 : i32
    %c0_i32_0 = arith.constant 0 : i32
    return %c0_i32, %arg1 : i32, i32
  }
  func.func @transform_4(%arg0: i32, %arg1: i32) -> (i32, i32) {
    %c0_i32 = arith.constant 0 : i32
    %c0_i32_0 = arith.constant 0 : i32
    return %c0_i32, %arg1 : i32, i32
  }
  func.func @transform_5(%arg0: i32, %arg1: i32) -> (i32, i32) {
    %c0_i32 = arith.constant 0 : i32
    return %arg0, %arg1 : i32, i32
  }
}

module attributes {stable_mosaic.version = 11 : i64} {
  func.func @_head_kernel(%arg0: i32, %arg1: memref<8x8x32xbf16, #tpu.memory_space<vmem>>, %arg2: memref<8x8x32xbf16, #tpu.memory_space<vmem>>, %arg3: memref<1x32xf32, #tpu.memory_space<vmem>>, %arg4: memref<1x32xf32, #tpu.memory_space<vmem>>, %arg5: memref<1x1xf32, #tpu.memory_space<vmem>>, %arg6: memref<8x8xf32, #tpu.memory_space<vmem>>) attributes {dimension_semantics = [#tpu.dimension_semantics<parallel>], iteration_bounds = array<i64: 1>, scalar_prefetch = 0 : i64, scratch_operands = 0 : i64, tpu.core_type = #tpu.core_type<tc>, window_params = [{transform_indices = @transform_0, window_bounds = array<i64: 8, 8, 32>}, {transform_indices = @transform_1, window_bounds = array<i64: 8, 8, 32>}, {pipeline_mode = #tpu.pipeline_mode<synchronous>, transform_indices = @transform_2, window_bounds = array<i64: 1, 32>}, {pipeline_mode = #tpu.pipeline_mode<synchronous>, transform_indices = @transform_3, window_bounds = array<i64: 1, 32>}, {pipeline_mode = #tpu.pipeline_mode<synchronous>, transform_indices = @transform_4, window_bounds = array<i64: 1, 1>}, {transform_indices = @transform_5, window_bounds = array<i64: 8, 8>}]} {
    %c0 = arith.constant 0 : index
    %c0_0 = arith.constant 0 : index
    %c0_1 = arith.constant 0 : index
    %0 = vector.load %arg1[%c0, %c0_0, %c0_1] : memref<8x8x32xbf16, #tpu.memory_space<vmem>>, vector<8x8x32xbf16>
    %c0_2 = arith.constant 0 : index
    %c0_3 = arith.constant 0 : index
    %1 = vector.load %arg3[%c0_2, %c0_3] : memref<1x32xf32, #tpu.memory_space<vmem>>, vector<1x32xf32>
    %2 = vector.shape_cast %1 : vector<1x32xf32> to vector<1x1x32xf32>
    %3 = arith.extf %0 : vector<8x8x32xbf16> to vector<8x8x32xf32>
    %4 = vector.broadcast %2 : vector<1x1x32xf32> to vector<8x8x32xf32>
    %5 = arith.mulf %3, %4 : vector<8x8x32xf32>
    %cst = arith.constant dense<0.000000e+00> : vector<8x8xf32>
    %6 = vector.multi_reduction <add>, %5, %cst [2] : vector<8x8x32xf32> to vector<8x8xf32>
    %c0_4 = arith.constant 0 : index
    %c0_5 = arith.constant 0 : index
    %c0_6 = arith.constant 0 : index
    %7 = vector.load %arg2[%c0_4, %c0_5, %c0_6] : memref<8x8x32xbf16, #tpu.memory_space<vmem>>, vector<8x8x32xbf16>
    %c0_7 = arith.constant 0 : index
    %c0_8 = arith.constant 0 : index
    %8 = vector.load %arg4[%c0_7, %c0_8] : memref<1x32xf32, #tpu.memory_space<vmem>>, vector<1x32xf32>
    %9 = vector.shape_cast %8 : vector<1x32xf32> to vector<1x1x32xf32>
    %10 = arith.extf %7 : vector<8x8x32xbf16> to vector<8x8x32xf32>
    %11 = vector.broadcast %9 : vector<1x1x32xf32> to vector<8x8x32xf32>
    %12 = arith.mulf %10, %11 : vector<8x8x32xf32>
    %cst_9 = arith.constant dense<0.000000e+00> : vector<8x8xf32>
    %13 = vector.multi_reduction <add>, %12, %cst_9 [2] : vector<8x8x32xf32> to vector<8x8xf32>
    %14 = arith.addf %6, %13 : vector<8x8xf32>
    %c0_10 = arith.constant 0 : index
    %c0_11 = arith.constant 0 : index
    %15 = vector.load %arg5[%c0_10, %c0_11] : memref<1x1xf32, #tpu.memory_space<vmem>>, vector<1x1xf32>
    %16 = vector.extract %15[0, 0] : f32 from vector<1x1xf32>
    %17 = vector.broadcast %16 : f32 to vector<8x8xf32>
    %18 = arith.addf %14, %17 : vector<8x8xf32>
    %19 = arith.negf %18 : vector<8x8xf32>
    %20 = math.exp %19 : vector<8x8xf32>
    %cst_12 = arith.constant 1.000000e+00 : f32
    %21 = vector.broadcast %cst_12 : f32 to vector<8x8xf32>
    %22 = arith.addf %21, %20 : vector<8x8xf32>
    %23 = arith.divf %21, %22 : vector<8x8xf32>
    %24 = tpu.transpose %23, [1, 0] : vector<8x8xf32> -> vector<8x8xf32>
    %c0_13 = arith.constant 0 : index
    %c0_14 = arith.constant 0 : index
    %25 = vector.load %arg6[%c0_13, %c0_14] : memref<8x8xf32, #tpu.memory_space<vmem>>, vector<8x8xf32>
    tpu.vector_store %arg6[%c0_13, %c0_14], %24 {strides = array<i32>} : memref<8x8xf32, #tpu.memory_space<vmem>>, vector<8x8xf32>,
    return
  }
  func.func @transform_0(%arg0: i32) -> (i32, i32, i32) {
    %c0_i32 = arith.constant 0 : i32
    %c0_i32_0 = arith.constant 0 : i32
    %c0_i32_1 = arith.constant 0 : i32
    return %arg0, %c0_i32, %c0_i32_0 : i32, i32, i32
  }
  func.func @transform_1(%arg0: i32) -> (i32, i32, i32) {
    %c0_i32 = arith.constant 0 : i32
    %c0_i32_0 = arith.constant 0 : i32
    %c0_i32_1 = arith.constant 0 : i32
    return %arg0, %c0_i32, %c0_i32_0 : i32, i32, i32
  }
  func.func @transform_2(%arg0: i32) -> (i32, i32) {
    %c0_i32 = arith.constant 0 : i32
    %c0_i32_0 = arith.constant 0 : i32
    %c0_i32_1 = arith.constant 0 : i32
    return %c0_i32, %c0_i32_0 : i32, i32
  }
  func.func @transform_3(%arg0: i32) -> (i32, i32) {
    %c0_i32 = arith.constant 0 : i32
    %c0_i32_0 = arith.constant 0 : i32
    %c0_i32_1 = arith.constant 0 : i32
    return %c0_i32, %c0_i32_0 : i32, i32
  }
  func.func @transform_4(%arg0: i32) -> (i32, i32) {
    %c0_i32 = arith.constant 0 : i32
    %c0_i32_0 = arith.constant 0 : i32
    %c0_i32_1 = arith.constant 0 : i32
    return %c0_i32, %c0_i32_0 : i32, i32
  }
  func.func @transform_5(%arg0: i32) -> (i32, i32) {
    %c0_i32 = arith.constant 0 : i32
    %c0_i32_0 = arith.constant 0 : i32
    return %c0_i32, %arg0 : i32, i32
  }
}

module attributes {stable_mosaic.version = 11 : i64} {
  func.func @_bilstm_recurrent_kernel(%arg0: i32, %arg1: memref<8x8x128xbf16, #tpu.memory_space<vmem>>, %arg2: memref<8x8x128xbf16, #tpu.memory_space<vmem>>, %arg3: memref<32x256xbf16, #tpu.memory_space<vmem>>, %arg4: memref<8x8x32xbf16, #tpu.memory_space<vmem>>, %arg5: memref<8x8x32xbf16, #tpu.memory_space<vmem>>, %arg6: memref<16x32xf32, #tpu.memory_space<vmem>>, %arg7: memref<16x32xf32, #tpu.memory_space<vmem>>) attributes {dimension_semantics = [#tpu.dimension_semantics<arbitrary>], iteration_bounds = array<i64: 1>, scalar_prefetch = 0 : i64, scratch_operands = 2 : i64, tpu.core_type = #tpu.core_type<tc>, window_params = [{transform_indices = @transform_0, window_bounds = array<i64: 8, 8, 128>}, {transform_indices = @transform_1, window_bounds = array<i64: 8, 8, 128>}, {pipeline_mode = #tpu.pipeline_mode<synchronous>, transform_indices = @transform_2, window_bounds = array<i64: 32, 256>}, {transform_indices = @transform_3, window_bounds = array<i64: 8, 8, 32>}, {transform_indices = @transform_4, window_bounds = array<i64: 8, 8, 32>}]} {
    %c0_i32 = arith.constant 0 : i32
    %0 = arith.cmpi eq, %arg0, %c0_i32 : i32
    %1 = arith.extui %0 : i1 to i32
    %c0_i32_0 = arith.constant 0 : i32
    %2 = arith.cmpi ne, %1, %c0_i32_0 : i32
    scf.if %2 {
      %cst_146 = arith.constant 0.000000e+00 : f32
      %648 = vector.broadcast %cst_146 : f32 to vector<16x32xf32>
      %c0_147 = arith.constant 0 : index
      %c0_148 = arith.constant 0 : index
      %649 = vector.load %arg6[%c0_147, %c0_148] : memref<16x32xf32, #tpu.memory_space<vmem>>, vector<16x32xf32>
      tpu.vector_store %arg6[%c0_147, %c0_148], %648 {strides = array<i32>} : memref<16x32xf32, #tpu.memory_space<vmem>>, vector<16x32xf32>,
      %cst_149 = arith.constant 0.000000e+00 : f32
      %650 = vector.broadcast %cst_149 : f32 to vector<16x32xf32>
      %c0_150 = arith.constant 0 : index
      %c0_151 = arith.constant 0 : index
      %651 = vector.load %arg7[%c0_150, %c0_151] : memref<16x32xf32, #tpu.memory_space<vmem>>, vector<16x32xf32>
      tpu.vector_store %arg7[%c0_150, %c0_151], %650 {strides = array<i32>} : memref<16x32xf32, #tpu.memory_space<vmem>>, vector<16x32xf32>,
    } else {
    }
    %c0 = arith.constant 0 : index
    %c0_1 = arith.constant 0 : index
    %3 = vector.load %arg3[%c0, %c0_1] : memref<32x256xbf16, #tpu.memory_space<vmem>>, vector<32x256xbf16>
    %c0_2 = arith.constant 0 : index
    %c0_3 = arith.constant 0 : index
    %4 = vector.load %arg6[%c0_2, %c0_3] : memref<16x32xf32, #tpu.memory_space<vmem>>, vector<16x32xf32>
    %c0_4 = arith.constant 0 : index
    %c0_5 = arith.constant 0 : index
    %5 = vector.load %arg7[%c0_4, %c0_5] : memref<16x32xf32, #tpu.memory_space<vmem>>, vector<16x32xf32>
    %c0_i32_6 = arith.constant 0 : i32
    %6 = arith.truncf %4 : vector<16x32xf32> to vector<16x32xbf16>
    %cst = arith.constant dense<0.000000e+00> : vector<16x256xf32>
    %7 = tpu.matmul %6, %3, %cst {dimension_numbers = #tpu.dot_dimension_numbers<[1], [0], [0], [1], [0, 0, 1, 1], [], []>} : vector<16x32xbf16>, vector<32x256xbf16>, vector<16x256xf32> -> vector<16x256xf32>
    %8 = arith.index_cast %c0_i32_6 : i32 to index
    %c0_7 = arith.constant 0 : index
    %c0_8 = arith.constant 0 : index
    %9 = vector.load %arg1[%8, %c0_7, %c0_8] : memref<8x8x128xbf16, #tpu.memory_space<vmem>>, vector<1x8x128xbf16>
    %10 = vector.shape_cast %9 : vector<1x8x128xbf16> to vector<8x128xbf16>
    %11 = arith.extf %10 : vector<8x128xbf16> to vector<8x128xf32>
    %12 = vector.extract_strided_slice %7 {offsets = [0, 0], sizes = [8, 128], strides = [1, 1]} : vector<16x256xf32> to vector<8x128xf32>
    %13 = arith.addf %11, %12 : vector<8x128xf32>
    %c7_i32 = arith.constant 7 : i32
    %14 = arith.subi %c7_i32, %c0_i32_6 : i32
    %15 = arith.index_cast %14 : i32 to index
    %c0_9 = arith.constant 0 : index
    %c0_10 = arith.constant 0 : index
    %16 = vector.load %arg2[%15, %c0_9, %c0_10] : memref<8x8x128xbf16, #tpu.memory_space<vmem>>, vector<1x8x128xbf16>
    %17 = vector.shape_cast %16 : vector<1x8x128xbf16> to vector<8x128xbf16>
    %18 = arith.extf %17 : vector<8x128xbf16> to vector<8x128xf32>
    %19 = vector.extract_strided_slice %7 {offsets = [8, 128], sizes = [8, 128], strides = [1, 1]} : vector<16x256xf32> to vector<8x128xf32>
    %20 = arith.addf %18, %19 : vector<8x128xf32>
    %21 = vector.extract_strided_slice %5 {offsets = [0, 0], sizes = [8, 32], strides = [1, 1]} : vector<16x32xf32> to vector<8x32xf32>
    %22 = vector.extract_strided_slice %13 {offsets = [0, 0], sizes = [8, 32], strides = [1, 1]} : vector<8x128xf32> to vector<8x32xf32>
    %23 = arith.negf %22 : vector<8x32xf32>
    %24 = math.exp %23 : vector<8x32xf32>
    %cst_11 = arith.constant 1.000000e+00 : f32
    %25 = vector.broadcast %cst_11 : f32 to vector<8x32xf32>
    %26 = arith.addf %25, %24 : vector<8x32xf32>
    %27 = arith.divf %25, %26 : vector<8x32xf32>
    %28 = vector.extract_strided_slice %13 {offsets = [0, 32], sizes = [8, 32], strides = [1, 1]} : vector<8x128xf32> to vector<8x32xf32>
    %29 = arith.negf %28 : vector<8x32xf32>
    %30 = math.exp %29 : vector<8x32xf32>
    %cst_12 = arith.constant 1.000000e+00 : f32
    %31 = vector.broadcast %cst_12 : f32 to vector<8x32xf32>
    %32 = arith.addf %31, %30 : vector<8x32xf32>
    %33 = arith.divf %31, %32 : vector<8x32xf32>
    %34 = vector.extract_strided_slice %13 {offsets = [0, 64], sizes = [8, 32], strides = [1, 1]} : vector<8x128xf32> to vector<8x32xf32>
    %35 = math.tanh %34 : vector<8x32xf32>
    %36 = vector.extract_strided_slice %13 {offsets = [0, 96], sizes = [8, 32], strides = [1, 1]} : vector<8x128xf32> to vector<8x32xf32>
    %37 = arith.negf %36 : vector<8x32xf32>
    %38 = math.exp %37 : vector<8x32xf32>
    %cst_13 = arith.constant 1.000000e+00 : f32
    %39 = vector.broadcast %cst_13 : f32 to vector<8x32xf32>
    %40 = arith.addf %39, %38 : vector<8x32xf32>
    %41 = arith.divf %39, %40 : vector<8x32xf32>
    %42 = arith.mulf %33, %21 : vector<8x32xf32>
    %43 = arith.mulf %27, %35 : vector<8x32xf32>
    %44 = arith.addf %42, %43 : vector<8x32xf32>
    %45 = math.tanh %44 : vector<8x32xf32>
    %46 = arith.mulf %41, %45 : vector<8x32xf32>
    %47 = vector.extract_strided_slice %5 {offsets = [8, 0], sizes = [8, 32], strides = [1, 1]} : vector<16x32xf32> to vector<8x32xf32>
    %48 = vector.extract_strided_slice %20 {offsets = [0, 0], sizes = [8, 32], strides = [1, 1]} : vector<8x128xf32> to vector<8x32xf32>
    %49 = arith.negf %48 : vector<8x32xf32>
    %50 = math.exp %49 : vector<8x32xf32>
    %cst_14 = arith.constant 1.000000e+00 : f32
    %51 = vector.broadcast %cst_14 : f32 to vector<8x32xf32>
    %52 = arith.addf %51, %50 : vector<8x32xf32>
    %53 = arith.divf %51, %52 : vector<8x32xf32>
    %54 = vector.extract_strided_slice %20 {offsets = [0, 32], sizes = [8, 32], strides = [1, 1]} : vector<8x128xf32> to vector<8x32xf32>
    %55 = arith.negf %54 : vector<8x32xf32>
    %56 = math.exp %55 : vector<8x32xf32>
    %cst_15 = arith.constant 1.000000e+00 : f32
    %57 = vector.broadcast %cst_15 : f32 to vector<8x32xf32>
    %58 = arith.addf %57, %56 : vector<8x32xf32>
    %59 = arith.divf %57, %58 : vector<8x32xf32>
    %60 = vector.extract_strided_slice %20 {offsets = [0, 64], sizes = [8, 32], strides = [1, 1]} : vector<8x128xf32> to vector<8x32xf32>
    %61 = math.tanh %60 : vector<8x32xf32>
    %62 = vector.extract_strided_slice %20 {offsets = [0, 96], sizes = [8, 32], strides = [1, 1]} : vector<8x128xf32> to vector<8x32xf32>
    %63 = arith.negf %62 : vector<8x32xf32>
    %64 = math.exp %63 : vector<8x32xf32>
    %cst_16 = arith.constant 1.000000e+00 : f32
    %65 = vector.broadcast %cst_16 : f32 to vector<8x32xf32>
    %66 = arith.addf %65, %64 : vector<8x32xf32>
    %67 = arith.divf %65, %66 : vector<8x32xf32>
    %68 = arith.mulf %59, %47 : vector<8x32xf32>
    %69 = arith.mulf %53, %61 : vector<8x32xf32>
    %70 = arith.addf %68, %69 : vector<8x32xf32>
    %71 = math.tanh %70 : vector<8x32xf32>
    %72 = arith.mulf %67, %71 : vector<8x32xf32>
    %73 = arith.truncf %46 : vector<8x32xf32> to vector<8x32xbf16>
    %74 = arith.index_cast %c0_i32_6 : i32 to index
    %c0_17 = arith.constant 0 : index
    %c0_18 = arith.constant 0 : index
    %75 = vector.load %arg4[%74, %c0_17, %c0_18] : memref<8x8x32xbf16, #tpu.memory_space<vmem>>, vector<1x8x32xbf16>
    %76 = vector.shape_cast %75 : vector<1x8x32xbf16> to vector<8x32xbf16>
    %77 = vector.shape_cast %73 : vector<8x32xbf16> to vector<1x8x32xbf16>
    tpu.vector_store %arg4[%74, %c0_17, %c0_18], %77 {strides = array<i32>} : memref<8x8x32xbf16, #tpu.memory_space<vmem>>, vector<1x8x32xbf16>,
    %78 = arith.truncf %72 : vector<8x32xf32> to vector<8x32xbf16>
    %c7_i32_19 = arith.constant 7 : i32
    %79 = arith.subi %c7_i32_19, %c0_i32_6 : i32
    %80 = arith.index_cast %79 : i32 to index
    %c0_20 = arith.constant 0 : index
    %c0_21 = arith.constant 0 : index
    %81 = vector.load %arg5[%80, %c0_20, %c0_21] : memref<8x8x32xbf16, #tpu.memory_space<vmem>>, vector<1x8x32xbf16>
    %82 = vector.shape_cast %81 : vector<1x8x32xbf16> to vector<8x32xbf16>
    %83 = vector.shape_cast %78 : vector<8x32xbf16> to vector<1x8x32xbf16>
    tpu.vector_store %arg5[%80, %c0_20, %c0_21], %83 {strides = array<i32>} : memref<8x8x32xbf16, #tpu.memory_space<vmem>>, vector<1x8x32xbf16>,
    %84 = tpu.concatenate %46, %72 in 0 : vector<8x32xf32>, vector<8x32xf32> -> vector<16x32xf32>
    %85 = tpu.concatenate %44, %70 in 0 : vector<8x32xf32>, vector<8x32xf32> -> vector<16x32xf32>
    %c1_i32 = arith.constant 1 : i32
    %86 = arith.truncf %84 : vector<16x32xf32> to vector<16x32xbf16>
    %cst_22 = arith.constant dense<0.000000e+00> : vector<16x256xf32>
    %87 = tpu.matmul %86, %3, %cst_22 {dimension_numbers = #tpu.dot_dimension_numbers<[1], [0], [0], [1], [0, 0, 1, 1], [], []>} : vector<16x32xbf16>, vector<32x256xbf16>, vector<16x256xf32> -> vector<16x256xf32>
    %88 = arith.index_cast %c1_i32 : i32 to index
    %c0_23 = arith.constant 0 : index
    %c0_24 = arith.constant 0 : index
    %89 = vector.load %arg1[%88, %c0_23, %c0_24] : memref<8x8x128xbf16, #tpu.memory_space<vmem>>, vector<1x8x128xbf16>
    %90 = vector.shape_cast %89 : vector<1x8x128xbf16> to vector<8x128xbf16>
    %91 = arith.extf %90 : vector<8x128xbf16> to vector<8x128xf32>
    %92 = vector.extract_strided_slice %87 {offsets = [0, 0], sizes = [8, 128], strides = [1, 1]} : vector<16x256xf32> to vector<8x128xf32>
    %93 = arith.addf %91, %92 : vector<8x128xf32>
    %c7_i32_25 = arith.constant 7 : i32
    %94 = arith.subi %c7_i32_25, %c1_i32 : i32
    %95 = arith.index_cast %94 : i32 to index
    %c0_26 = arith.constant 0 : index
    %c0_27 = arith.constant 0 : index
    %96 = vector.load %arg2[%95, %c0_26, %c0_27] : memref<8x8x128xbf16, #tpu.memory_space<vmem>>, vector<1x8x128xbf16>
    %97 = vector.shape_cast %96 : vector<1x8x128xbf16> to vector<8x128xbf16>
    %98 = arith.extf %97 : vector<8x128xbf16> to vector<8x128xf32>
    %99 = vector.extract_strided_slice %87 {offsets = [8, 128], sizes = [8, 128], strides = [1, 1]} : vector<16x256xf32> to vector<8x128xf32>
    %100 = arith.addf %98, %99 : vector<8x128xf32>
    %101 = vector.extract_strided_slice %85 {offsets = [0, 0], sizes = [8, 32], strides = [1, 1]} : vector<16x32xf32> to vector<8x32xf32>
    %102 = vector.extract_strided_slice %93 {offsets = [0, 0], sizes = [8, 32], strides = [1, 1]} : vector<8x128xf32> to vector<8x32xf32>
    %103 = arith.negf %102 : vector<8x32xf32>
    %104 = math.exp %103 : vector<8x32xf32>
    %cst_28 = arith.constant 1.000000e+00 : f32
    %105 = vector.broadcast %cst_28 : f32 to vector<8x32xf32>
    %106 = arith.addf %105, %104 : vector<8x32xf32>
    %107 = arith.divf %105, %106 : vector<8x32xf32>
    %108 = vector.extract_strided_slice %93 {offsets = [0, 32], sizes = [8, 32], strides = [1, 1]} : vector<8x128xf32> to vector<8x32xf32>
    %109 = arith.negf %108 : vector<8x32xf32>
    %110 = math.exp %109 : vector<8x32xf32>
    %cst_29 = arith.constant 1.000000e+00 : f32
    %111 = vector.broadcast %cst_29 : f32 to vector<8x32xf32>
    %112 = arith.addf %111, %110 : vector<8x32xf32>
    %113 = arith.divf %111, %112 : vector<8x32xf32>
    %114 = vector.extract_strided_slice %93 {offsets = [0, 64], sizes = [8, 32], strides = [1, 1]} : vector<8x128xf32> to vector<8x32xf32>
    %115 = math.tanh %114 : vector<8x32xf32>
    %116 = vector.extract_strided_slice %93 {offsets = [0, 96], sizes = [8, 32], strides = [1, 1]} : vector<8x128xf32> to vector<8x32xf32>
    %117 = arith.negf %116 : vector<8x32xf32>
    %118 = math.exp %117 : vector<8x32xf32>
    %cst_30 = arith.constant 1.000000e+00 : f32
    %119 = vector.broadcast %cst_30 : f32 to vector<8x32xf32>
    %120 = arith.addf %119, %118 : vector<8x32xf32>
    %121 = arith.divf %119, %120 : vector<8x32xf32>
    %122 = arith.mulf %113, %101 : vector<8x32xf32>
    %123 = arith.mulf %107, %115 : vector<8x32xf32>
    %124 = arith.addf %122, %123 : vector<8x32xf32>
    %125 = math.tanh %124 : vector<8x32xf32>
    %126 = arith.mulf %121, %125 : vector<8x32xf32>
    %127 = vector.extract_strided_slice %85 {offsets = [8, 0], sizes = [8, 32], strides = [1, 1]} : vector<16x32xf32> to vector<8x32xf32>
    %128 = vector.extract_strided_slice %100 {offsets = [0, 0], sizes = [8, 32], strides = [1, 1]} : vector<8x128xf32> to vector<8x32xf32>
    %129 = arith.negf %128 : vector<8x32xf32>
    %130 = math.exp %129 : vector<8x32xf32>
    %cst_31 = arith.constant 1.000000e+00 : f32
    %131 = vector.broadcast %cst_31 : f32 to vector<8x32xf32>
    %132 = arith.addf %131, %130 : vector<8x32xf32>
    %133 = arith.divf %131, %132 : vector<8x32xf32>
    %134 = vector.extract_strided_slice %100 {offsets = [0, 32], sizes = [8, 32], strides = [1, 1]} : vector<8x128xf32> to vector<8x32xf32>
    %135 = arith.negf %134 : vector<8x32xf32>
    %136 = math.exp %135 : vector<8x32xf32>
    %cst_32 = arith.constant 1.000000e+00 : f32
    %137 = vector.broadcast %cst_32 : f32 to vector<8x32xf32>
    %138 = arith.addf %137, %136 : vector<8x32xf32>
    %139 = arith.divf %137, %138 : vector<8x32xf32>
    %140 = vector.extract_strided_slice %100 {offsets = [0, 64], sizes = [8, 32], strides = [1, 1]} : vector<8x128xf32> to vector<8x32xf32>
    %141 = math.tanh %140 : vector<8x32xf32>
    %142 = vector.extract_strided_slice %100 {offsets = [0, 96], sizes = [8, 32], strides = [1, 1]} : vector<8x128xf32> to vector<8x32xf32>
    %143 = arith.negf %142 : vector<8x32xf32>
    %144 = math.exp %143 : vector<8x32xf32>
    %cst_33 = arith.constant 1.000000e+00 : f32
    %145 = vector.broadcast %cst_33 : f32 to vector<8x32xf32>
    %146 = arith.addf %145, %144 : vector<8x32xf32>
    %147 = arith.divf %145, %146 : vector<8x32xf32>
    %148 = arith.mulf %139, %127 : vector<8x32xf32>
    %149 = arith.mulf %133, %141 : vector<8x32xf32>
    %150 = arith.addf %148, %149 : vector<8x32xf32>
    %151 = math.tanh %150 : vector<8x32xf32>
    %152 = arith.mulf %147, %151 : vector<8x32xf32>
    %153 = arith.truncf %126 : vector<8x32xf32> to vector<8x32xbf16>
    %154 = arith.index_cast %c1_i32 : i32 to index
    %c0_34 = arith.constant 0 : index
    %c0_35 = arith.constant 0 : index
    %155 = vector.load %arg4[%154, %c0_34, %c0_35] : memref<8x8x32xbf16, #tpu.memory_space<vmem>>, vector<1x8x32xbf16>
    %156 = vector.shape_cast %155 : vector<1x8x32xbf16> to vector<8x32xbf16>
    %157 = vector.shape_cast %153 : vector<8x32xbf16> to vector<1x8x32xbf16>
    tpu.vector_store %arg4[%154, %c0_34, %c0_35], %157 {strides = array<i32>} : memref<8x8x32xbf16, #tpu.memory_space<vmem>>, vector<1x8x32xbf16>,
    %158 = arith.truncf %152 : vector<8x32xf32> to vector<8x32xbf16>
    %c7_i32_36 = arith.constant 7 : i32
    %159 = arith.subi %c7_i32_36, %c1_i32 : i32
    %160 = arith.index_cast %159 : i32 to index
    %c0_37 = arith.constant 0 : index
    %c0_38 = arith.constant 0 : index
    %161 = vector.load %arg5[%160, %c0_37, %c0_38] : memref<8x8x32xbf16, #tpu.memory_space<vmem>>, vector<1x8x32xbf16>
    %162 = vector.shape_cast %161 : vector<1x8x32xbf16> to vector<8x32xbf16>
    %163 = vector.shape_cast %158 : vector<8x32xbf16> to vector<1x8x32xbf16>
    tpu.vector_store %arg5[%160, %c0_37, %c0_38], %163 {strides = array<i32>} : memref<8x8x32xbf16, #tpu.memory_space<vmem>>, vector<1x8x32xbf16>,
    %164 = tpu.concatenate %126, %152 in 0 : vector<8x32xf32>, vector<8x32xf32> -> vector<16x32xf32>
    %165 = tpu.concatenate %124, %150 in 0 : vector<8x32xf32>, vector<8x32xf32> -> vector<16x32xf32>
    %c2_i32 = arith.constant 2 : i32
    %166 = arith.truncf %164 : vector<16x32xf32> to vector<16x32xbf16>
    %cst_39 = arith.constant dense<0.000000e+00> : vector<16x256xf32>
    %167 = tpu.matmul %166, %3, %cst_39 {dimension_numbers = #tpu.dot_dimension_numbers<[1], [0], [0], [1], [0, 0, 1, 1], [], []>} : vector<16x32xbf16>, vector<32x256xbf16>, vector<16x256xf32> -> vector<16x256xf32>
    %168 = arith.index_cast %c2_i32 : i32 to index
    %c0_40 = arith.constant 0 : index
    %c0_41 = arith.constant 0 : index
    %169 = vector.load %arg1[%168, %c0_40, %c0_41] : memref<8x8x128xbf16, #tpu.memory_space<vmem>>, vector<1x8x128xbf16>
    %170 = vector.shape_cast %169 : vector<1x8x128xbf16> to vector<8x128xbf16>
    %171 = arith.extf %170 : vector<8x128xbf16> to vector<8x128xf32>
    %172 = vector.extract_strided_slice %167 {offsets = [0, 0], sizes = [8, 128], strides = [1, 1]} : vector<16x256xf32> to vector<8x128xf32>
    %173 = arith.addf %171, %172 : vector<8x128xf32>
    %c7_i32_42 = arith.constant 7 : i32
    %174 = arith.subi %c7_i32_42, %c2_i32 : i32
    %175 = arith.index_cast %174 : i32 to index
    %c0_43 = arith.constant 0 : index
    %c0_44 = arith.constant 0 : index
    %176 = vector.load %arg2[%175, %c0_43, %c0_44] : memref<8x8x128xbf16, #tpu.memory_space<vmem>>, vector<1x8x128xbf16>
    %177 = vector.shape_cast %176 : vector<1x8x128xbf16> to vector<8x128xbf16>
    %178 = arith.extf %177 : vector<8x128xbf16> to vector<8x128xf32>
    %179 = vector.extract_strided_slice %167 {offsets = [8, 128], sizes = [8, 128], strides = [1, 1]} : vector<16x256xf32> to vector<8x128xf32>
    %180 = arith.addf %178, %179 : vector<8x128xf32>
    %181 = vector.extract_strided_slice %165 {offsets = [0, 0], sizes = [8, 32], strides = [1, 1]} : vector<16x32xf32> to vector<8x32xf32>
    %182 = vector.extract_strided_slice %173 {offsets = [0, 0], sizes = [8, 32], strides = [1, 1]} : vector<8x128xf32> to vector<8x32xf32>
    %183 = arith.negf %182 : vector<8x32xf32>
    %184 = math.exp %183 : vector<8x32xf32>
    %cst_45 = arith.constant 1.000000e+00 : f32
    %185 = vector.broadcast %cst_45 : f32 to vector<8x32xf32>
    %186 = arith.addf %185, %184 : vector<8x32xf32>
    %187 = arith.divf %185, %186 : vector<8x32xf32>
    %188 = vector.extract_strided_slice %173 {offsets = [0, 32], sizes = [8, 32], strides = [1, 1]} : vector<8x128xf32> to vector<8x32xf32>
    %189 = arith.negf %188 : vector<8x32xf32>
    %190 = math.exp %189 : vector<8x32xf32>
    %cst_46 = arith.constant 1.000000e+00 : f32
    %191 = vector.broadcast %cst_46 : f32 to vector<8x32xf32>
    %192 = arith.addf %191, %190 : vector<8x32xf32>
    %193 = arith.divf %191, %192 : vector<8x32xf32>
    %194 = vector.extract_strided_slice %173 {offsets = [0, 64], sizes = [8, 32], strides = [1, 1]} : vector<8x128xf32> to vector<8x32xf32>
    %195 = math.tanh %194 : vector<8x32xf32>
    %196 = vector.extract_strided_slice %173 {offsets = [0, 96], sizes = [8, 32], strides = [1, 1]} : vector<8x128xf32> to vector<8x32xf32>
    %197 = arith.negf %196 : vector<8x32xf32>
    %198 = math.exp %197 : vector<8x32xf32>
    %cst_47 = arith.constant 1.000000e+00 : f32
    %199 = vector.broadcast %cst_47 : f32 to vector<8x32xf32>
    %200 = arith.addf %199, %198 : vector<8x32xf32>
    %201 = arith.divf %199, %200 : vector<8x32xf32>
    %202 = arith.mulf %193, %181 : vector<8x32xf32>
    %203 = arith.mulf %187, %195 : vector<8x32xf32>
    %204 = arith.addf %202, %203 : vector<8x32xf32>
    %205 = math.tanh %204 : vector<8x32xf32>
    %206 = arith.mulf %201, %205 : vector<8x32xf32>
    %207 = vector.extract_strided_slice %165 {offsets = [8, 0], sizes = [8, 32], strides = [1, 1]} : vector<16x32xf32> to vector<8x32xf32>
    %208 = vector.extract_strided_slice %180 {offsets = [0, 0], sizes = [8, 32], strides = [1, 1]} : vector<8x128xf32> to vector<8x32xf32>
    %209 = arith.negf %208 : vector<8x32xf32>
    %210 = math.exp %209 : vector<8x32xf32>
    %cst_48 = arith.constant 1.000000e+00 : f32
    %211 = vector.broadcast %cst_48 : f32 to vector<8x32xf32>
    %212 = arith.addf %211, %210 : vector<8x32xf32>
    %213 = arith.divf %211, %212 : vector<8x32xf32>
    %214 = vector.extract_strided_slice %180 {offsets = [0, 32], sizes = [8, 32], strides = [1, 1]} : vector<8x128xf32> to vector<8x32xf32>
    %215 = arith.negf %214 : vector<8x32xf32>
    %216 = math.exp %215 : vector<8x32xf32>
    %cst_49 = arith.constant 1.000000e+00 : f32
    %217 = vector.broadcast %cst_49 : f32 to vector<8x32xf32>
    %218 = arith.addf %217, %216 : vector<8x32xf32>
    %219 = arith.divf %217, %218 : vector<8x32xf32>
    %220 = vector.extract_strided_slice %180 {offsets = [0, 64], sizes = [8, 32], strides = [1, 1]} : vector<8x128xf32> to vector<8x32xf32>
    %221 = math.tanh %220 : vector<8x32xf32>
    %222 = vector.extract_strided_slice %180 {offsets = [0, 96], sizes = [8, 32], strides = [1, 1]} : vector<8x128xf32> to vector<8x32xf32>
    %223 = arith.negf %222 : vector<8x32xf32>
    %224 = math.exp %223 : vector<8x32xf32>
    %cst_50 = arith.constant 1.000000e+00 : f32
    %225 = vector.broadcast %cst_50 : f32 to vector<8x32xf32>
    %226 = arith.addf %225, %224 : vector<8x32xf32>
    %227 = arith.divf %225, %226 : vector<8x32xf32>
    %228 = arith.mulf %219, %207 : vector<8x32xf32>
    %229 = arith.mulf %213, %221 : vector<8x32xf32>
    %230 = arith.addf %228, %229 : vector<8x32xf32>
    %231 = math.tanh %230 : vector<8x32xf32>
    %232 = arith.mulf %227, %231 : vector<8x32xf32>
    %233 = arith.truncf %206 : vector<8x32xf32> to vector<8x32xbf16>
    %234 = arith.index_cast %c2_i32 : i32 to index
    %c0_51 = arith.constant 0 : index
    %c0_52 = arith.constant 0 : index
    %235 = vector.load %arg4[%234, %c0_51, %c0_52] : memref<8x8x32xbf16, #tpu.memory_space<vmem>>, vector<1x8x32xbf16>
    %236 = vector.shape_cast %235 : vector<1x8x32xbf16> to vector<8x32xbf16>
    %237 = vector.shape_cast %233 : vector<8x32xbf16> to vector<1x8x32xbf16>
    tpu.vector_store %arg4[%234, %c0_51, %c0_52], %237 {strides = array<i32>} : memref<8x8x32xbf16, #tpu.memory_space<vmem>>, vector<1x8x32xbf16>,
    %238 = arith.truncf %232 : vector<8x32xf32> to vector<8x32xbf16>
    %c7_i32_53 = arith.constant 7 : i32
    %239 = arith.subi %c7_i32_53, %c2_i32 : i32
    %240 = arith.index_cast %239 : i32 to index
    %c0_54 = arith.constant 0 : index
    %c0_55 = arith.constant 0 : index
    %241 = vector.load %arg5[%240, %c0_54, %c0_55] : memref<8x8x32xbf16, #tpu.memory_space<vmem>>, vector<1x8x32xbf16>
    %242 = vector.shape_cast %241 : vector<1x8x32xbf16> to vector<8x32xbf16>
    %243 = vector.shape_cast %238 : vector<8x32xbf16> to vector<1x8x32xbf16>
    tpu.vector_store %arg5[%240, %c0_54, %c0_55], %243 {strides = array<i32>} : memref<8x8x32xbf16, #tpu.memory_space<vmem>>, vector<1x8x32xbf16>,
    %244 = tpu.concatenate %206, %232 in 0 : vector<8x32xf32>, vector<8x32xf32> -> vector<16x32xf32>
    %245 = tpu.concatenate %204, %230 in 0 : vector<8x32xf32>, vector<8x32xf32> -> vector<16x32xf32>
    %c3_i32 = arith.constant 3 : i32
    %246 = arith.truncf %244 : vector<16x32xf32> to vector<16x32xbf16>
    %cst_56 = arith.constant dense<0.000000e+00> : vector<16x256xf32>
    %247 = tpu.matmul %246, %3, %cst_56 {dimension_numbers = #tpu.dot_dimension_numbers<[1], [0], [0], [1], [0, 0, 1, 1], [], []>} : vector<16x32xbf16>, vector<32x256xbf16>, vector<16x256xf32> -> vector<16x256xf32>
    %248 = arith.index_cast %c3_i32 : i32 to index
    %c0_57 = arith.constant 0 : index
    %c0_58 = arith.constant 0 : index
    %249 = vector.load %arg1[%248, %c0_57, %c0_58] : memref<8x8x128xbf16, #tpu.memory_space<vmem>>, vector<1x8x128xbf16>
    %250 = vector.shape_cast %249 : vector<1x8x128xbf16> to vector<8x128xbf16>
    %251 = arith.extf %250 : vector<8x128xbf16> to vector<8x128xf32>
    %252 = vector.extract_strided_slice %247 {offsets = [0, 0], sizes = [8, 128], strides = [1, 1]} : vector<16x256xf32> to vector<8x128xf32>
    %253 = arith.addf %251, %252 : vector<8x128xf32>
    %c7_i32_59 = arith.constant 7 : i32
    %254 = arith.subi %c7_i32_59, %c3_i32 : i32
    %255 = arith.index_cast %254 : i32 to index
    %c0_60 = arith.constant 0 : index
    %c0_61 = arith.constant 0 : index
    %256 = vector.load %arg2[%255, %c0_60, %c0_61] : memref<8x8x128xbf16, #tpu.memory_space<vmem>>, vector<1x8x128xbf16>
    %257 = vector.shape_cast %256 : vector<1x8x128xbf16> to vector<8x128xbf16>
    %258 = arith.extf %257 : vector<8x128xbf16> to vector<8x128xf32>
    %259 = vector.extract_strided_slice %247 {offsets = [8, 128], sizes = [8, 128], strides = [1, 1]} : vector<16x256xf32> to vector<8x128xf32>
    %260 = arith.addf %258, %259 : vector<8x128xf32>
    %261 = vector.extract_strided_slice %245 {offsets = [0, 0], sizes = [8, 32], strides = [1, 1]} : vector<16x32xf32> to vector<8x32xf32>
    %262 = vector.extract_strided_slice %253 {offsets = [0, 0], sizes = [8, 32], strides = [1, 1]} : vector<8x128xf32> to vector<8x32xf32>
    %263 = arith.negf %262 : vector<8x32xf32>
    %264 = math.exp %263 : vector<8x32xf32>
    %cst_62 = arith.constant 1.000000e+00 : f32
    %265 = vector.broadcast %cst_62 : f32 to vector<8x32xf32>
    %266 = arith.addf %265, %264 : vector<8x32xf32>
    %267 = arith.divf %265, %266 : vector<8x32xf32>
    %268 = vector.extract_strided_slice %253 {offsets = [0, 32], sizes = [8, 32], strides = [1, 1]} : vector<8x128xf32> to vector<8x32xf32>
    %269 = arith.negf %268 : vector<8x32xf32>
    %270 = math.exp %269 : vector<8x32xf32>
    %cst_63 = arith.constant 1.000000e+00 : f32
    %271 = vector.broadcast %cst_63 : f32 to vector<8x32xf32>
    %272 = arith.addf %271, %270 : vector<8x32xf32>
    %273 = arith.divf %271, %272 : vector<8x32xf32>
    %274 = vector.extract_strided_slice %253 {offsets = [0, 64], sizes = [8, 32], strides = [1, 1]} : vector<8x128xf32> to vector<8x32xf32>
    %275 = math.tanh %274 : vector<8x32xf32>
    %276 = vector.extract_strided_slice %253 {offsets = [0, 96], sizes = [8, 32], strides = [1, 1]} : vector<8x128xf32> to vector<8x32xf32>
    %277 = arith.negf %276 : vector<8x32xf32>
    %278 = math.exp %277 : vector<8x32xf32>
    %cst_64 = arith.constant 1.000000e+00 : f32
    %279 = vector.broadcast %cst_64 : f32 to vector<8x32xf32>
    %280 = arith.addf %279, %278 : vector<8x32xf32>
    %281 = arith.divf %279, %280 : vector<8x32xf32>
    %282 = arith.mulf %273, %261 : vector<8x32xf32>
    %283 = arith.mulf %267, %275 : vector<8x32xf32>
    %284 = arith.addf %282, %283 : vector<8x32xf32>
    %285 = math.tanh %284 : vector<8x32xf32>
    %286 = arith.mulf %281, %285 : vector<8x32xf32>
    %287 = vector.extract_strided_slice %245 {offsets = [8, 0], sizes = [8, 32], strides = [1, 1]} : vector<16x32xf32> to vector<8x32xf32>
    %288 = vector.extract_strided_slice %260 {offsets = [0, 0], sizes = [8, 32], strides = [1, 1]} : vector<8x128xf32> to vector<8x32xf32>
    %289 = arith.negf %288 : vector<8x32xf32>
    %290 = math.exp %289 : vector<8x32xf32>
    %cst_65 = arith.constant 1.000000e+00 : f32
    %291 = vector.broadcast %cst_65 : f32 to vector<8x32xf32>
    %292 = arith.addf %291, %290 : vector<8x32xf32>
    %293 = arith.divf %291, %292 : vector<8x32xf32>
    %294 = vector.extract_strided_slice %260 {offsets = [0, 32], sizes = [8, 32], strides = [1, 1]} : vector<8x128xf32> to vector<8x32xf32>
    %295 = arith.negf %294 : vector<8x32xf32>
    %296 = math.exp %295 : vector<8x32xf32>
    %cst_66 = arith.constant 1.000000e+00 : f32
    %297 = vector.broadcast %cst_66 : f32 to vector<8x32xf32>
    %298 = arith.addf %297, %296 : vector<8x32xf32>
    %299 = arith.divf %297, %298 : vector<8x32xf32>
    %300 = vector.extract_strided_slice %260 {offsets = [0, 64], sizes = [8, 32], strides = [1, 1]} : vector<8x128xf32> to vector<8x32xf32>
    %301 = math.tanh %300 : vector<8x32xf32>
    %302 = vector.extract_strided_slice %260 {offsets = [0, 96], sizes = [8, 32], strides = [1, 1]} : vector<8x128xf32> to vector<8x32xf32>
    %303 = arith.negf %302 : vector<8x32xf32>
    %304 = math.exp %303 : vector<8x32xf32>
    %cst_67 = arith.constant 1.000000e+00 : f32
    %305 = vector.broadcast %cst_67 : f32 to vector<8x32xf32>
    %306 = arith.addf %305, %304 : vector<8x32xf32>
    %307 = arith.divf %305, %306 : vector<8x32xf32>
    %308 = arith.mulf %299, %287 : vector<8x32xf32>
    %309 = arith.mulf %293, %301 : vector<8x32xf32>
    %310 = arith.addf %308, %309 : vector<8x32xf32>
    %311 = math.tanh %310 : vector<8x32xf32>
    %312 = arith.mulf %307, %311 : vector<8x32xf32>
    %313 = arith.truncf %286 : vector<8x32xf32> to vector<8x32xbf16>
    %314 = arith.index_cast %c3_i32 : i32 to index
    %c0_68 = arith.constant 0 : index
    %c0_69 = arith.constant 0 : index
    %315 = vector.load %arg4[%314, %c0_68, %c0_69] : memref<8x8x32xbf16, #tpu.memory_space<vmem>>, vector<1x8x32xbf16>
    %316 = vector.shape_cast %315 : vector<1x8x32xbf16> to vector<8x32xbf16>
    %317 = vector.shape_cast %313 : vector<8x32xbf16> to vector<1x8x32xbf16>
    tpu.vector_store %arg4[%314, %c0_68, %c0_69], %317 {strides = array<i32>} : memref<8x8x32xbf16, #tpu.memory_space<vmem>>, vector<1x8x32xbf16>,
    %318 = arith.truncf %312 : vector<8x32xf32> to vector<8x32xbf16>
    %c7_i32_70 = arith.constant 7 : i32
    %319 = arith.subi %c7_i32_70, %c3_i32 : i32
    %320 = arith.index_cast %319 : i32 to index
    %c0_71 = arith.constant 0 : index
    %c0_72 = arith.constant 0 : index
    %321 = vector.load %arg5[%320, %c0_71, %c0_72] : memref<8x8x32xbf16, #tpu.memory_space<vmem>>, vector<1x8x32xbf16>
    %322 = vector.shape_cast %321 : vector<1x8x32xbf16> to vector<8x32xbf16>
    %323 = vector.shape_cast %318 : vector<8x32xbf16> to vector<1x8x32xbf16>
    tpu.vector_store %arg5[%320, %c0_71, %c0_72], %323 {strides = array<i32>} : memref<8x8x32xbf16, #tpu.memory_space<vmem>>, vector<1x8x32xbf16>,
    %324 = tpu.concatenate %286, %312 in 0 : vector<8x32xf32>, vector<8x32xf32> -> vector<16x32xf32>
    %325 = tpu.concatenate %284, %310 in 0 : vector<8x32xf32>, vector<8x32xf32> -> vector<16x32xf32>
    %c4_i32 = arith.constant 4 : i32
    %326 = arith.truncf %324 : vector<16x32xf32> to vector<16x32xbf16>
    %cst_73 = arith.constant dense<0.000000e+00> : vector<16x256xf32>
    %327 = tpu.matmul %326, %3, %cst_73 {dimension_numbers = #tpu.dot_dimension_numbers<[1], [0], [0], [1], [0, 0, 1, 1], [], []>} : vector<16x32xbf16>, vector<32x256xbf16>, vector<16x256xf32> -> vector<16x256xf32>
    %328 = arith.index_cast %c4_i32 : i32 to index
    %c0_74 = arith.constant 0 : index
    %c0_75 = arith.constant 0 : index
    %329 = vector.load %arg1[%328, %c0_74, %c0_75] : memref<8x8x128xbf16, #tpu.memory_space<vmem>>, vector<1x8x128xbf16>
    %330 = vector.shape_cast %329 : vector<1x8x128xbf16> to vector<8x128xbf16>
    %331 = arith.extf %330 : vector<8x128xbf16> to vector<8x128xf32>
    %332 = vector.extract_strided_slice %327 {offsets = [0, 0], sizes = [8, 128], strides = [1, 1]} : vector<16x256xf32> to vector<8x128xf32>
    %333 = arith.addf %331, %332 : vector<8x128xf32>
    %c7_i32_76 = arith.constant 7 : i32
    %334 = arith.subi %c7_i32_76, %c4_i32 : i32
    %335 = arith.index_cast %334 : i32 to index
    %c0_77 = arith.constant 0 : index
    %c0_78 = arith.constant 0 : index
    %336 = vector.load %arg2[%335, %c0_77, %c0_78] : memref<8x8x128xbf16, #tpu.memory_space<vmem>>, vector<1x8x128xbf16>
    %337 = vector.shape_cast %336 : vector<1x8x128xbf16> to vector<8x128xbf16>
    %338 = arith.extf %337 : vector<8x128xbf16> to vector<8x128xf32>
    %339 = vector.extract_strided_slice %327 {offsets = [8, 128], sizes = [8, 128], strides = [1, 1]} : vector<16x256xf32> to vector<8x128xf32>
    %340 = arith.addf %338, %339 : vector<8x128xf32>
    %341 = vector.extract_strided_slice %325 {offsets = [0, 0], sizes = [8, 32], strides = [1, 1]} : vector<16x32xf32> to vector<8x32xf32>
    %342 = vector.extract_strided_slice %333 {offsets = [0, 0], sizes = [8, 32], strides = [1, 1]} : vector<8x128xf32> to vector<8x32xf32>
    %343 = arith.negf %342 : vector<8x32xf32>
    %344 = math.exp %343 : vector<8x32xf32>
    %cst_79 = arith.constant 1.000000e+00 : f32
    %345 = vector.broadcast %cst_79 : f32 to vector<8x32xf32>
    %346 = arith.addf %345, %344 : vector<8x32xf32>
    %347 = arith.divf %345, %346 : vector<8x32xf32>
    %348 = vector.extract_strided_slice %333 {offsets = [0, 32], sizes = [8, 32], strides = [1, 1]} : vector<8x128xf32> to vector<8x32xf32>
    %349 = arith.negf %348 : vector<8x32xf32>
    %350 = math.exp %349 : vector<8x32xf32>
    %cst_80 = arith.constant 1.000000e+00 : f32
    %351 = vector.broadcast %cst_80 : f32 to vector<8x32xf32>
    %352 = arith.addf %351, %350 : vector<8x32xf32>
    %353 = arith.divf %351, %352 : vector<8x32xf32>
    %354 = vector.extract_strided_slice %333 {offsets = [0, 64], sizes = [8, 32], strides = [1, 1]} : vector<8x128xf32> to vector<8x32xf32>
    %355 = math.tanh %354 : vector<8x32xf32>
    %356 = vector.extract_strided_slice %333 {offsets = [0, 96], sizes = [8, 32], strides = [1, 1]} : vector<8x128xf32> to vector<8x32xf32>
    %357 = arith.negf %356 : vector<8x32xf32>
    %358 = math.exp %357 : vector<8x32xf32>
    %cst_81 = arith.constant 1.000000e+00 : f32
    %359 = vector.broadcast %cst_81 : f32 to vector<8x32xf32>
    %360 = arith.addf %359, %358 : vector<8x32xf32>
    %361 = arith.divf %359, %360 : vector<8x32xf32>
    %362 = arith.mulf %353, %341 : vector<8x32xf32>
    %363 = arith.mulf %347, %355 : vector<8x32xf32>
    %364 = arith.addf %362, %363 : vector<8x32xf32>
    %365 = math.tanh %364 : vector<8x32xf32>
    %366 = arith.mulf %361, %365 : vector<8x32xf32>
    %367 = vector.extract_strided_slice %325 {offsets = [8, 0], sizes = [8, 32], strides = [1, 1]} : vector<16x32xf32> to vector<8x32xf32>
    %368 = vector.extract_strided_slice %340 {offsets = [0, 0], sizes = [8, 32], strides = [1, 1]} : vector<8x128xf32> to vector<8x32xf32>
    %369 = arith.negf %368 : vector<8x32xf32>
    %370 = math.exp %369 : vector<8x32xf32>
    %cst_82 = arith.constant 1.000000e+00 : f32
    %371 = vector.broadcast %cst_82 : f32 to vector<8x32xf32>
    %372 = arith.addf %371, %370 : vector<8x32xf32>
    %373 = arith.divf %371, %372 : vector<8x32xf32>
    %374 = vector.extract_strided_slice %340 {offsets = [0, 32], sizes = [8, 32], strides = [1, 1]} : vector<8x128xf32> to vector<8x32xf32>
    %375 = arith.negf %374 : vector<8x32xf32>
    %376 = math.exp %375 : vector<8x32xf32>
    %cst_83 = arith.constant 1.000000e+00 : f32
    %377 = vector.broadcast %cst_83 : f32 to vector<8x32xf32>
    %378 = arith.addf %377, %376 : vector<8x32xf32>
    %379 = arith.divf %377, %378 : vector<8x32xf32>
    %380 = vector.extract_strided_slice %340 {offsets = [0, 64], sizes = [8, 32], strides = [1, 1]} : vector<8x128xf32> to vector<8x32xf32>
    %381 = math.tanh %380 : vector<8x32xf32>
    %382 = vector.extract_strided_slice %340 {offsets = [0, 96], sizes = [8, 32], strides = [1, 1]} : vector<8x128xf32> to vector<8x32xf32>
    %383 = arith.negf %382 : vector<8x32xf32>
    %384 = math.exp %383 : vector<8x32xf32>
    %cst_84 = arith.constant 1.000000e+00 : f32
    %385 = vector.broadcast %cst_84 : f32 to vector<8x32xf32>
    %386 = arith.addf %385, %384 : vector<8x32xf32>
    %387 = arith.divf %385, %386 : vector<8x32xf32>
    %388 = arith.mulf %379, %367 : vector<8x32xf32>
    %389 = arith.mulf %373, %381 : vector<8x32xf32>
    %390 = arith.addf %388, %389 : vector<8x32xf32>
    %391 = math.tanh %390 : vector<8x32xf32>
    %392 = arith.mulf %387, %391 : vector<8x32xf32>
    %393 = arith.truncf %366 : vector<8x32xf32> to vector<8x32xbf16>
    %394 = arith.index_cast %c4_i32 : i32 to index
    %c0_85 = arith.constant 0 : index
    %c0_86 = arith.constant 0 : index
    %395 = vector.load %arg4[%394, %c0_85, %c0_86] : memref<8x8x32xbf16, #tpu.memory_space<vmem>>, vector<1x8x32xbf16>
    %396 = vector.shape_cast %395 : vector<1x8x32xbf16> to vector<8x32xbf16>
    %397 = vector.shape_cast %393 : vector<8x32xbf16> to vector<1x8x32xbf16>
    tpu.vector_store %arg4[%394, %c0_85, %c0_86], %397 {strides = array<i32>} : memref<8x8x32xbf16, #tpu.memory_space<vmem>>, vector<1x8x32xbf16>,
    %398 = arith.truncf %392 : vector<8x32xf32> to vector<8x32xbf16>
    %c7_i32_87 = arith.constant 7 : i32
    %399 = arith.subi %c7_i32_87, %c4_i32 : i32
    %400 = arith.index_cast %399 : i32 to index
    %c0_88 = arith.constant 0 : index
    %c0_89 = arith.constant 0 : index
    %401 = vector.load %arg5[%400, %c0_88, %c0_89] : memref<8x8x32xbf16, #tpu.memory_space<vmem>>, vector<1x8x32xbf16>
    %402 = vector.shape_cast %401 : vector<1x8x32xbf16> to vector<8x32xbf16>
    %403 = vector.shape_cast %398 : vector<8x32xbf16> to vector<1x8x32xbf16>
    tpu.vector_store %arg5[%400, %c0_88, %c0_89], %403 {strides = array<i32>} : memref<8x8x32xbf16, #tpu.memory_space<vmem>>, vector<1x8x32xbf16>,
    %404 = tpu.concatenate %366, %392 in 0 : vector<8x32xf32>, vector<8x32xf32> -> vector<16x32xf32>
    %405 = tpu.concatenate %364, %390 in 0 : vector<8x32xf32>, vector<8x32xf32> -> vector<16x32xf32>
    %c5_i32 = arith.constant 5 : i32
    %406 = arith.truncf %404 : vector<16x32xf32> to vector<16x32xbf16>
    %cst_90 = arith.constant dense<0.000000e+00> : vector<16x256xf32>
    %407 = tpu.matmul %406, %3, %cst_90 {dimension_numbers = #tpu.dot_dimension_numbers<[1], [0], [0], [1], [0, 0, 1, 1], [], []>} : vector<16x32xbf16>, vector<32x256xbf16>, vector<16x256xf32> -> vector<16x256xf32>
    %408 = arith.index_cast %c5_i32 : i32 to index
    %c0_91 = arith.constant 0 : index
    %c0_92 = arith.constant 0 : index
    %409 = vector.load %arg1[%408, %c0_91, %c0_92] : memref<8x8x128xbf16, #tpu.memory_space<vmem>>, vector<1x8x128xbf16>
    %410 = vector.shape_cast %409 : vector<1x8x128xbf16> to vector<8x128xbf16>
    %411 = arith.extf %410 : vector<8x128xbf16> to vector<8x128xf32>
    %412 = vector.extract_strided_slice %407 {offsets = [0, 0], sizes = [8, 128], strides = [1, 1]} : vector<16x256xf32> to vector<8x128xf32>
    %413 = arith.addf %411, %412 : vector<8x128xf32>
    %c7_i32_93 = arith.constant 7 : i32
    %414 = arith.subi %c7_i32_93, %c5_i32 : i32
    %415 = arith.index_cast %414 : i32 to index
    %c0_94 = arith.constant 0 : index
    %c0_95 = arith.constant 0 : index
    %416 = vector.load %arg2[%415, %c0_94, %c0_95] : memref<8x8x128xbf16, #tpu.memory_space<vmem>>, vector<1x8x128xbf16>
    %417 = vector.shape_cast %416 : vector<1x8x128xbf16> to vector<8x128xbf16>
    %418 = arith.extf %417 : vector<8x128xbf16> to vector<8x128xf32>
    %419 = vector.extract_strided_slice %407 {offsets = [8, 128], sizes = [8, 128], strides = [1, 1]} : vector<16x256xf32> to vector<8x128xf32>
    %420 = arith.addf %418, %419 : vector<8x128xf32>
    %421 = vector.extract_strided_slice %405 {offsets = [0, 0], sizes = [8, 32], strides = [1, 1]} : vector<16x32xf32> to vector<8x32xf32>
    %422 = vector.extract_strided_slice %413 {offsets = [0, 0], sizes = [8, 32], strides = [1, 1]} : vector<8x128xf32> to vector<8x32xf32>
    %423 = arith.negf %422 : vector<8x32xf32>
    %424 = math.exp %423 : vector<8x32xf32>
    %cst_96 = arith.constant 1.000000e+00 : f32
    %425 = vector.broadcast %cst_96 : f32 to vector<8x32xf32>
    %426 = arith.addf %425, %424 : vector<8x32xf32>
    %427 = arith.divf %425, %426 : vector<8x32xf32>
    %428 = vector.extract_strided_slice %413 {offsets = [0, 32], sizes = [8, 32], strides = [1, 1]} : vector<8x128xf32> to vector<8x32xf32>
    %429 = arith.negf %428 : vector<8x32xf32>
    %430 = math.exp %429 : vector<8x32xf32>
    %cst_97 = arith.constant 1.000000e+00 : f32
    %431 = vector.broadcast %cst_97 : f32 to vector<8x32xf32>
    %432 = arith.addf %431, %430 : vector<8x32xf32>
    %433 = arith.divf %431, %432 : vector<8x32xf32>
    %434 = vector.extract_strided_slice %413 {offsets = [0, 64], sizes = [8, 32], strides = [1, 1]} : vector<8x128xf32> to vector<8x32xf32>
    %435 = math.tanh %434 : vector<8x32xf32>
    %436 = vector.extract_strided_slice %413 {offsets = [0, 96], sizes = [8, 32], strides = [1, 1]} : vector<8x128xf32> to vector<8x32xf32>
    %437 = arith.negf %436 : vector<8x32xf32>
    %438 = math.exp %437 : vector<8x32xf32>
    %cst_98 = arith.constant 1.000000e+00 : f32
    %439 = vector.broadcast %cst_98 : f32 to vector<8x32xf32>
    %440 = arith.addf %439, %438 : vector<8x32xf32>
    %441 = arith.divf %439, %440 : vector<8x32xf32>
    %442 = arith.mulf %433, %421 : vector<8x32xf32>
    %443 = arith.mulf %427, %435 : vector<8x32xf32>
    %444 = arith.addf %442, %443 : vector<8x32xf32>
    %445 = math.tanh %444 : vector<8x32xf32>
    %446 = arith.mulf %441, %445 : vector<8x32xf32>
    %447 = vector.extract_strided_slice %405 {offsets = [8, 0], sizes = [8, 32], strides = [1, 1]} : vector<16x32xf32> to vector<8x32xf32>
    %448 = vector.extract_strided_slice %420 {offsets = [0, 0], sizes = [8, 32], strides = [1, 1]} : vector<8x128xf32> to vector<8x32xf32>
    %449 = arith.negf %448 : vector<8x32xf32>
    %450 = math.exp %449 : vector<8x32xf32>
    %cst_99 = arith.constant 1.000000e+00 : f32
    %451 = vector.broadcast %cst_99 : f32 to vector<8x32xf32>
    %452 = arith.addf %451, %450 : vector<8x32xf32>
    %453 = arith.divf %451, %452 : vector<8x32xf32>
    %454 = vector.extract_strided_slice %420 {offsets = [0, 32], sizes = [8, 32], strides = [1, 1]} : vector<8x128xf32> to vector<8x32xf32>
    %455 = arith.negf %454 : vector<8x32xf32>
    %456 = math.exp %455 : vector<8x32xf32>
    %cst_100 = arith.constant 1.000000e+00 : f32
    %457 = vector.broadcast %cst_100 : f32 to vector<8x32xf32>
    %458 = arith.addf %457, %456 : vector<8x32xf32>
    %459 = arith.divf %457, %458 : vector<8x32xf32>
    %460 = vector.extract_strided_slice %420 {offsets = [0, 64], sizes = [8, 32], strides = [1, 1]} : vector<8x128xf32> to vector<8x32xf32>
    %461 = math.tanh %460 : vector<8x32xf32>
    %462 = vector.extract_strided_slice %420 {offsets = [0, 96], sizes = [8, 32], strides = [1, 1]} : vector<8x128xf32> to vector<8x32xf32>
    %463 = arith.negf %462 : vector<8x32xf32>
    %464 = math.exp %463 : vector<8x32xf32>
    %cst_101 = arith.constant 1.000000e+00 : f32
    %465 = vector.broadcast %cst_101 : f32 to vector<8x32xf32>
    %466 = arith.addf %465, %464 : vector<8x32xf32>
    %467 = arith.divf %465, %466 : vector<8x32xf32>
    %468 = arith.mulf %459, %447 : vector<8x32xf32>
    %469 = arith.mulf %453, %461 : vector<8x32xf32>
    %470 = arith.addf %468, %469 : vector<8x32xf32>
    %471 = math.tanh %470 : vector<8x32xf32>
    %472 = arith.mulf %467, %471 : vector<8x32xf32>
    %473 = arith.truncf %446 : vector<8x32xf32> to vector<8x32xbf16>
    %474 = arith.index_cast %c5_i32 : i32 to index
    %c0_102 = arith.constant 0 : index
    %c0_103 = arith.constant 0 : index
    %475 = vector.load %arg4[%474, %c0_102, %c0_103] : memref<8x8x32xbf16, #tpu.memory_space<vmem>>, vector<1x8x32xbf16>
    %476 = vector.shape_cast %475 : vector<1x8x32xbf16> to vector<8x32xbf16>
    %477 = vector.shape_cast %473 : vector<8x32xbf16> to vector<1x8x32xbf16>
    tpu.vector_store %arg4[%474, %c0_102, %c0_103], %477 {strides = array<i32>} : memref<8x8x32xbf16, #tpu.memory_space<vmem>>, vector<1x8x32xbf16>,
    %478 = arith.truncf %472 : vector<8x32xf32> to vector<8x32xbf16>
    %c7_i32_104 = arith.constant 7 : i32
    %479 = arith.subi %c7_i32_104, %c5_i32 : i32
    %480 = arith.index_cast %479 : i32 to index
    %c0_105 = arith.constant 0 : index
    %c0_106 = arith.constant 0 : index
    %481 = vector.load %arg5[%480, %c0_105, %c0_106] : memref<8x8x32xbf16, #tpu.memory_space<vmem>>, vector<1x8x32xbf16>
    %482 = vector.shape_cast %481 : vector<1x8x32xbf16> to vector<8x32xbf16>
    %483 = vector.shape_cast %478 : vector<8x32xbf16> to vector<1x8x32xbf16>
    tpu.vector_store %arg5[%480, %c0_105, %c0_106], %483 {strides = array<i32>} : memref<8x8x32xbf16, #tpu.memory_space<vmem>>, vector<1x8x32xbf16>,
    %484 = tpu.concatenate %446, %472 in 0 : vector<8x32xf32>, vector<8x32xf32> -> vector<16x32xf32>
    %485 = tpu.concatenate %444, %470 in 0 : vector<8x32xf32>, vector<8x32xf32> -> vector<16x32xf32>
    %c6_i32 = arith.constant 6 : i32
    %486 = arith.truncf %484 : vector<16x32xf32> to vector<16x32xbf16>
    %cst_107 = arith.constant dense<0.000000e+00> : vector<16x256xf32>
    %487 = tpu.matmul %486, %3, %cst_107 {dimension_numbers = #tpu.dot_dimension_numbers<[1], [0], [0], [1], [0, 0, 1, 1], [], []>} : vector<16x32xbf16>, vector<32x256xbf16>, vector<16x256xf32> -> vector<16x256xf32>
    %488 = arith.index_cast %c6_i32 : i32 to index
    %c0_108 = arith.constant 0 : index
    %c0_109 = arith.constant 0 : index
    %489 = vector.load %arg1[%488, %c0_108, %c0_109] : memref<8x8x128xbf16, #tpu.memory_space<vmem>>, vector<1x8x128xbf16>
    %490 = vector.shape_cast %489 : vector<1x8x128xbf16> to vector<8x128xbf16>
    %491 = arith.extf %490 : vector<8x128xbf16> to vector<8x128xf32>
    %492 = vector.extract_strided_slice %487 {offsets = [0, 0], sizes = [8, 128], strides = [1, 1]} : vector<16x256xf32> to vector<8x128xf32>
    %493 = arith.addf %491, %492 : vector<8x128xf32>
    %c7_i32_110 = arith.constant 7 : i32
    %494 = arith.subi %c7_i32_110, %c6_i32 : i32
    %495 = arith.index_cast %494 : i32 to index
    %c0_111 = arith.constant 0 : index
    %c0_112 = arith.constant 0 : index
    %496 = vector.load %arg2[%495, %c0_111, %c0_112] : memref<8x8x128xbf16, #tpu.memory_space<vmem>>, vector<1x8x128xbf16>
    %497 = vector.shape_cast %496 : vector<1x8x128xbf16> to vector<8x128xbf16>
    %498 = arith.extf %497 : vector<8x128xbf16> to vector<8x128xf32>
    %499 = vector.extract_strided_slice %487 {offsets = [8, 128], sizes = [8, 128], strides = [1, 1]} : vector<16x256xf32> to vector<8x128xf32>
    %500 = arith.addf %498, %499 : vector<8x128xf32>
    %501 = vector.extract_strided_slice %485 {offsets = [0, 0], sizes = [8, 32], strides = [1, 1]} : vector<16x32xf32> to vector<8x32xf32>
    %502 = vector.extract_strided_slice %493 {offsets = [0, 0], sizes = [8, 32], strides = [1, 1]} : vector<8x128xf32> to vector<8x32xf32>
    %503 = arith.negf %502 : vector<8x32xf32>
    %504 = math.exp %503 : vector<8x32xf32>
    %cst_113 = arith.constant 1.000000e+00 : f32
    %505 = vector.broadcast %cst_113 : f32 to vector<8x32xf32>
    %506 = arith.addf %505, %504 : vector<8x32xf32>
    %507 = arith.divf %505, %506 : vector<8x32xf32>
    %508 = vector.extract_strided_slice %493 {offsets = [0, 32], sizes = [8, 32], strides = [1, 1]} : vector<8x128xf32> to vector<8x32xf32>
    %509 = arith.negf %508 : vector<8x32xf32>
    %510 = math.exp %509 : vector<8x32xf32>
    %cst_114 = arith.constant 1.000000e+00 : f32
    %511 = vector.broadcast %cst_114 : f32 to vector<8x32xf32>
    %512 = arith.addf %511, %510 : vector<8x32xf32>
    %513 = arith.divf %511, %512 : vector<8x32xf32>
    %514 = vector.extract_strided_slice %493 {offsets = [0, 64], sizes = [8, 32], strides = [1, 1]} : vector<8x128xf32> to vector<8x32xf32>
    %515 = math.tanh %514 : vector<8x32xf32>
    %516 = vector.extract_strided_slice %493 {offsets = [0, 96], sizes = [8, 32], strides = [1, 1]} : vector<8x128xf32> to vector<8x32xf32>
    %517 = arith.negf %516 : vector<8x32xf32>
    %518 = math.exp %517 : vector<8x32xf32>
    %cst_115 = arith.constant 1.000000e+00 : f32
    %519 = vector.broadcast %cst_115 : f32 to vector<8x32xf32>
    %520 = arith.addf %519, %518 : vector<8x32xf32>
    %521 = arith.divf %519, %520 : vector<8x32xf32>
    %522 = arith.mulf %513, %501 : vector<8x32xf32>
    %523 = arith.mulf %507, %515 : vector<8x32xf32>
    %524 = arith.addf %522, %523 : vector<8x32xf32>
    %525 = math.tanh %524 : vector<8x32xf32>
    %526 = arith.mulf %521, %525 : vector<8x32xf32>
    %527 = vector.extract_strided_slice %485 {offsets = [8, 0], sizes = [8, 32], strides = [1, 1]} : vector<16x32xf32> to vector<8x32xf32>
    %528 = vector.extract_strided_slice %500 {offsets = [0, 0], sizes = [8, 32], strides = [1, 1]} : vector<8x128xf32> to vector<8x32xf32>
    %529 = arith.negf %528 : vector<8x32xf32>
    %530 = math.exp %529 : vector<8x32xf32>
    %cst_116 = arith.constant 1.000000e+00 : f32
    %531 = vector.broadcast %cst_116 : f32 to vector<8x32xf32>
    %532 = arith.addf %531, %530 : vector<8x32xf32>
    %533 = arith.divf %531, %532 : vector<8x32xf32>
    %534 = vector.extract_strided_slice %500 {offsets = [0, 32], sizes = [8, 32], strides = [1, 1]} : vector<8x128xf32> to vector<8x32xf32>
    %535 = arith.negf %534 : vector<8x32xf32>
    %536 = math.exp %535 : vector<8x32xf32>
    %cst_117 = arith.constant 1.000000e+00 : f32
    %537 = vector.broadcast %cst_117 : f32 to vector<8x32xf32>
    %538 = arith.addf %537, %536 : vector<8x32xf32>
    %539 = arith.divf %537, %538 : vector<8x32xf32>
    %540 = vector.extract_strided_slice %500 {offsets = [0, 64], sizes = [8, 32], strides = [1, 1]} : vector<8x128xf32> to vector<8x32xf32>
    %541 = math.tanh %540 : vector<8x32xf32>
    %542 = vector.extract_strided_slice %500 {offsets = [0, 96], sizes = [8, 32], strides = [1, 1]} : vector<8x128xf32> to vector<8x32xf32>
    %543 = arith.negf %542 : vector<8x32xf32>
    %544 = math.exp %543 : vector<8x32xf32>
    %cst_118 = arith.constant 1.000000e+00 : f32
    %545 = vector.broadcast %cst_118 : f32 to vector<8x32xf32>
    %546 = arith.addf %545, %544 : vector<8x32xf32>
    %547 = arith.divf %545, %546 : vector<8x32xf32>
    %548 = arith.mulf %539, %527 : vector<8x32xf32>
    %549 = arith.mulf %533, %541 : vector<8x32xf32>
    %550 = arith.addf %548, %549 : vector<8x32xf32>
    %551 = math.tanh %550 : vector<8x32xf32>
    %552 = arith.mulf %547, %551 : vector<8x32xf32>
    %553 = arith.truncf %526 : vector<8x32xf32> to vector<8x32xbf16>
    %554 = arith.index_cast %c6_i32 : i32 to index
    %c0_119 = arith.constant 0 : index
    %c0_120 = arith.constant 0 : index
    %555 = vector.load %arg4[%554, %c0_119, %c0_120] : memref<8x8x32xbf16, #tpu.memory_space<vmem>>, vector<1x8x32xbf16>
    %556 = vector.shape_cast %555 : vector<1x8x32xbf16> to vector<8x32xbf16>
    %557 = vector.shape_cast %553 : vector<8x32xbf16> to vector<1x8x32xbf16>
    tpu.vector_store %arg4[%554, %c0_119, %c0_120], %557 {strides = array<i32>} : memref<8x8x32xbf16, #tpu.memory_space<vmem>>, vector<1x8x32xbf16>,
    %558 = arith.truncf %552 : vector<8x32xf32> to vector<8x32xbf16>
    %c7_i32_121 = arith.constant 7 : i32
    %559 = arith.subi %c7_i32_121, %c6_i32 : i32
    %560 = arith.index_cast %559 : i32 to index
    %c0_122 = arith.constant 0 : index
    %c0_123 = arith.constant 0 : index
    %561 = vector.load %arg5[%560, %c0_122, %c0_123] : memref<8x8x32xbf16, #tpu.memory_space<vmem>>, vector<1x8x32xbf16>
    %562 = vector.shape_cast %561 : vector<1x8x32xbf16> to vector<8x32xbf16>
    %563 = vector.shape_cast %558 : vector<8x32xbf16> to vector<1x8x32xbf16>
    tpu.vector_store %arg5[%560, %c0_122, %c0_123], %563 {strides = array<i32>} : memref<8x8x32xbf16, #tpu.memory_space<vmem>>, vector<1x8x32xbf16>,
    %564 = tpu.concatenate %526, %552 in 0 : vector<8x32xf32>, vector<8x32xf32> -> vector<16x32xf32>
    %565 = tpu.concatenate %524, %550 in 0 : vector<8x32xf32>, vector<8x32xf32> -> vector<16x32xf32>
    %c7_i32_124 = arith.constant 7 : i32
    %566 = arith.truncf %564 : vector<16x32xf32> to vector<16x32xbf16>
    %cst_125 = arith.constant dense<0.000000e+00> : vector<16x256xf32>
    %567 = tpu.matmul %566, %3, %cst_125 {dimension_numbers = #tpu.dot_dimension_numbers<[1], [0], [0], [1], [0, 0, 1, 1], [], []>} : vector<16x32xbf16>, vector<32x256xbf16>, vector<16x256xf32> -> vector<16x256xf32>
    %568 = arith.index_cast %c7_i32_124 : i32 to index
    %c0_126 = arith.constant 0 : index
    %c0_127 = arith.constant 0 : index
    %569 = vector.load %arg1[%568, %c0_126, %c0_127] : memref<8x8x128xbf16, #tpu.memory_space<vmem>>, vector<1x8x128xbf16>
    %570 = vector.shape_cast %569 : vector<1x8x128xbf16> to vector<8x128xbf16>
    %571 = arith.extf %570 : vector<8x128xbf16> to vector<8x128xf32>
    %572 = vector.extract_strided_slice %567 {offsets = [0, 0], sizes = [8, 128], strides = [1, 1]} : vector<16x256xf32> to vector<8x128xf32>
    %573 = arith.addf %571, %572 : vector<8x128xf32>
    %c7_i32_128 = arith.constant 7 : i32
    %574 = arith.subi %c7_i32_128, %c7_i32_124 : i32
    %575 = arith.index_cast %574 : i32 to index
    %c0_129 = arith.constant 0 : index
    %c0_130 = arith.constant 0 : index
    %576 = vector.load %arg2[%575, %c0_129, %c0_130] : memref<8x8x128xbf16, #tpu.memory_space<vmem>>, vector<1x8x128xbf16>
    %577 = vector.shape_cast %576 : vector<1x8x128xbf16> to vector<8x128xbf16>
    %578 = arith.extf %577 : vector<8x128xbf16> to vector<8x128xf32>
    %579 = vector.extract_strided_slice %567 {offsets = [8, 128], sizes = [8, 128], strides = [1, 1]} : vector<16x256xf32> to vector<8x128xf32>
    %580 = arith.addf %578, %579 : vector<8x128xf32>
    %581 = vector.extract_strided_slice %565 {offsets = [0, 0], sizes = [8, 32], strides = [1, 1]} : vector<16x32xf32> to vector<8x32xf32>
    %582 = vector.extract_strided_slice %573 {offsets = [0, 0], sizes = [8, 32], strides = [1, 1]} : vector<8x128xf32> to vector<8x32xf32>
    %583 = arith.negf %582 : vector<8x32xf32>
    %584 = math.exp %583 : vector<8x32xf32>
    %cst_131 = arith.constant 1.000000e+00 : f32
    %585 = vector.broadcast %cst_131 : f32 to vector<8x32xf32>
    %586 = arith.addf %585, %584 : vector<8x32xf32>
    %587 = arith.divf %585, %586 : vector<8x32xf32>
    %588 = vector.extract_strided_slice %573 {offsets = [0, 32], sizes = [8, 32], strides = [1, 1]} : vector<8x128xf32> to vector<8x32xf32>
    %589 = arith.negf %588 : vector<8x32xf32>
    %590 = math.exp %589 : vector<8x32xf32>
    %cst_132 = arith.constant 1.000000e+00 : f32
    %591 = vector.broadcast %cst_132 : f32 to vector<8x32xf32>
    %592 = arith.addf %591, %590 : vector<8x32xf32>
    %593 = arith.divf %591, %592 : vector<8x32xf32>
    %594 = vector.extract_strided_slice %573 {offsets = [0, 64], sizes = [8, 32], strides = [1, 1]} : vector<8x128xf32> to vector<8x32xf32>
    %595 = math.tanh %594 : vector<8x32xf32>
    %596 = vector.extract_strided_slice %573 {offsets = [0, 96], sizes = [8, 32], strides = [1, 1]} : vector<8x128xf32> to vector<8x32xf32>
    %597 = arith.negf %596 : vector<8x32xf32>
    %598 = math.exp %597 : vector<8x32xf32>
    %cst_133 = arith.constant 1.000000e+00 : f32
    %599 = vector.broadcast %cst_133 : f32 to vector<8x32xf32>
    %600 = arith.addf %599, %598 : vector<8x32xf32>
    %601 = arith.divf %599, %600 : vector<8x32xf32>
    %602 = arith.mulf %593, %581 : vector<8x32xf32>
    %603 = arith.mulf %587, %595 : vector<8x32xf32>
    %604 = arith.addf %602, %603 : vector<8x32xf32>
    %605 = math.tanh %604 : vector<8x32xf32>
    %606 = arith.mulf %601, %605 : vector<8x32xf32>
    %607 = vector.extract_strided_slice %565 {offsets = [8, 0], sizes = [8, 32], strides = [1, 1]} : vector<16x32xf32> to vector<8x32xf32>
    %608 = vector.extract_strided_slice %580 {offsets = [0, 0], sizes = [8, 32], strides = [1, 1]} : vector<8x128xf32> to vector<8x32xf32>
    %609 = arith.negf %608 : vector<8x32xf32>
    %610 = math.exp %609 : vector<8x32xf32>
    %cst_134 = arith.constant 1.000000e+00 : f32
    %611 = vector.broadcast %cst_134 : f32 to vector<8x32xf32>
    %612 = arith.addf %611, %610 : vector<8x32xf32>
    %613 = arith.divf %611, %612 : vector<8x32xf32>
    %614 = vector.extract_strided_slice %580 {offsets = [0, 32], sizes = [8, 32], strides = [1, 1]} : vector<8x128xf32> to vector<8x32xf32>
    %615 = arith.negf %614 : vector<8x32xf32>
    %616 = math.exp %615 : vector<8x32xf32>
    %cst_135 = arith.constant 1.000000e+00 : f32
    %617 = vector.broadcast %cst_135 : f32 to vector<8x32xf32>
    %618 = arith.addf %617, %616 : vector<8x32xf32>
    %619 = arith.divf %617, %618 : vector<8x32xf32>
    %620 = vector.extract_strided_slice %580 {offsets = [0, 64], sizes = [8, 32], strides = [1, 1]} : vector<8x128xf32> to vector<8x32xf32>
    %621 = math.tanh %620 : vector<8x32xf32>
    %622 = vector.extract_strided_slice %580 {offsets = [0, 96], sizes = [8, 32], strides = [1, 1]} : vector<8x128xf32> to vector<8x32xf32>
    %623 = arith.negf %622 : vector<8x32xf32>
    %624 = math.exp %623 : vector<8x32xf32>
    %cst_136 = arith.constant 1.000000e+00 : f32
    %625 = vector.broadcast %cst_136 : f32 to vector<8x32xf32>
    %626 = arith.addf %625, %624 : vector<8x32xf32>
    %627 = arith.divf %625, %626 : vector<8x32xf32>
    %628 = arith.mulf %619, %607 : vector<8x32xf32>
    %629 = arith.mulf %613, %621 : vector<8x32xf32>
    %630 = arith.addf %628, %629 : vector<8x32xf32>
    %631 = math.tanh %630 : vector<8x32xf32>
    %632 = arith.mulf %627, %631 : vector<8x32xf32>
    %633 = arith.truncf %606 : vector<8x32xf32> to vector<8x32xbf16>
    %634 = arith.index_cast %c7_i32_124 : i32 to index
    %c0_137 = arith.constant 0 : index
    %c0_138 = arith.constant 0 : index
    %635 = vector.load %arg4[%634, %c0_137, %c0_138] : memref<8x8x32xbf16, #tpu.memory_space<vmem>>, vector<1x8x32xbf16>
    %636 = vector.shape_cast %635 : vector<1x8x32xbf16> to vector<8x32xbf16>
    %637 = vector.shape_cast %633 : vector<8x32xbf16> to vector<1x8x32xbf16>
    tpu.vector_store %arg4[%634, %c0_137, %c0_138], %637 {strides = array<i32>} : memref<8x8x32xbf16, #tpu.memory_space<vmem>>, vector<1x8x32xbf16>,
    %638 = arith.truncf %632 : vector<8x32xf32> to vector<8x32xbf16>
    %c7_i32_139 = arith.constant 7 : i32
    %639 = arith.subi %c7_i32_139, %c7_i32_124 : i32
    %640 = arith.index_cast %639 : i32 to index
    %c0_140 = arith.constant 0 : index
    %c0_141 = arith.constant 0 : index
    %641 = vector.load %arg5[%640, %c0_140, %c0_141] : memref<8x8x32xbf16, #tpu.memory_space<vmem>>, vector<1x8x32xbf16>
    %642 = vector.shape_cast %641 : vector<1x8x32xbf16> to vector<8x32xbf16>
    %643 = vector.shape_cast %638 : vector<8x32xbf16> to vector<1x8x32xbf16>
    tpu.vector_store %arg5[%640, %c0_140, %c0_141], %643 {strides = array<i32>} : memref<8x8x32xbf16, #tpu.memory_space<vmem>>, vector<1x8x32xbf16>,
    %644 = tpu.concatenate %606, %632 in 0 : vector<8x32xf32>, vector<8x32xf32> -> vector<16x32xf32>
    %645 = tpu.concatenate %604, %630 in 0 : vector<8x32xf32>, vector<8x32xf32> -> vector<16x32xf32>
    %c8_i32 = arith.constant 8 : i32
    %c0_142 = arith.constant 0 : index
    %c0_143 = arith.constant 0 : index
    %646 = vector.load %arg6[%c0_142, %c0_143] : memref<16x32xf32, #tpu.memory_space<vmem>>, vector<16x32xf32>
    tpu.vector_store %arg6[%c0_142, %c0_143], %644 {strides = array<i32>} : memref<16x32xf32, #tpu.memory_space<vmem>>, vector<16x32xf32>,
    %c0_144 = arith.constant 0 : index
    %c0_145 = arith.constant 0 : index
    %647 = vector.load %arg7[%c0_144, %c0_145] : memref<16x32xf32, #tpu.memory_space<vmem>>, vector<16x32xf32>
    tpu.vector_store %arg7[%c0_144, %c0_145], %645 {strides = array<i32>} : memref<16x32xf32, #tpu.memory_space<vmem>>, vector<16x32xf32>,
    return
  }
  func.func @transform_0(%arg0: i32) -> (i32, i32, i32) {
    %c0_i32 = arith.constant 0 : i32
    %c0_i32_0 = arith.constant 0 : i32
    %c0_i32_1 = arith.constant 0 : i32
    return %arg0, %c0_i32, %c0_i32_0 : i32, i32, i32
  }
  func.func @transform_1(%arg0: i32) -> (i32, i32, i32) {
    %c0_i32 = arith.constant 0 : i32
    %0 = arith.subi %c0_i32, %arg0 : i32
    %c0_i32_0 = arith.constant 0 : i32
    %c1_i32 = arith.constant 1 : i32
    %c0_i32_1 = arith.constant 0 : i32
    return %0, %c0_i32_0, %c1_i32 : i32, i32, i32
  }
  func.func @transform_2(%arg0: i32) -> (i32, i32) {
    %c0_i32 = arith.constant 0 : i32
    %c0_i32_0 = arith.constant 0 : i32
    %c0_i32_1 = arith.constant 0 : i32
    return %c0_i32, %c0_i32_0 : i32, i32
  }
  func.func @transform_3(%arg0: i32) -> (i32, i32, i32) {
    %c0_i32 = arith.constant 0 : i32
    %c0_i32_0 = arith.constant 0 : i32
    %c0_i32_1 = arith.constant 0 : i32
    return %arg0, %c0_i32, %c0_i32_0 : i32, i32, i32
  }
  func.func @transform_4(%arg0: i32) -> (i32, i32, i32) {
    %c0_i32 = arith.constant 0 : i32
    %0 = arith.subi %c0_i32, %arg0 : i32
    %c0_i32_0 = arith.constant 0 : i32
    %c0_i32_1 = arith.constant 0 : i32
    %c0_i32_2 = arith.constant 0 : i32
    return %0, %c0_i32_0, %c0_i32_1 : i32, i32, i32
  }
}

</mosaic_0001>

<llo_original>
// kernel: blstm_forward.9
$region0: #{blstm_forward.9}
  #allocation0 [shape = 'u32[]', space=smem, size = 0x4, offset = 0x4, fixed_abs, tag = 'smem constant byte address 0x4 - core index']
  #allocation1 [shape = 'u32[144,128]{1,0:T(1,128)}', space=vmem, size = 0x12000, scoped, tag = 'internal scratch']
  #allocation2 [shape = 'f32[1,1]{1,0:T(1,128)S(1)}', space=vmem, size = 0x200, scoped, tag = 'scoped memory for blstm_forward.9']
  %s0 = inlined_call_operand.vmem [shape: bf16[8,8,32], index: 0, kind: input, shape index: {}]
  %s1 = inlined_call_operand.vmem [shape: bf16[8,8,32], index: 1, kind: input, shape index: {}]
  %s2 = inlined_call_operand.vmem [shape: f32[1,32], index: 2, kind: input, shape index: {}]
  %s3 = inlined_call_operand.vmem [shape: f32[1,32], index: 3, kind: input, shape index: {}]
  %s4 = inlined_call_operand.<no memory space> [shape: f32[1,1], index: 4, kind: input, shape index: {}]
  %s5 = inlined_call_operand.vmem [shape: f32[8,8], index: 5, kind: output, shape index: {}]
  %s6 = sld [smem:[#allocation0]]
  $region30: #{blstm_forward.9} parent=0
    _
  %s8 = ssub.s32 1, %s6
  %s9 = scalar_select 0, %s8, %s6
  %v10 = vstv %s4
  %11 = vst [vmem:[#allocation2] sm:$0x1] %v10
  // Predicated region
  $region2: #{blstm_forward.9} parent=0 // pred_check
    _
  $region3: #{blstm_forward.9} parent=0 // pred_check_branch
    %13 = sbr.rel (0) target = $region5
  $region4: #{blstm_forward.9} parent=0 // pred_region
    _
  $region5: #{blstm_forward.9} parent=0 // pred_fallthru
    _
  // Predicated region
  $region6: #{blstm_forward.9} parent=0 // pred_check
    _
  $region7: #{blstm_forward.9} parent=0 // pred_check_branch
    %15 = sbr.rel (0) target = $region9
  $region8: #{blstm_forward.9} parent=0 // pred_region
    _
  $region9: #{blstm_forward.9} parent=0 // pred_fallthru
    _
  // Predicated region
  $region10: #{blstm_forward.9} parent=0 // pred_check
    _
  $region11: #{blstm_forward.9} parent=0 // pred_check_branch
    %17 = sbr.rel (0) target = $region13
  $region12: #{blstm_forward.9} parent=0 // pred_region
    _
  $region13: #{blstm_forward.9} parent=0 // pred_fallthru
    _
  // Predicated region
  $region14: #{blstm_forward.9} parent=0 // pred_check
    _
  $region15: #{blstm_forward.9} parent=0 // pred_check_branch
    %19 = sbr.rel (0) target = $region17
  $region16: #{blstm_forward.9} parent=0 // pred_region
    _
  $region17: #{blstm_forward.9} parent=0 // pred_fallthru
    _
  // Predicated region
  $region18: #{blstm_forward.9} parent=0 // pred_check
    _
  $region19: #{blstm_forward.9} parent=0 // pred_check_branch
    %21 = sbr.rel (0) target = $region21
  $region20: #{blstm_forward.9} parent=0 // pred_region
    _
  $region21: #{blstm_forward.9} parent=0 // pred_fallthru
    _
  %v22 = vld [vmem:[%s0] sm:$0xf]
  %v23 = vld [vmem:[%s0 + $0x4] sm:$0xf]
  %v24 = vld [vmem:[%s0 + $0x8] sm:$0xf]
  %v25 = vld [vmem:[%s0 + $0xc] sm:$0xf]
  %v26 = vld [vmem:[%s0 + $0x10] sm:$0xf]
  %v27 = vld [vmem:[%s0 + $0x14] sm:$0xf]
  %v28 = vld [vmem:[%s0 + $0x18] sm:$0xf]
  %v29 = vld [vmem:[%s0 + $0x1c] sm:$0xf]
  %v30 = vld [vmem:[%s2] sm:$0x1]
  %v31 = vunpack.c.l.bf16 %v22
  %v32 = vunpack.c.l.bf16 %v23
  %v33 = vunpack.c.l.bf16 %v24
  %v34 = vunpack.c.l.bf16 %v25
  %v35 = vunpack.c.l.bf16 %v26
  %v36 = vunpack.c.l.bf16 %v27
  %v37 = vunpack.c.l.bf16 %v28
  %v38 = vunpack.c.l.bf16 %v29
  %v40 = vlaneseq
  %v41 = vshrl.u32 %v40, 7
  %v42 = vsub.s32 0, %v41
  %v43 = vrot.slane %v30, %v42
  %v45 = vmul.f32 %v31, %v43
  %v46 = vmul.f32 %v32, %v43
  %v47 = vmul.f32 %v33, %v43
  %v48 = vmul.f32 %v34, %v43
  %v49 = vmul.f32 %v35, %v43
  %v50 = vmul.f32 %v36, %v43
  %v51 = vmul.f32 %v37, %v43
  %v52 = vmul.f32 %v38, %v43
  %vm53 = vcmask 261120
  %v54 = vsel %vm53, %v45, 0.0
  %55 = vadd.xlane.f32.xlu0 %v54
  %v56 = vpop.xlane.xlu0 %55
  %v57 = vsel %vm53, %v46, 0.0
  %58 = vadd.xlane.f32.xlu0 %v57
  %v59 = vpop.xlane.xlu0 %58
  %v60 = vsel %vm53, %v47, 0.0
  %61 = vadd.xlane.f32.xlu0 %v60
  %v62 = vpop.xlane.xlu0 %61
  %v63 = vsel %vm53, %v48, 0.0
  %64 = vadd.xlane.f32.xlu0 %v63
  %v65 = vpop.xlane.xlu0 %64
  %v66 = vsel %vm53, %v49, 0.0
  %67 = vadd.xlane.f32.xlu0 %v66
  %v68 = vpop.xlane.xlu0 %67
  %v69 = vsel %vm53, %v50, 0.0
  %70 = vadd.xlane.f32.xlu0 %v69
  %v71 = vpop.xlane.xlu0 %70
  %v72 = vsel %vm53, %v51, 0.0
  %73 = vadd.xlane.f32.xlu0 %v72
  %v74 = vpop.xlane.xlu0 %73
  %v75 = vsel %vm53, %v52, 0.0
  %76 = vadd.xlane.f32.xlu0 %v75
  %v77 = vpop.xlane.xlu0 %76
  %v78 = vld [vmem:[%s1] sm:$0xf]
  %v79 = vld [vmem:[%s1 + $0x4] sm:$0xf]
  %v80 = vld [vmem:[%s1 + $0x8] sm:$0xf]
  %v81 = vld [vmem:[%s1 + $0xc] sm:$0xf]
  %v82 = vld [vmem:[%s1 + $0x10] sm:$0xf]
  %v83 = vld [vmem:[%s1 + $0x14] sm:$0xf]
  %v84 = vld [vmem:[%s1 + $0x18] sm:$0xf]
  %v85 = vld [vmem:[%s1 + $0x1c] sm:$0xf]
  %v86 = vld [vmem:[%s3] sm:$0x1]
  %v87 = vunpack.c.l.bf16 %v78
  %v88 = vunpack.c.l.bf16 %v79
  %v89 = vunpack.c.l.bf16 %v80
  %v90 = vunpack.c.l.bf16 %v81
  %v91 = vunpack.c.l.bf16 %v82
  %v92 = vunpack.c.l.bf16 %v83
  %v93 = vunpack.c.l.bf16 %v84
  %v94 = vunpack.c.l.bf16 %v85
  %v96 = vlaneseq
  %v97 = vshrl.u32 %v96, 7
  %v98 = vsub.s32 0, %v97
  %v99 = vrot.slane %v86, %v98
  %v101 = vmul.f32 %v87, %v99
  %v102 = vmul.f32 %v88, %v99
  %v103 = vmul.f32 %v89, %v99
  %v104 = vmul.f32 %v90, %v99
  %v105 = vmul.f32 %v91, %v99
  %v106 = vmul.f32 %v92, %v99
  %v107 = vmul.f32 %v93, %v99
  %v108 = vmul.f32 %v94, %v99
  %v109 = vsel %vm53, %v101, 0.0
  %110 = vadd.xlane.f32.xlu0 %v109
  %v111 = vpop.xlane.xlu0 %110
  %v112 = vsel %vm53, %v102, 0.0
  %113 = vadd.xlane.f32.xlu0 %v112
  %v114 = vpop.xlane.xlu0 %113
  %v115 = vsel %vm53, %v103, 0.0
  %116 = vadd.xlane.f32.xlu0 %v115
  %v117 = vpop.xlane.xlu0 %116
  %v118 = vsel %vm53, %v104, 0.0
  %119 = vadd.xlane.f32.xlu0 %v118
  %v120 = vpop.xlane.xlu0 %119
  %v121 = vsel %vm53, %v105, 0.0
  %122 = vadd.xlane.f32.xlu0 %v121
  %v123 = vpop.xlane.xlu0 %122
  %v124 = vsel %vm53, %v106, 0.0
  %125 = vadd.xlane.f32.xlu0 %v124
  %v126 = vpop.xlane.xlu0 %125
  %v127 = vsel %vm53, %v107, 0.0
  %128 = vadd.xlane.f32.xlu0 %v127
  %v129 = vpop.xlane.xlu0 %128
  %v130 = vsel %vm53, %v108, 0.0
  %131 = vadd.xlane.f32.xlu0 %v130
  %v132 = vpop.xlane.xlu0 %131
  %v133 = vadd.f32 %v56, %v111
  %v134 = vadd.f32 %v59, %v114
  %v135 = vadd.f32 %v62, %v117
  %v136 = vadd.f32 %v65, %v120
  %v137 = vadd.f32 %v68, %v123
  %v138 = vadd.f32 %v71, %v126
  %v139 = vadd.f32 %v74, %v129
  %v140 = vadd.f32 %v77, %v132
  %v141 = vld [vmem:[#allocation2] sm:$0x1]
  %s142 = vtos %v141
  %v143 = vstv %s142
  %v144 = vadd.f32 %v133, %v143
  %v145 = vadd.f32 %v134, %v143
  %v146 = vadd.f32 %v135, %v143
  %v147 = vadd.f32 %v136, %v143
  %v148 = vadd.f32 %v137, %v143
  %v149 = vadd.f32 %v138, %v143
  %v150 = vadd.f32 %v139, %v143
  %v151 = vadd.f32 %v140, %v143
  %v152 = vxor.u32 %v144, 2147483648
  %v153 = vxor.u32 %v145, 2147483648
  %v154 = vxor.u32 %v146, 2147483648
  %v155 = vxor.u32 %v147, 2147483648
  %v156 = vxor.u32 %v148, 2147483648
  %v157 = vxor.u32 %v149, 2147483648
  %v158 = vxor.u32 %v150, 2147483648
  %v159 = vxor.u32 %v151, 2147483648
  %v160 = vmul.f32 %v152, 1.442695
  %v161 = vpow.pop %v160
  %v162 = vmul.f32 %v153, 1.442695
  %v163 = vpow.pop %v162
  %v164 = vmul.f32 %v154, 1.442695
  %v165 = vpow.pop %v164
  %v166 = vmul.f32 %v155, 1.442695
  %v167 = vpow.pop %v166
  %v168 = vmul.f32 %v156, 1.442695
  %v169 = vpow.pop %v168
  %v170 = vmul.f32 %v157, 1.442695
  %v171 = vpow.pop %v170
  %v172 = vmul.f32 %v158, 1.442695
  %v173 = vpow.pop %v172
  %v174 = vmul.f32 %v159, 1.442695
  %v175 = vpow.pop %v174
  %v176 = vadd.f32 %v161, 1.0
  %v177 = vadd.f32 %v163, 1.0
  %v178 = vadd.f32 %v165, 1.0
  %v179 = vadd.f32 %v167, 1.0
  %v180 = vadd.f32 %v169, 1.0
  %v181 = vadd.f32 %v171, 1.0
  %v182 = vadd.f32 %v173, 1.0
  %v183 = vadd.f32 %v175, 1.0
  %v184 = vrcp.pop %v176
  %v185 = vmul.f32 1.0, %v184
  %v186 = vrcp.pop %v177
  %v187 = vmul.f32 1.0, %v186
  %v188 = vrcp.pop %v178
  %v189 = vmul.f32 1.0, %v188
  %v190 = vrcp.pop %v179
  %v191 = vmul.f32 1.0, %v190
  %v192 = vrcp.pop %v180
  %v193 = vmul.f32 1.0, %v192
  %v194 = vrcp.pop %v181
  %v195 = vmul.f32 1.0, %v194
  %v196 = vrcp.pop %v182
  %v197 = vmul.f32 1.0, %v196
  %v198 = vrcp.pop %v183
  %v199 = vmul.f32 1.0, %v198
  %v208 = vlaneseq
  %v209 = vand.u32 %v208, 127
  %v210 = vlaneseq
  %v211 = vshrl.u32 %v210, 7
  %v212 = vsub.s32 %v209, %v211
  %v213 = vrot.slane %v185, %v212
  %v214 = vlaneseq
  %v215 = vshrl.u32 %v214, 7
  %v216 = vsub.s32 %v209, %v215
  %v217 = vrot.slane %v187, %v216
  %v218 = vlaneseq
  %v219 = vshrl.u32 %v218, 7
  %v220 = vsub.s32 %v209, %v219
  %v221 = vrot.slane %v189, %v220
  %v222 = vlaneseq
  %v223 = vshrl.u32 %v222, 7
  %v224 = vsub.s32 %v209, %v223
  %v225 = vrot.slane %v191, %v224
  %v226 = vlaneseq
  %v227 = vshrl.u32 %v226, 7
  %v228 = vsub.s32 %v209, %v227
  %v229 = vrot.slane %v193, %v228
  %v230 = vlaneseq
  %v231 = vshrl.u32 %v230, 7
  %v232 = vsub.s32 %v209, %v231
  %v233 = vrot.slane %v195, %v232
  %v234 = vlaneseq
  %v235 = vshrl.u32 %v234, 7
  %v236 = vsub.s32 %v209, %v235
  %v237 = vrot.slane %v197, %v236
  %v238 = vlaneseq
  %v239 = vshrl.u32 %v238, 7
  %v240 = vsub.s32 %v209, %v239
  %v241 = vrot.slane %v199, %v240
  %vm242 = vcmask 1041409
  %v243 = vsel %vm242, %v217, %v213
  %vm244 = vcmask 1042434
  %v245 = vsel %vm244, %v221, %v243
  %vm246 = vcmask 1043459
  %v247 = vsel %vm246, %v225, %v245
  %vm248 = vcmask 1044484
  %v249 = vsel %vm248, %v229, %v247
  %vm250 = vcmask 1045509
  %v251 = vsel %vm250, %v233, %v249
  %vm252 = vcmask 1046534
  %v253 = vsel %vm252, %v237, %v251
  %vm254 = vcmask 1047559
  %v255 = vsel %vm254, %v241, %v253
  %257 = vxpose.xlu0.b32.start [1/16] %v255, 128
  %258 = vxpose.xlu0.b32.cont [2/16] 0.0, 128
  %259 = vxpose.xlu0.b32.cont [3/16] 0.0, 128
  %260 = vxpose.xlu0.b32.cont [4/16] 0.0, 128
  %261 = vxpose.xlu0.b32.cont [5/16] 0.0, 128
  %262 = vxpose.xlu0.b32.cont [6/16] 0.0, 128
  %263 = vxpose.xlu0.b32.cont [7/16] 0.0, 128
  %264 = vxpose.xlu0.b32.cont [8/16] 0.0, 128
  %265 = vxpose.xlu0.b32.cont [9/16] 0.0, 128
  %266 = vxpose.xlu0.b32.cont [10/16] 0.0, 128
  %267 = vxpose.xlu0.b32.cont [11/16] 0.0, 128
  %268 = vxpose.xlu0.b32.cont [12/16] 0.0, 128
  %269 = vxpose.xlu0.b32.cont [13/16] 0.0, 128
  %270 = vxpose.xlu0.b32.cont [14/16] 0.0, 128
  %271 = vxpose.xlu0.b32.cont [15/16] 0.0, 128
  %272 = vxpose.xlu0.b32.end [16/16] 0.0, 128
  %v273 = vpop.trf.xlu0
  %v274 = vpop.trf.xlu0
  %v275 = vpop.trf.xlu0
  %v276 = vpop.trf.xlu0
  %v277 = vpop.trf.xlu0
  %v278 = vpop.trf.xlu0
  %v279 = vpop.trf.xlu0
  %v280 = vpop.trf.xlu0
  %v281 = vpop.trf.xlu0
  %v282 = vpop.trf.xlu0
  %v283 = vpop.trf.xlu0
  %v284 = vpop.trf.xlu0
  %v285 = vpop.trf.xlu0
  %v286 = vpop.trf.xlu0
  %v287 = vpop.trf.xlu0
  %v288 = vpop.trf.xlu0
  %vm289 = vcmask 64512
  %290 = vst.msk [vmem:[%s5] sm:$0xff] %vm289, %v273
  // Predicated region
  $region22: #{blstm_forward.9} parent=0 // pred_check
    _
  $region23: #{blstm_forward.9} parent=0 // pred_check_branch
    %292 = sbr.rel (0) target = $region25
  $region24: #{blstm_forward.9} parent=0 // pred_region
    _
  $region25: #{blstm_forward.9} parent=0 // pred_fallthru
    _
  // Predicated region
  $region26: #{blstm_forward.9} parent=0 // pred_check
    _
  $region27: #{blstm_forward.9} parent=0 // pred_check_branch
    %294 = sbr.rel (0) target = $region29
  $region28: #{blstm_forward.9} parent=0 // pred_region
    _
  $region29: #{blstm_forward.9} parent=0 // pred_fallthru
    _

// kernel: blstm_forward.7
$region0: #{blstm_forward.7}
  #allocation0 [shape = 'u32[]', space=smem, size = 0x4, offset = 0x4, fixed_abs, tag = 'smem constant byte address 0x4 - core index']
  #allocation1 [shape = 'u32[144,128]{1,0:T(1,128)}', space=vmem, size = 0x12000, scoped, tag = 'internal scratch']
  %s0 = inlined_call_operand.vmem [shape: bf16[64,32], index: 0, kind: input, shape index: {}]
  %s1 = inlined_call_operand.vmem [shape: bf16[64,32], index: 1, kind: input, shape index: {}]
  %s2 = inlined_call_operand.vmem [shape: bf16[32,256], index: 2, kind: input, shape index: {}]
  %s3 = inlined_call_operand.vmem [shape: bf16[32,256], index: 3, kind: input, shape index: {}]
  %s4 = inlined_call_operand.vmem [shape: f32[1,256], index: 4, kind: input, shape index: {}]
  %s5 = inlined_call_operand.vmem [shape: bf16[64,256], index: 5, kind: output, shape index: {}]
  %s6 = sld [smem:[#allocation0]]
  $region30: #{blstm_forward.7} parent=0
    _
  %s8 = ssub.s32 1, %s6
  %s9 = scalar_select 0, %s8, %s6
  // Predicated region
  $region2: #{blstm_forward.7} parent=0 // pred_check
    _
  $region3: #{blstm_forward.7} parent=0 // pred_check_branch
    %11 = sbr.rel (0) target = $region5
  $region4: #{blstm_forward.7} parent=0 // pred_region
    _
  $region5: #{blstm_forward.7} parent=0 // pred_fallthru
    _
  // Predicated region
  $region6: #{blstm_forward.7} parent=0 // pred_check
    _
  $region7: #{blstm_forward.7} parent=0 // pred_check_branch
    %13 = sbr.rel (0) target = $region9
  $region8: #{blstm_forward.7} parent=0 // pred_region
    _
  $region9: #{blstm_forward.7} parent=0 // pred_fallthru
    _
  // Predicated region
  $region10: #{blstm_forward.7} parent=0 // pred_check
    _
  $region11: #{blstm_forward.7} parent=0 // pred_check_branch
    %15 = sbr.rel (0) target = $region13
  $region12: #{blstm_forward.7} parent=0 // pred_region
    _
  $region13: #{blstm_forward.7} parent=0 // pred_fallthru
    _
  // Predicated region
  $region14: #{blstm_forward.7} parent=0 // pred_check
    _
  $region15: #{blstm_forward.7} parent=0 // pred_check_branch
    %17 = sbr.rel (0) target = $region17
  $region16: #{blstm_forward.7} parent=0 // pred_region
    _
  $region17: #{blstm_forward.7} parent=0 // pred_fallthru
    _
  // Predicated region
  $region18: #{blstm_forward.7} parent=0 // pred_check
    _
  $region19: #{blstm_forward.7} parent=0 // pred_check_branch
    %19 = sbr.rel (0) target = $region21
  $region20: #{blstm_forward.7} parent=0 // pred_region
    _
  $region21: #{blstm_forward.7} parent=0 // pred_fallthru
    _
  %v21 = vld [vmem:[%s0] sm:$0xf]
  %v22 = vld [vmem:[%s0 + $0x4] sm:$0xf]
  %v23 = vld [vmem:[%s0 + $0x8] sm:$0xf]
  %v24 = vld [vmem:[%s0 + $0xc] sm:$0xf]
  %v25 = vld [vmem:[%s0 + $0x10] sm:$0xf]
  %v26 = vld [vmem:[%s0 + $0x14] sm:$0xf]
  %v27 = vld [vmem:[%s0 + $0x18] sm:$0xf]
  %v28 = vld [vmem:[%s0 + $0x1c] sm:$0xf]
  %v29 = vld [vmem:[%s2] sm:$0xff]
  %v30 = vld [vmem:[%s2 + $0x8] sm:$0xff]
  %v31 = vld [vmem:[%s2 + $0x10] sm:$0xff]
  %v32 = vld [vmem:[%s2 + $0x18] sm:$0xff]
  %v33 = vld [vmem:[%s1] sm:$0xf]
  %v34 = vld [vmem:[%s1 + $0x4] sm:$0xf]
  %v35 = vld [vmem:[%s1 + $0x8] sm:$0xf]
  %v36 = vld [vmem:[%s1 + $0xc] sm:$0xf]
  %v37 = vld [vmem:[%s1 + $0x10] sm:$0xf]
  %v38 = vld [vmem:[%s1 + $0x14] sm:$0xf]
  %v39 = vld [vmem:[%s1 + $0x18] sm:$0xf]
  %v40 = vld [vmem:[%s1 + $0x1c] sm:$0xf]
  %v41 = vld [vmem:[%s3] sm:$0xff]
  %v42 = vld [vmem:[%s3 + $0x8] sm:$0xff]
  %v43 = vld [vmem:[%s3 + $0x10] sm:$0xff]
  %v44 = vld [vmem:[%s3 + $0x18] sm:$0xff]
  %v53 = vunpack.c.l.b16 %v33
  %v54 = vunpack.c.l.b16 %v34
  %v55 = vunpack.c.l.b16 %v35
  %v56 = vunpack.c.l.b16 %v36
  %v57 = vunpack.c.l.b16 %v37
  %v58 = vunpack.c.l.b16 %v38
  %v59 = vunpack.c.l.b16 %v39
  %v60 = vunpack.c.l.b16 %v40
  %v61 = vpack.c.b16 %v54, %v53
  %v62 = vpack.c.b16 %v56, %v55
  %v63 = vpack.c.b16 %v58, %v57
  %v64 = vpack.c.b16 %v60, %v59
  %v69 = vunpack.c.l.b16 %v41
  %v70 = vunpack.c.h.b16 %v41
  %v71 = vunpack.c.l.b16 %v42
  %v72 = vunpack.c.h.b16 %v42
  %v73 = vunpack.c.l.b16 %v43
  %v74 = vunpack.c.h.b16 %v43
  %v75 = vunpack.c.l.b16 %v44
  %v76 = vunpack.c.h.b16 %v44
  %v77 = vpack.c.b16 %v71, %v69
  %v78 = vpack.c.b16 %v72, %v70
  %v79 = vpack.c.b16 %v75, %v73
  %v80 = vpack.c.b16 %v76, %v74
  %vm85 = vcmask 261120
  %v87 = vsel %vm85, %v61, 0
  %v90 = vsel %vm85, %v62, 0
  %v93 = vsel %vm85, %v63, 0
  %v96 = vsel %vm85, %v64, 0
  %98 = vmatprep.subr.bf16.mxu0 %v78
  %99 = vmatpush1.bf16.msra.mxu0 %v77
  %100 = vmatprep.subr.bf16.mxu0 %v80
  %101 = vmatpush1.bf16.msra.mxu0 %v79
  %102 = vmatprep.subr.bf16.mxu0 0
  %103 = vmatpush1.bf16.msra.mxu0 0
  %104 = vmatprep.subr.bf16.mxu0 0
  %105 = vmatpush1.bf16.msra.mxu0 0
  %106 = vmatprep.subr.bf16.mxu0 0
  %107 = vmatpush1.bf16.msra.mxu0 0
  %108 = vmatprep.subr.bf16.mxu0 0
  %109 = vmatpush1.bf16.msra.mxu0 0
  %110 = vmatprep.subr.bf16.mxu0 0
  %111 = vmatpush1.bf16.msra.mxu0 0
  %112 = vmatprep.subr.bf16.mxu0 0
  %113 = vmatpush1.bf16.msra.mxu0 0
  %114 = vmatprep.subr.bf16.mxu0 0
  %115 = vmatpush1.bf16.msra.mxu0 0
  %116 = vmatprep.subr.bf16.mxu0 0
  %117 = vmatpush1.bf16.msra.mxu0 0
  %118 = vmatprep.subr.bf16.mxu0 0
  %119 = vmatpush1.bf16.msra.mxu0 0
  %120 = vmatprep.subr.bf16.mxu0 0
  %121 = vmatpush1.bf16.msra.mxu0 0
  %122 = vmatprep.subr.bf16.mxu0 0
  %123 = vmatpush1.bf16.msra.mxu0 0
  %124 = vmatprep.subr.bf16.mxu0 0
  %125 = vmatpush1.bf16.msra.mxu0 0
  %126 = vmatprep.subr.bf16.mxu0 0
  %127 = vmatpush1.bf16.msra.mxu0 0
  %128 = vmatprep.subr.bf16.mxu0 0
  %129 = vmatpush1.bf16.msra.mxu0 0
  %130 = vmatprep.mubr.bf16.mxu0 0
  %131 = vmatmul.mubr.bf16.gmra.mrb[0].mxu0 %v87
  %v132 = vpop.f32.mrb[0].mxu0
  %v133 = vadd.f32 0.0, %v132
  %v134 = vpop.f32.mrb[0].mxu0
  %v135 = vadd.f32 0.0, %v134
  %v136 = vpop.f32.mrb[0].mxu0
  %v137 = vadd.f32 0.0, %v136
  %v138 = vpop.f32.mrb[0].mxu0
  %v139 = vadd.f32 0.0, %v138
  %140 = vmatprep.mubr.bf16.mxu0 0
  %141 = vmatmul.mubr.bf16.gmra.mrb[0].mxu0 %v90
  %v142 = vpop.f32.mrb[0].mxu0
  %v143 = vadd.f32 0.0, %v142
  %v144 = vpop.f32.mrb[0].mxu0
  %v145 = vadd.f32 0.0, %v144
  %v146 = vpop.f32.mrb[0].mxu0
  %v147 = vadd.f32 0.0, %v146
  %v148 = vpop.f32.mrb[0].mxu0
  %v149 = vadd.f32 0.0, %v148
  %150 = vmatprep.mubr.bf16.mxu0 0
  %151 = vmatmul.mubr.bf16.gmra.mrb[0].mxu0 %v93
  %v152 = vpop.f32.mrb[0].mxu0
  %v153 = vadd.f32 0.0, %v152
  %v154 = vpop.f32.mrb[0].mxu0
  %v155 = vadd.f32 0.0, %v154
  %v156 = vpop.f32.mrb[0].mxu0
  %v157 = vadd.f32 0.0, %v156
  %v158 = vpop.f32.mrb[0].mxu0
  %v159 = vadd.f32 0.0, %v158
  %160 = vmatprep.mubr.bf16.mxu0 0
  %161 = vmatmul.mubr.bf16.gmra.mrb[0].mxu0 %v96
  %v162 = vpop.f32.mrb[0].mxu0
  %v163 = vadd.f32 0.0, %v162
  %v164 = vpop.f32.mrb[0].mxu0
  %v165 = vadd.f32 0.0, %v164
  %v166 = vpop.f32.mrb[0].mxu0
  %v167 = vadd.f32 0.0, %v166
  %v168 = vpop.f32.mrb[0].mxu0
  %v169 = vadd.f32 0.0, %v168
  %170 = vdwg.mxu0
  %v179 = vunpack.c.l.b16 %v21
  %v180 = vunpack.c.l.b16 %v22
  %v181 = vunpack.c.l.b16 %v23
  %v182 = vunpack.c.l.b16 %v24
  %v183 = vunpack.c.l.b16 %v25
  %v184 = vunpack.c.l.b16 %v26
  %v185 = vunpack.c.l.b16 %v27
  %v186 = vunpack.c.l.b16 %v28
  %v187 = vpack.c.b16 %v180, %v179
  %v188 = vpack.c.b16 %v182, %v181
  %v189 = vpack.c.b16 %v184, %v183
  %v190 = vpack.c.b16 %v186, %v185
  %v195 = vunpack.c.l.b16 %v29
  %v196 = vunpack.c.h.b16 %v29
  %v197 = vunpack.c.l.b16 %v30
  %v198 = vunpack.c.h.b16 %v30
  %v199 = vunpack.c.l.b16 %v31
  %v200 = vunpack.c.h.b16 %v31
  %v201 = vunpack.c.l.b16 %v32
  %v202 = vunpack.c.h.b16 %v32
  %v203 = vpack.c.b16 %v197, %v195
  %v204 = vpack.c.b16 %v198, %v196
  %v205 = vpack.c.b16 %v201, %v199
  %v206 = vpack.c.b16 %v202, %v200
  %v212 = vsel %vm85, %v187, 0
  %v215 = vsel %vm85, %v188, 0
  %v218 = vsel %vm85, %v189, 0
  %v221 = vsel %vm85, %v190, 0
  %223 = vmatprep.subr.bf16.mxu0 %v204
  %224 = vmatpush1.bf16.msra.mxu0 %v203
  %225 = vmatprep.subr.bf16.mxu0 %v206
  %226 = vmatpush1.bf16.msra.mxu0 %v205
  %227 = vmatprep.subr.bf16.mxu0 0
  %228 = vmatpush1.bf16.msra.mxu0 0
  %229 = vmatprep.subr.bf16.mxu0 0
  %230 = vmatpush1.bf16.msra.mxu0 0
  %231 = vmatprep.subr.bf16.mxu0 0
  %232 = vmatpush1.bf16.msra.mxu0 0
  %233 = vmatprep.subr.bf16.mxu0 0
  %234 = vmatpush1.bf16.msra.mxu0 0
  %235 = vmatprep.subr.bf16.mxu0 0
  %236 = vmatpush1.bf16.msra.mxu0 0
  %237 = vmatprep.subr.bf16.mxu0 0
  %238 = vmatpush1.bf16.msra.mxu0 0
  %239 = vmatprep.subr.bf16.mxu0 0
  %240 = vmatpush1.bf16.msra.mxu0 0
  %241 = vmatprep.subr.bf16.mxu0 0
  %242 = vmatpush1.bf16.msra.mxu0 0
  %243 = vmatprep.subr.bf16.mxu0 0
  %244 = vmatpush1.bf16.msra.mxu0 0
  %245 = vmatprep.subr.bf16.mxu0 0
  %246 = vmatpush1.bf16.msra.mxu0 0
  %247 = vmatprep.subr.bf16.mxu0 0
  %248 = vmatpush1.bf16.msra.mxu0 0
  %249 = vmatprep.subr.bf16.mxu0 0
  %250 = vmatpush1.bf16.msra.mxu0 0
  %251 = vmatprep.subr.bf16.mxu0 0
  %252 = vmatpush1.bf16.msra.mxu0 0
  %253 = vmatprep.subr.bf16.mxu0 0
  %254 = vmatpush1.bf16.msra.mxu0 0
  %255 = vmatprep.mubr.bf16.mxu0 0
  %256 = vmatmul.mubr.bf16.gmra.mrb[0].mxu0 %v212
  %v257 = vpop.f32.mrb[0].mxu0
  %v258 = vadd.f32 %v133, %v257
  %v259 = vpop.f32.mrb[0].mxu0
  %v260 = vadd.f32 %v135, %v259
  %v261 = vpop.f32.mrb[0].mxu0
  %v262 = vadd.f32 %v137, %v261
  %v263 = vpop.f32.mrb[0].mxu0
  %v264 = vadd.f32 %v139, %v263
  %265 = vmatprep.mubr.bf16.mxu0 0
  %266 = vmatmul.mubr.bf16.gmra.mrb[0].mxu0 %v215
  %v267 = vpop.f32.mrb[0].mxu0
  %v268 = vadd.f32 %v143, %v267
  %v269 = vpop.f32.mrb[0].mxu0
  %v270 = vadd.f32 %v145, %v269
  %v271 = vpop.f32.mrb[0].mxu0
  %v272 = vadd.f32 %v147, %v271
  %v273 = vpop.f32.mrb[0].mxu0
  %v274 = vadd.f32 %v149, %v273
  %275 = vmatprep.mubr.bf16.mxu0 0
  %276 = vmatmul.mubr.bf16.gmra.mrb[0].mxu0 %v218
  %v277 = vpop.f32.mrb[0].mxu0
  %v278 = vadd.f32 %v153, %v277
  %v279 = vpop.f32.mrb[0].mxu0
  %v280 = vadd.f32 %v155, %v279
  %v281 = vpop.f32.mrb[0].mxu0
  %v282 = vadd.f32 %v157, %v281
  %v283 = vpop.f32.mrb[0].mxu0
  %v284 = vadd.f32 %v159, %v283
  %285 = vmatprep.mubr.bf16.mxu0 0
  %286 = vmatmul.mubr.bf16.gmra.mrb[0].mxu0 %v221
  %v287 = vpop.f32.mrb[0].mxu0
  %v288 = vadd.f32 %v163, %v287
  %v289 = vpop.f32.mrb[0].mxu0
  %v290 = vadd.f32 %v165, %v289
  %v291 = vpop.f32.mrb[0].mxu0
  %v292 = vadd.f32 %v167, %v291
  %v293 = vpop.f32.mrb[0].mxu0
  %v294 = vadd.f32 %v169, %v293
  %295 = vdwg.mxu0
  %v296 = vld [vmem:[%s4] sm:$0x3]
  %v298 = vlaneseq
  %v299 = vshrl.u32 %v298, 7
  %v300 = vsub.s32 0, %v299
  %v301 = vrot.slane %v296, %v300
  %v302 = vlaneseq
  %v303 = vshrl.u32 %v302, 7
  %v304 = vsub.s32 1, %v303
  %v305 = vrot.slane %v296, %v304
  %v308 = vadd.f32 %v258, %v301
  %v309 = vadd.f32 %v260, %v305
  %v310 = vadd.f32 %v262, %v301
  %v311 = vadd.f32 %v264, %v305
  %v312 = vadd.f32 %v268, %v301
  %v313 = vadd.f32 %v270, %v305
  %v314 = vadd.f32 %v272, %v301
  %v315 = vadd.f32 %v274, %v305
  %v316 = vadd.f32 %v278, %v301
  %v317 = vadd.f32 %v280, %v305
  %v318 = vadd.f32 %v282, %v301
  %v319 = vadd.f32 %v284, %v305
  %v320 = vadd.f32 %v288, %v301
  %v321 = vadd.f32 %v290, %v305
  %v322 = vadd.f32 %v292, %v301
  %v323 = vadd.f32 %v294, %v305
  %v324 = vpack.c.bf16 %v310, %v308
  %v325 = vpack.c.bf16 %v311, %v309
  %v326 = vpack.c.bf16 %v314, %v312
  %v327 = vpack.c.bf16 %v315, %v313
  %v328 = vpack.c.bf16 %v318, %v316
  %v329 = vpack.c.bf16 %v319, %v317
  %v330 = vpack.c.bf16 %v322, %v320
  %v331 = vpack.c.bf16 %v323, %v321
  %v340 = vunpack.c.l.b16 %v324
  %v341 = vunpack.c.l.b16 %v325
  %v342 = vunpack.c.h.b16 %v324
  %v343 = vunpack.c.h.b16 %v325
  %v344 = vunpack.c.l.b16 %v326
  %v345 = vunpack.c.l.b16 %v327
  %v346 = vunpack.c.h.b16 %v326
  %v347 = vunpack.c.h.b16 %v327
  %v348 = vunpack.c.l.b16 %v328
  %v349 = vunpack.c.l.b16 %v329
  %v350 = vunpack.c.h.b16 %v328
  %v351 = vunpack.c.h.b16 %v329
  %v352 = vunpack.c.l.b16 %v330
  %v353 = vunpack.c.l.b16 %v331
  %v354 = vunpack.c.h.b16 %v330
  %v355 = vunpack.c.h.b16 %v331
  %v356 = vpack.c.b16 %v341, %v340
  %v357 = vpack.c.b16 %v343, %v342
  %v358 = vpack.c.b16 %v345, %v344
  %v359 = vpack.c.b16 %v347, %v346
  %v360 = vpack.c.b16 %v349, %v348
  %v361 = vpack.c.b16 %v351, %v350
  %v362 = vpack.c.b16 %v353, %v352
  %v363 = vpack.c.b16 %v355, %v354
  %372 = vst [vmem:[%s5] sm:$0xff] %v356
  %373 = vst [vmem:[%s5 + $0x8] sm:$0xff] %v357
  %374 = vst [vmem:[%s5 + $0x10] sm:$0xff] %v358
  %375 = vst [vmem:[%s5 + $0x18] sm:$0xff] %v359
  %376 = vst [vmem:[%s5 + $0x20] sm:$0xff] %v360
  %377 = vst [vmem:[%s5 + $0x28] sm:$0xff] %v361
  %378 = vst [vmem:[%s5 + $0x30] sm:$0xff] %v362
  %379 = vst [vmem:[%s5 + $0x38] sm:$0xff] %v363
  // Predicated region
  $region22: #{blstm_forward.7} parent=0 // pred_check
    _
  $region23: #{blstm_forward.7} parent=0 // pred_check_branch
    %381 = sbr.rel (0) target = $region25
  $region24: #{blstm_forward.7} parent=0 // pred_region
    _
  $region25: #{blstm_forward.7} parent=0 // pred_fallthru
    _
  // Predicated region
  $region26: #{blstm_forward.7} parent=0 // pred_check
    _
  $region27: #{blstm_forward.7} parent=0 // pred_check_branch
    %383 = sbr.rel (0) target = $region29
  $region28: #{blstm_forward.7} parent=0 // pred_region
    _
  $region29: #{blstm_forward.7} parent=0 // pred_fallthru
    _

// kernel: blstm_forward.5
$region0: #{blstm_forward.5}
  #allocation0 [shape = 'u32[]', space=smem, size = 0x4, offset = 0x4, fixed_abs, tag = 'smem constant byte address 0x4 - core index']
  #allocation1 [shape = 'u32[144,128]{1,0:T(1,128)}', space=vmem, size = 0x12000, scoped, tag = 'internal scratch']
  %s0 = inlined_call_operand.vmem [shape: bf16[64,4], index: 0, kind: input, shape index: {}]
  %s1 = inlined_call_operand.vmem [shape: bf16[4,256], index: 1, kind: input, shape index: {}]
  %s2 = inlined_call_operand.vmem [shape: f32[1,256], index: 2, kind: input, shape index: {}]
  %s3 = inlined_call_operand.vmem [shape: bf16[64,256], index: 3, kind: output, shape index: {}]
  %s4 = sld [smem:[#allocation0]]
  $region22: #{blstm_forward.5} parent=0
    _
  %s6 = ssub.s32 1, %s4
  %s7 = scalar_select 0, %s6, %s4
  // Predicated region
  $region2: #{blstm_forward.5} parent=0 // pred_check
    _
  $region3: #{blstm_forward.5} parent=0 // pred_check_branch
    %9 = sbr.rel (0) target = $region5
  $region4: #{blstm_forward.5} parent=0 // pred_region
    _
  $region5: #{blstm_forward.5} parent=0 // pred_fallthru
    _
  // Predicated region
  $region6: #{blstm_forward.5} parent=0 // pred_check
    _
  $region7: #{blstm_forward.5} parent=0 // pred_check_branch
    %11 = sbr.rel (0) target = $region9
  $region8: #{blstm_forward.5} parent=0 // pred_region
    _
  $region9: #{blstm_forward.5} parent=0 // pred_fallthru
    _
  // Predicated region
  $region10: #{blstm_forward.5} parent=0 // pred_check
    _
  $region11: #{blstm_forward.5} parent=0 // pred_check_branch
    %13 = sbr.rel (0) target = $region13
  $region12: #{blstm_forward.5} parent=0 // pred_region
    _
  $region13: #{blstm_forward.5} parent=0 // pred_fallthru
    _
  %v15 = vld [vmem:[%s0] sm:$0xf]
  %v16 = vld [vmem:[%s0 + $0x4] sm:$0xf]
  %v17 = vld [vmem:[%s0 + $0x8] sm:$0xf]
  %v18 = vld [vmem:[%s0 + $0xc] sm:$0xf]
  %v19 = vld [vmem:[%s0 + $0x10] sm:$0xf]
  %v20 = vld [vmem:[%s0 + $0x14] sm:$0xf]
  %v21 = vld [vmem:[%s0 + $0x18] sm:$0xf]
  %v22 = vld [vmem:[%s0 + $0x1c] sm:$0xf]
  %v23 = vld [vmem:[%s1] sm:$0xf]
  %v24 = vld [vmem:[%s2] sm:$0x3]
  %v26 = vlaneseq
  %v27 = vshrl.u32 %v26, 7
  %v28 = vsub.s32 0, %v27
  %v29 = vrot.slane %v24, %v28
  %v30 = vlaneseq
  %v31 = vshrl.u32 %v30, 7
  %v32 = vsub.s32 1, %v31
  %v33 = vrot.slane %v24, %v32
  %v44 = vunpack.c.l.b16 %v15
  %v45 = vunpack.c.l.b16 %v16
  %v46 = vunpack.c.l.b16 %v17
  %v47 = vunpack.c.l.b16 %v18
  %v48 = vunpack.c.l.b16 %v19
  %v49 = vunpack.c.l.b16 %v20
  %v50 = vunpack.c.l.b16 %v21
  %v51 = vunpack.c.l.b16 %v22
  %v52 = vpack.c.b16 %v45, %v44
  %v53 = vpack.c.b16 %v47, %v46
  %v54 = vpack.c.b16 %v49, %v48
  %v55 = vpack.c.b16 %v51, %v50
  %v58 = vunpack.c.l.s4 1983009808
  %v59 = vunpack.c.0.s8 %v58
  %v60 = vlaneseq
  %v61 = vshrl.u32 %v60, 7
  %v62 = vsub.s32 %v59, %v61
  %v63 = vrot.slane %v23, %v62
  %v64 = vcombine.high %v63, %v63
  %vm65 = vcmask 31744
  %v67 = vsel %vm65, %v52, 0
  %v70 = vsel %vm65, %v53, 0
  %v73 = vsel %vm65, %v54, 0
  %v76 = vsel %vm65, %v55, 0
  %vm78 = vcmask 1041408
  %v80 = vsel %vm78, %v63, 0
  %v83 = vsel %vm78, %v64, 0
  %85 = vmatprep.subr.bf16.mxu0 %v83
  %86 = vmatpush1.bf16.msra.mxu0 %v80
  %87 = vmatprep.subr.bf16.mxu0 0
  %88 = vmatpush1.bf16.msra.mxu0 0
  %89 = vmatprep.subr.bf16.mxu0 0
  %90 = vmatpush1.bf16.msra.mxu0 0
  %91 = vmatprep.subr.bf16.mxu0 0
  %92 = vmatpush1.bf16.msra.mxu0 0
  %93 = vmatprep.subr.bf16.mxu0 0
  %94 = vmatpush1.bf16.msra.mxu0 0
  %95 = vmatprep.subr.bf16.mxu0 0
  %96 = vmatpush1.bf16.msra.mxu0 0
  %97 = vmatprep.subr.bf16.mxu0 0
  %98 = vmatpush1.bf16.msra.mxu0 0
  %99 = vmatprep.subr.bf16.mxu0 0
  %100 = vmatpush1.bf16.msra.mxu0 0
  %101 = vmatprep.subr.bf16.mxu0 0
  %102 = vmatpush1.bf16.msra.mxu0 0
  %103 = vmatprep.subr.bf16.mxu0 0
  %104 = vmatpush1.bf16.msra.mxu0 0
  %105 = vmatprep.subr.bf16.mxu0 0
  %106 = vmatpush1.bf16.msra.mxu0 0
  %107 = vmatprep.subr.bf16.mxu0 0
  %108 = vmatpush1.bf16.msra.mxu0 0
  %109 = vmatprep.subr.bf16.mxu0 0
  %110 = vmatpush1.bf16.msra.mxu0 0
  %111 = vmatprep.subr.bf16.mxu0 0
  %112 = vmatpush1.bf16.msra.mxu0 0
  %113 = vmatprep.subr.bf16.mxu0 0
  %114 = vmatpush1.bf16.msra.mxu0 0
  %115 = vmatprep.subr.bf16.mxu0 0
  %116 = vmatpush1.bf16.msra.mxu0 0
  %117 = vmatprep.mubr.bf16.mxu0 0
  %118 = vmatmul.mubr.bf16.gmra.mrb[0].mxu0 %v67
  %v119 = vpop.f32.mrb[0].mxu0
  %v120 = vadd.f32 %v29, %v119
  %v121 = vpop.f32.mrb[0].mxu0
  %v122 = vadd.f32 %v33, %v121
  %v123 = vpop.f32.mrb[0].mxu0
  %v124 = vadd.f32 %v29, %v123
  %v125 = vpop.f32.mrb[0].mxu0
  %v126 = vadd.f32 %v33, %v125
  %127 = vmatprep.mubr.bf16.mxu0 0
  %128 = vmatmul.mubr.bf16.gmra.mrb[0].mxu0 %v70
  %v129 = vpop.f32.mrb[0].mxu0
  %v130 = vadd.f32 %v29, %v129
  %v131 = vpop.f32.mrb[0].mxu0
  %v132 = vadd.f32 %v33, %v131
  %v133 = vpop.f32.mrb[0].mxu0
  %v134 = vadd.f32 %v29, %v133
  %v135 = vpop.f32.mrb[0].mxu0
  %v136 = vadd.f32 %v33, %v135
  %137 = vmatprep.mubr.bf16.mxu0 0
  %138 = vmatmul.mubr.bf16.gmra.mrb[0].mxu0 %v73
  %v139 = vpop.f32.mrb[0].mxu0
  %v140 = vadd.f32 %v29, %v139
  %v141 = vpop.f32.mrb[0].mxu0
  %v142 = vadd.f32 %v33, %v141
  %v143 = vpop.f32.mrb[0].mxu0
  %v144 = vadd.f32 %v29, %v143
  %v145 = vpop.f32.mrb[0].mxu0
  %v146 = vadd.f32 %v33, %v145
  %147 = vmatprep.mubr.bf16.mxu0 0
  %148 = vmatmul.mubr.bf16.gmra.mrb[0].mxu0 %v76
  %v149 = vpop.f32.mrb[0].mxu0
  %v150 = vadd.f32 %v29, %v149
  %v151 = vpop.f32.mrb[0].mxu0
  %v152 = vadd.f32 %v33, %v151
  %v153 = vpop.f32.mrb[0].mxu0
  %v154 = vadd.f32 %v29, %v153
  %v155 = vpop.f32.mrb[0].mxu0
  %v156 = vadd.f32 %v33, %v155
  %157 = vdwg.mxu0
  %v158 = vpack.c.bf16 %v124, %v120
  %v159 = vpack.c.bf16 %v126, %v122
  %v160 = vpack.c.bf16 %v134, %v130
  %v161 = vpack.c.bf16 %v136, %v132
  %v162 = vpack.c.bf16 %v144, %v140
  %v163 = vpack.c.bf16 %v146, %v142
  %v164 = vpack.c.bf16 %v154, %v150
  %v165 = vpack.c.bf16 %v156, %v152
  %v174 = vunpack.c.l.b16 %v158
  %v175 = vunpack.c.l.b16 %v159
  %v176 = vunpack.c.h.b16 %v158
  %v177 = vunpack.c.h.b16 %v159
  %v178 = vunpack.c.l.b16 %v160
  %v179 = vunpack.c.l.b16 %v161
  %v180 = vunpack.c.h.b16 %v160
  %v181 = vunpack.c.h.b16 %v161
  %v182 = vunpack.c.l.b16 %v162
  %v183 = vunpack.c.l.b16 %v163
  %v184 = vunpack.c.h.b16 %v162
  %v185 = vunpack.c.h.b16 %v163
  %v186 = vunpack.c.l.b16 %v164
  %v187 = vunpack.c.l.b16 %v165
  %v188 = vunpack.c.h.b16 %v164
  %v189 = vunpack.c.h.b16 %v165
  %v190 = vpack.c.b16 %v175, %v174
  %v191 = vpack.c.b16 %v177, %v176
  %v192 = vpack.c.b16 %v179, %v178
  %v193 = vpack.c.b16 %v181, %v180
  %v194 = vpack.c.b16 %v183, %v182
  %v195 = vpack.c.b16 %v185, %v184
  %v196 = vpack.c.b16 %v187, %v186
  %v197 = vpack.c.b16 %v189, %v188
  %206 = vst [vmem:[%s3] sm:$0xff] %v190
  %207 = vst [vmem:[%s3 + $0x8] sm:$0xff] %v191
  %208 = vst [vmem:[%s3 + $0x10] sm:$0xff] %v192
  %209 = vst [vmem:[%s3 + $0x18] sm:$0xff] %v193
  %210 = vst [vmem:[%s3 + $0x20] sm:$0xff] %v194
  %211 = vst [vmem:[%s3 + $0x28] sm:$0xff] %v195
  %212 = vst [vmem:[%s3 + $0x30] sm:$0xff] %v196
  %213 = vst [vmem:[%s3 + $0x38] sm:$0xff] %v197
  // Predicated region
  $region14: #{blstm_forward.5} parent=0 // pred_check
    _
  $region15: #{blstm_forward.5} parent=0 // pred_check_branch
    %215 = sbr.rel (0) target = $region17
  $region16: #{blstm_forward.5} parent=0 // pred_region
    _
  $region17: #{blstm_forward.5} parent=0 // pred_fallthru
    _
  // Predicated region
  $region18: #{blstm_forward.5} parent=0 // pred_check
    _
  $region19: #{blstm_forward.5} parent=0 // pred_check_branch
    %217 = sbr.rel (0) target = $region21
  $region20: #{blstm_forward.5} parent=0 // pred_region
    _
  $region21: #{blstm_forward.5} parent=0 // pred_fallthru
    _

// kernel: blstm_forward.6
$region0: #{blstm_forward.6}
  #allocation0 [shape = 'u32[]', space=smem, size = 0x4, offset = 0x4, fixed_abs, tag = 'smem constant byte address 0x4 - core index']
  #allocation1 [shape = 'u32[144,128]{1,0:T(1,128)}', space=vmem, size = 0x12000, scoped, tag = 'internal scratch']
  #allocation2 [shape = 'f32[16,32]{1,0:T(8,128)}', space=vmem, size = 0x2000, scoped, tag = 'scratch operand']
  #allocation3 [shape = 'f32[16,32]{1,0:T(8,128)}', space=vmem, size = 0x2000, scoped, tag = 'scratch operand']
  %s0 = inlined_call_operand.vmem [shape: bf16[8,8,256], index: 0, kind: input, shape index: {}, may-alias: {0,1}]
  %s1 = inlined_call_operand.vmem [shape: bf16[8,8,256], index: 1, kind: input, shape index: {}, may-alias: {0,1}]
  %s2 = inlined_call_operand.vmem [shape: bf16[32,256], index: 2, kind: input, shape index: {}]
  %s3 = inlined_call_operand.vmem [shape: bf16[8,8,32], index: 3, kind: output, shape index: {0}]
  %s4 = inlined_call_operand.vmem [shape: bf16[8,8,32], index: 4, kind: output, shape index: {1}]
  %5 = xla_tuple %s3, %s4
  %s6 = sld [smem:[#allocation0]]
  $region116: #{blstm_forward.6} parent=0
    _
  %s8 = ssub.s32 1, %s6
  %s9 = scalar_select 0, %s8, %s6
  $region1: #{blstm_forward.6} parent=0
    #allocation4 [shape = 'u8[16384]{0}', space=vmem, size = 0x4000, scoped, tag = 'input window, operand 0, single buffered']
    #allocation5 [shape = 'u8[16384]{0}', space=vmem, size = 0x4000, scoped, tag = 'input window, operand 1, single buffered']
    // Predicated region
    $region2: #{blstm_forward.6} parent=1 // pred_check
      _
    $region3: #{blstm_forward.6} parent=1 // pred_check_branch
      %11 = sbr.rel (0) target = $region5
    $region4: #{blstm_forward.6} parent=1 // pred_region
      // Predicated region
      $region6: #{blstm_forward.6} parent=4 // pred_check
        _
      $region7: #{blstm_forward.6} parent=4 // pred_check_branch
        %13 = sbr.rel (0) target = $region9
      $region8: #{blstm_forward.6} parent=4 // pred_region
        // Predicated region
        $region10: #{blstm_forward.6} parent=8 // pred_check
          _
        $region11: #{blstm_forward.6} parent=8 // pred_check_branch
          %15 = sbr.rel target = $region13
        $region12: #{blstm_forward.6} parent=8 // pred_region
          // Predicated region
          $region25: #{blstm_forward.6} parent=12 // pred_check
            _
          $region26: #{blstm_forward.6} parent=12 // pred_check_branch
            %44 = sbr.rel (0) target = $region28
          $region27: #{blstm_forward.6} parent=12 // pred_region
            loop: start=0, step=1, limit=1
            $region29: #{blstm_forward.6} parent=27 // loop_pre_header
              _
            $region30: #{blstm_forward.6} parent=27 // loop_header
              %s46 = sphi 0, %s50
              %p47 = scmp.ge.s32.totalorder %s46, 1
              %s51 = sphi %s0, %s0
              %s52 = sphi [#allocation4], [#allocation4]
            $region31: #{blstm_forward.6} parent=27 // loop_header_branch
              %49 = sbr.rel (%p47) target = $region35
            $region32: #{blstm_forward.6} parent=27 // loop_body
              _
            $region33: #{blstm_forward.6} parent=27 // loop_footer
              %s50 = sadd.s32 1, %s46
            $region34: #{blstm_forward.6} parent=27 // loop_footer_branch
              %45 = sbr.rel target = $region30
            $region35: #{blstm_forward.6} parent=27 // loop_exit
              _
            loop: start=0, step=1, limit=1
            $region36: #{blstm_forward.6} parent=27 // loop_pre_header
              _
            $region37: #{blstm_forward.6} parent=27 // loop_header
              %s55 = sphi 0, %s59
              %p56 = scmp.ge.s32.totalorder %s55, 1
              %s60 = sphi %s0, %s0
              %s61 = sphi [#allocation4], [#allocation4]
            $region38: #{blstm_forward.6} parent=27 // loop_header_branch
              %58 = sbr.rel (%p56) target = $region42
            $region39: #{blstm_forward.6} parent=27 // loop_body
              %v62 = vld [vmem:[%s60] sm:$0xf]
              %63 = vst [vmem:[%s61] sm:$0xf] %v62
              %v64 = vld [vmem:[%s60 + $0x8] sm:$0xf]
              %65 = vst [vmem:[%s61 + $0x4] sm:$0xf] %v64
              %v66 = vld [vmem:[%s60 + $0x10] sm:$0xf]
              %67 = vst [vmem:[%s61 + $0x8] sm:$0xf] %v66
              %v68 = vld [vmem:[%s60 + $0x18] sm:$0xf]
              %69 = vst [vmem:[%s61 + $0xc] sm:$0xf] %v68
              %v70 = vld [vmem:[%s60 + $0x20] sm:$0xf]
              %71 = vst [vmem:[%s61 + $0x10] sm:$0xf] %v70
              %v72 = vld [vmem:[%s60 + $0x28] sm:$0xf]
              %73 = vst [vmem:[%s61 + $0x14] sm:$0xf] %v72
              %v74 = vld [vmem:[%s60 + $0x30] sm:$0xf]
              %75 = vst [vmem:[%s61 + $0x18] sm:$0xf] %v74
              %v76 = vld [vmem:[%s60 + $0x38] sm:$0xf]
              %77 = vst [vmem:[%s61 + $0x1c] sm:$0xf] %v76
            $region40: #{blstm_forward.6} parent=27 // loop_footer
              %s59 = sadd.s32 1, %s55
            $region41: #{blstm_forward.6} parent=27 // loop_footer_branch
              %54 = sbr.rel target = $region37
            $region42: #{blstm_forward.6} parent=27 // loop_exit
              _
          $region28: #{blstm_forward.6} parent=12 // pred_fallthru
            _
        $region13: #{blstm_forward.6} parent=8 // pred_fallthru
          _
        // Predicated region
        $region14: #{blstm_forward.6} parent=8 // pred_check
          _
        $region15: #{blstm_forward.6} parent=8 // pred_check_branch
          %17 = sbr.rel (0) target = $region17
        $region16: #{blstm_forward.6} parent=8 // pred_region
          loop: start=0, step=1, limit=1
          $region18: #{blstm_forward.6} parent=16 // loop_pre_header
            _
          $region19: #{blstm_forward.6} parent=16 // loop_header
            %s20 = sphi 0, %s24
            %p21 = scmp.ge.s32.totalorder %s20, 1
            %s25 = sphi %s0, %s0
            %s26 = sphi [#allocation4], [#allocation4]
          $region20: #{blstm_forward.6} parent=16 // loop_header_branch
            %23 = sbr.rel (%p21) target = $region24
          $region21: #{blstm_forward.6} parent=16 // loop_body
            %v27 = vld [vmem:[%s25] sm:$0xf]
            %28 = vst [vmem:[%s26] sm:$0xf] %v27
            %v29 = vld [vmem:[%s25 + $0x8] sm:$0xf]
            %30 = vst [vmem:[%s26 + $0x4] sm:$0xf] %v29
            %v31 = vld [vmem:[%s25 + $0x10] sm:$0xf]
            %32 = vst [vmem:[%s26 + $0x8] sm:$0xf] %v31
            %v33 = vld [vmem:[%s25 + $0x18] sm:$0xf]
            %34 = vst [vmem:[%s26 + $0xc] sm:$0xf] %v33
            %v35 = vld [vmem:[%s25 + $0x20] sm:$0xf]
            %36 = vst [vmem:[%s26 + $0x10] sm:$0xf] %v35
            %v37 = vld [vmem:[%s25 + $0x28] sm:$0xf]
            %38 = vst [vmem:[%s26 + $0x14] sm:$0xf] %v37
            %v39 = vld [vmem:[%s25 + $0x30] sm:$0xf]
            %40 = vst [vmem:[%s26 + $0x18] sm:$0xf] %v39
            %v41 = vld [vmem:[%s25 + $0x38] sm:$0xf]
            %42 = vst [vmem:[%s26 + $0x1c] sm:$0xf] %v41
          $region22: #{blstm_forward.6} parent=16 // loop_footer
            %s24 = sadd.s32 1, %s20
          $region23: #{blstm_forward.6} parent=16 // loop_footer_branch
            %19 = sbr.rel target = $region19
          $region24: #{blstm_forward.6} parent=16 // loop_exit
            _
        $region17: #{blstm_forward.6} parent=8 // pred_fallthru
          _
      $region9: #{blstm_forward.6} parent=4 // pred_fallthru
        _
      %78 = vnop
    $region5: #{blstm_forward.6} parent=1 // pred_fallthru
      _
    // Predicated region
    $region43: #{blstm_forward.6} parent=1 // pred_check
      _
    $region44: #{blstm_forward.6} parent=1 // pred_check_branch
      %80 = sbr.rel (0) target = $region46
    $region45: #{blstm_forward.6} parent=1 // pred_region
      %s81 = ssub.s32 0, 0
      %s82 = smul.u32 8, %s81
      %s83 = smul.addr %s82, 2
      %s84 = sadd.s32 1, %s83
      %s85 = smul.addr %s84, 4
      %s86 = scalar_lea.vmem %s1, %s85
      // Predicated region
      $region47: #{blstm_forward.6} parent=45 // pred_check
        _
      $region48: #{blstm_forward.6} parent=45 // pred_check_branch
        %88 = sbr.rel (0) target = $region50
      $region49: #{blstm_forward.6} parent=45 // pred_region
        // Predicated region
        $region51: #{blstm_forward.6} parent=49 // pred_check
          _
        $region52: #{blstm_forward.6} parent=49 // pred_check_branch
          %90 = sbr.rel target = $region54
        $region53: #{blstm_forward.6} parent=49 // pred_region
          // Predicated region
          $region66: #{blstm_forward.6} parent=53 // pred_check
            _
          $region67: #{blstm_forward.6} parent=53 // pred_check_branch
            %119 = sbr.rel (0) target = $region69
          $region68: #{blstm_forward.6} parent=53 // pred_region
            loop: start=0, step=1, limit=1
            $region70: #{blstm_forward.6} parent=68 // loop_pre_header
              _
            $region71: #{blstm_forward.6} parent=68 // loop_header
              %s121 = sphi 0, %s125
              %p122 = scmp.ge.s32.totalorder %s121, 1
              %s126 = sphi %s86, %s86
              %s127 = sphi [#allocation5], [#allocation5]
            $region72: #{blstm_forward.6} parent=68 // loop_header_branch
              %124 = sbr.rel (%p122) target = $region76
            $region73: #{blstm_forward.6} parent=68 // loop_body
              _
            $region74: #{blstm_forward.6} parent=68 // loop_footer
              %s125 = sadd.s32 1, %s121
            $region75: #{blstm_forward.6} parent=68 // loop_footer_branch
              %120 = sbr.rel target = $region71
            $region76: #{blstm_forward.6} parent=68 // loop_exit
              _
            loop: start=0, step=1, limit=1
            $region77: #{blstm_forward.6} parent=68 // loop_pre_header
              _
            $region78: #{blstm_forward.6} parent=68 // loop_header
              %s130 = sphi 0, %s134
              %p131 = scmp.ge.s32.totalorder %s130, 1
              %s135 = sphi %s86, %s86
              %s136 = sphi [#allocation5], [#allocation5]
            $region79: #{blstm_forward.6} parent=68 // loop_header_branch
              %133 = sbr.rel (%p131) target = $region83
            $region80: #{blstm_forward.6} parent=68 // loop_body
              %v137 = vld [vmem:[%s135] sm:$0xf]
              %138 = vst [vmem:[%s136] sm:$0xf] %v137
              %v139 = vld [vmem:[%s135 + $0x8] sm:$0xf]
              %140 = vst [vmem:[%s136 + $0x4] sm:$0xf] %v139
              %v141 = vld [vmem:[%s135 + $0x10] sm:$0xf]
              %142 = vst [vmem:[%s136 + $0x8] sm:$0xf] %v141
              %v143 = vld [vmem:[%s135 + $0x18] sm:$0xf]
              %144 = vst [vmem:[%s136 + $0xc] sm:$0xf] %v143
              %v145 = vld [vmem:[%s135 + $0x20] sm:$0xf]
              %146 = vst [vmem:[%s136 + $0x10] sm:$0xf] %v145
              %v147 = vld [vmem:[%s135 + $0x28] sm:$0xf]
              %148 = vst [vmem:[%s136 + $0x14] sm:$0xf] %v147
              %v149 = vld [vmem:[%s135 + $0x30] sm:$0xf]
              %150 = vst [vmem:[%s136 + $0x18] sm:$0xf] %v149
              %v151 = vld [vmem:[%s135 + $0x38] sm:$0xf]
              %152 = vst [vmem:[%s136 + $0x1c] sm:$0xf] %v151
            $region81: #{blstm_forward.6} parent=68 // loop_footer
              %s134 = sadd.s32 1, %s130
            $region82: #{blstm_forward.6} parent=68 // loop_footer_branch
              %129 = sbr.rel target = $region78
            $region83: #{blstm_forward.6} parent=68 // loop_exit
              _
          $region69: #{blstm_forward.6} parent=53 // pred_fallthru
            _
        $region54: #{blstm_forward.6} parent=49 // pred_fallthru
          _
        // Predicated region
        $region55: #{blstm_forward.6} parent=49 // pred_check
          _
        $region56: #{blstm_forward.6} parent=49 // pred_check_branch
          %92 = sbr.rel (0) target = $region58
        $region57: #{blstm_forward.6} parent=49 // pred_region
          loop: start=0, step=1, limit=1
          $region59: #{blstm_forward.6} parent=57 // loop_pre_header
            _
          $region60: #{blstm_forward.6} parent=57 // loop_header
            %s95 = sphi 0, %s99
            %p96 = scmp.ge.s32.totalorder %s95, 1
            %s100 = sphi %s86, %s86
            %s101 = sphi [#allocation5], [#allocation5]
          $region61: #{blstm_forward.6} parent=57 // loop_header_branch
            %98 = sbr.rel (%p96) target = $region65
          $region62: #{blstm_forward.6} parent=57 // loop_body
            %v102 = vld [vmem:[%s100] sm:$0xf]
            %103 = vst [vmem:[%s101] sm:$0xf] %v102
            %v104 = vld [vmem:[%s100 + $0x8] sm:$0xf]
            %105 = vst [vmem:[%s101 + $0x4] sm:$0xf] %v104
            %v106 = vld [vmem:[%s100 + $0x10] sm:$0xf]
            %107 = vst [vmem:[%s101 + $0x8] sm:$0xf] %v106
            %v108 = vld [vmem:[%s100 + $0x18] sm:$0xf]
            %109 = vst [vmem:[%s101 + $0xc] sm:$0xf] %v108
            %v110 = vld [vmem:[%s100 + $0x20] sm:$0xf]
            %111 = vst [vmem:[%s101 + $0x10] sm:$0xf] %v110
            %v112 = vld [vmem:[%s100 + $0x28] sm:$0xf]
            %113 = vst [vmem:[%s101 + $0x14] sm:$0xf] %v112
            %v114 = vld [vmem:[%s100 + $0x30] sm:$0xf]
            %115 = vst [vmem:[%s101 + $0x18] sm:$0xf] %v114
            %v116 = vld [vmem:[%s100 + $0x38] sm:$0xf]
            %117 = vst [vmem:[%s101 + $0x1c] sm:$0xf] %v116
          $region63: #{blstm_forward.6} parent=57 // loop_footer
            %s99 = sadd.s32 1, %s95
          $region64: #{blstm_forward.6} parent=57 // loop_footer_branch
            %94 = sbr.rel target = $region60
          $region65: #{blstm_forward.6} parent=57 // loop_exit
            _
        $region58: #{blstm_forward.6} parent=49 // pred_fallthru
          _
      $region50: #{blstm_forward.6} parent=45 // pred_fallthru
        _
      %153 = vnop
    $region46: #{blstm_forward.6} parent=1 // pred_fallthru
      _
    // Predicated region
    $region84: #{blstm_forward.6} parent=1 // pred_check
      _
    $region85: #{blstm_forward.6} parent=1 // pred_check_branch
      %155 = sbr.rel (0) target = $region87
    $region86: #{blstm_forward.6} parent=1 // pred_region
      _
    $region87: #{blstm_forward.6} parent=1 // pred_fallthru
      _
    // Predicated region
    $region88: #{blstm_forward.6} parent=1 // pred_check
      _
    $region89: #{blstm_forward.6} parent=1 // pred_check_branch
      %157 = sbr.rel (0) target = $region91
    $region90: #{blstm_forward.6} parent=1 // pred_region
      _
    $region91: #{blstm_forward.6} parent=1 // pred_fallthru
      _
    // Predicated region
    $region92: #{blstm_forward.6} parent=1 // pred_check
      _
    $region93: #{blstm_forward.6} parent=1 // pred_check_branch
      %159 = sbr.rel (0) target = $region95
    $region94: #{blstm_forward.6} parent=1 // pred_region
      _
    $region95: #{blstm_forward.6} parent=1 // pred_fallthru
      _
    %s160 = ssub.s32 0, 0
    %s161 = smul.u32 8, %s160
    %p162 = scmp.lt.s32.totalorder %s161, 7
    %s163 = scalar_select %p162, %s161, 7
    %s164 = smul.addr %s163, 4
    %s165 = scalar_lea.vmem %s4, %s164
    %s166 = ssub.s32 0, 0
    %s167 = smul.u32 8, %s166
    %s168 = ssub.s32 0, 0
    %s169 = smul.u32 8, %s168
    %p170 = scmp.lt.s32.totalorder %s169, 7
    %s171 = scalar_select %p170, %s169, 7
    %s172 = smul.addr %s171, 4
    %s173 = scalar_lea.vmem %s4, %s172
    %s174 = ssub.s32 0, 0
    %s175 = smul.u32 8, %s174
    %p177 = scmp.eq.s32.totalorder 0, 0
    // Predicated region
    $region96: #{blstm_forward.6} parent=1 // pred_check
      %p178 = pneg %p177
    $region97: #{blstm_forward.6} parent=1 // pred_check_branch
      %180 = sbr.rel (%p178) target = $region99
    $region98: #{blstm_forward.6} parent=1 // pred_region
      %vm181 = vcmask 261120
      %182 = vst.msk [vmem:[#allocation2] sm:$0xff] %vm181, 0.0
      %183 = vst.msk [vmem:[#allocation2 + $0x8] sm:$0xff] %vm181, 0.0
      %184 = vst.msk [vmem:[#allocation3] sm:$0xff] %vm181, 0.0
      %185 = vst.msk [vmem:[#allocation3 + $0x8] sm:$0xff] %vm181, 0.0
    $region99: #{blstm_forward.6} parent=1 // pred_fallthru
      _
    %v186 = vld [vmem:[%s2] sm:$0xff]
    %v187 = vld [vmem:[%s2 + $0x8] sm:$0xff]
    %v188 = vld [vmem:[%s2 + $0x10] sm:$0xff]
    %v189 = vld [vmem:[%s2 + $0x18] sm:$0xff]
    %v190 = vld [vmem:[#allocation2] sm:$0xff]
    %v191 = vld [vmem:[#allocation2 + $0x8] sm:$0xff]
    %v192 = vld [vmem:[#allocation3] sm:$0xff]
    %v193 = vld [vmem:[#allocation3 + $0x8] sm:$0xff]
    %v194 = vpack.c.bf16 %v191, %v190
    %v199 = vunpack.c.l.b16 %v186
    %v200 = vunpack.c.h.b16 %v186
    %v201 = vunpack.c.l.b16 %v187
    %v202 = vunpack.c.h.b16 %v187
    %v203 = vunpack.c.l.b16 %v188
    %v204 = vunpack.c.h.b16 %v188
    %v205 = vunpack.c.l.b16 %v189
    %v206 = vunpack.c.h.b16 %v189
    %v207 = vpack.c.b16 %v201, %v199
    %v208 = vpack.c.b16 %v202, %v200
    %v209 = vpack.c.b16 %v205, %v203
    %v210 = vpack.c.b16 %v206, %v204
    %vm215 = vcmask 261120
    %v217 = vsel %vm215, %v194, 0
    %219 = vmatprep.subr.bf16.mxu0 %v208
    %220 = vmatpush1.bf16.msra.mxu0 %v207
    %221 = vmatprep.subr.bf16.mxu0 %v210
    %222 = vmatpush1.bf16.msra.mxu0 %v209
    %223 = vmatprep.subr.bf16.mxu0 0
    %224 = vmatpush1.bf16.msra.mxu0 0
    %225 = vmatprep.subr.bf16.mxu0 0
    %226 = vmatpush1.bf16.msra.mxu0 0
    %227 = vmatprep.subr.bf16.mxu0 0
    %228 = vmatpush1.bf16.msra.mxu0 0
    %229 = vmatprep.subr.bf16.mxu0 0
    %230 = vmatpush1.bf16.msra.mxu0 0
    %231 = vmatprep.subr.bf16.mxu0 0
    %232 = vmatpush1.bf16.msra.mxu0 0
    %233 = vmatprep.subr.bf16.mxu0 0
    %234 = vmatpush1.bf16.msra.mxu0 0
    %235 = vmatprep.subr.bf16.mxu0 0
    %236 = vmatpush1.bf16.msra.mxu0 0
    %237 = vmatprep.subr.bf16.mxu0 0
    %238 = vmatpush1.bf16.msra.mxu0 0
    %239 = vmatprep.subr.bf16.mxu0 0
    %240 = vmatpush1.bf16.msra.mxu0 0
    %241 = vmatprep.subr.bf16.mxu0 0
    %242 = vmatpush1.bf16.msra.mxu0 0
    %243 = vmatprep.subr.bf16.mxu0 0
    %244 = vmatpush1.bf16.msra.mxu0 0
    %245 = vmatprep.subr.bf16.mxu0 0
    %246 = vmatpush1.bf16.msra.mxu0 0
    %247 = vmatprep.subr.bf16.mxu0 0
    %248 = vmatpush1.bf16.msra.mxu0 0
    %249 = vmatprep.subr.bf16.mxu0 0
    %250 = vmatpush1.bf16.msra.mxu0 0
    %251 = vmatprep.mubr.bf16.mxu0 0
    %252 = vmatmul.mubr.bf16.gmra.mrb[0].mxu0 %v217
    %v253 = vpop.f32.mrb[0].mxu0
    %v254 = vadd.f32 0.0, %v253
    %v255 = vpop.f32.mrb[0].mxu0
    %v256 = vpop.f32.mrb[0].mxu0
    %v257 = vpop.f32.mrb[0].mxu0
    %v258 = vadd.f32 0.0, %v257
    %259 = vdwg.mxu0
    %v260 = vld [vmem:[#allocation4] sm:$0xf]
    %v261 = vunpack.c.l.bf16 %v260
    %v262 = vadd.f32 %v261, %v254
    %s263 = scalar_lea.vmem [#allocation5], 28
    %v264 = vld [vmem:[%s263] sm:$0xf]
    %v265 = vunpack.c.l.bf16 %v264
    %v266 = vadd.f32 %v265, %v258
    %v267 = vxor.u32 %v262, 2147483648
    %v268 = vmul.f32 %v267, 1.442695
    %v269 = vpow.pop %v268
    %v270 = vadd.f32 %v269, 1.0
    %v271 = vrcp.pop %v270
    %v272 = vmul.f32 1.0, %v271
    %v273 = vtanh.pop %v262
    %275 = vrot.lane.b32.xlu0 %v192, 32
    %v276 = vpop.permute.xlu0 %275
    %v278 = vmul.f32 %v272, %v276
    %280 = vrot.lane.b32.xlu0 %v273, 64
    %v281 = vpop.permute.xlu0 %280
    %v283 = vmul.f32 %v272, %v281
    %285 = vrot.lane.b32.xlu0 %v283, 32
    %v286 = vpop.permute.xlu0 %285
    %v288 = vadd.f32 %v278, %v286
    %v289 = vtanh.pop %v288
    %291 = vrot.lane.b32.xlu0 %v289, 64
    %v292 = vpop.permute.xlu0 %291
    %v294 = vmul.f32 %v272, %v292
    %v295 = vxor.u32 %v266, 2147483648
    %v296 = vmul.f32 %v295, 1.442695
    %v297 = vpow.pop %v296
    %v298 = vadd.f32 %v297, 1.0
    %v299 = vrcp.pop %v298
    %v300 = vmul.f32 1.0, %v299
    %v301 = vtanh.pop %v266
    %303 = vrot.lane.b32.xlu0 %v193, 32
    %v304 = vpop.permute.xlu0 %303
    %v306 = vmul.f32 %v300, %v304
    %308 = vrot.lane.b32.xlu0 %v301, 64
    %v309 = vpop.permute.xlu0 %308
    %v311 = vmul.f32 %v300, %v309
    %313 = vrot.lane.b32.xlu0 %v311, 32
    %v314 = vpop.permute.xlu0 %313
    %v316 = vadd.f32 %v306, %v314
    %v317 = vtanh.pop %v316
    %319 = vrot.lane.b32.xlu0 %v317, 64
    %v320 = vpop.permute.xlu0 %319
    %v322 = vmul.f32 %v300, %v320
    %v323 = vpack.c.bf16 %v294, %v294
    %v325 = vunpack.c.l.b16 %v323
    %v326 = vpack.c.b16 %v325, %v325
    %327 = vrot.lane.b32.xlu0 %v326, 32
    %v328 = vpop.permute.xlu0 %327
    %vm330 = vcmask 257024
    %331 = vst.msk [vmem:[%s3] sm:$0xf] %vm330, %v328
    %v332 = vpack.c.bf16 %v322, %v322
    %v334 = vunpack.c.l.b16 %v332
    %v335 = vpack.c.b16 %v334, %v334
    %336 = vrot.lane.b32.xlu0 %v335, 32
    %v337 = vpop.permute.xlu0 %336
    %s339 = scalar_lea.vmem %s173, 28
    %340 = vst.msk [vmem:[%s339] sm:$0xf] %vm330, %v337
    %v341 = vpack.c.bf16 %v322, %v294
    %343 = vrot.lane.b32.xlu0 %v341, 32
    %v344 = vpop.permute.xlu0 %343
    %v346 = vsel %vm215, %v344, 0
    %348 = vmatprep.subr.bf16.mxu0 %v208
    %349 = vmatpush1.bf16.msra.mxu0 %v207
    %350 = vmatprep.subr.bf16.mxu0 %v210
    %351 = vmatpush1.bf16.msra.mxu0 %v209
    %352 = vmatprep.subr.bf16.mxu0 0
    %353 = vmatpush1.bf16.msra.mxu0 0
    %354 = vmatprep.subr.bf16.mxu0 0
    %355 = vmatpush1.bf16.msra.mxu0 0
    %356 = vmatprep.subr.bf16.mxu0 0
    %357 = vmatpush1.bf16.msra.mxu0 0
    %358 = vmatprep.subr.bf16.mxu0 0
    %359 = vmatpush1.bf16.msra.mxu0 0
    %360 = vmatprep.subr.bf16.mxu0 0
    %361 = vmatpush1.bf16.msra.mxu0 0
    %362 = vmatprep.subr.bf16.mxu0 0
    %363 = vmatpush1.bf16.msra.mxu0 0
    %364 = vmatprep.subr.bf16.mxu0 0
    %365 = vmatpush1.bf16.msra.mxu0 0
    %366 = vmatprep.subr.bf16.mxu0 0
    %367 = vmatpush1.bf16.msra.mxu0 0
    %368 = vmatprep.subr.bf16.mxu0 0
    %369 = vmatpush1.bf16.msra.mxu0 0
    %370 = vmatprep.subr.bf16.mxu0 0
    %371 = vmatpush1.bf16.msra.mxu0 0
    %372 = vmatprep.subr.bf16.mxu0 0
    %373 = vmatpush1.bf16.msra.mxu0 0
    %374 = vmatprep.subr.bf16.mxu0 0
    %375 = vmatpush1.bf16.msra.mxu0 0
    %376 = vmatprep.subr.bf16.mxu0 0
    %377 = vmatpush1.bf16.msra.mxu0 0
    %378 = vmatprep.subr.bf16.mxu0 0
    %379 = vmatpush1.bf16.msra.mxu0 0
    %380 = vmatprep.mubr.bf16.mxu0 0
    %381 = vmatmul.mubr.bf16.gmra.mrb[0].mxu0 %v346
    %v382 = vpop.f32.mrb[0].mxu0
    %v383 = vadd.f32 0.0, %v382
    %v384 = vpop.f32.mrb[0].mxu0
    %v385 = vpop.f32.mrb[0].mxu0
    %v386 = vpop.f32.mrb[0].mxu0
    %v387 = vadd.f32 0.0, %v386
    %388 = vdwg.mxu0
    %s389 = scalar_lea.vmem [#allocation4], 4
    %v390 = vld [vmem:[%s389] sm:$0xf]
    %v391 = vunpack.c.l.bf16 %v390
    %v392 = vadd.f32 %v391, %v383
    %s393 = scalar_lea.vmem [#allocation5], 24
    %v394 = vld [vmem:[%s393] sm:$0xf]
    %v395 = vunpack.c.l.bf16 %v394
    %v396 = vadd.f32 %v395, %v387
    %v397 = vxor.u32 %v392, 2147483648
    %v398 = vmul.f32 %v397, 1.442695
    %v399 = vpow.pop %v398
    %v400 = vadd.f32 %v399, 1.0
    %v401 = vrcp.pop %v400
    %v402 = vmul.f32 1.0, %v401
    %v403 = vtanh.pop %v392
    %v404 = vmul.f32 %v402, %v288
    %406 = vrot.lane.b32.xlu0 %v403, 64
    %v407 = vpop.permute.xlu0 %406
    %v409 = vmul.f32 %v402, %v407
    %411 = vrot.lane.b32.xlu0 %v409, 32
    %v412 = vpop.permute.xlu0 %411
    %v414 = vadd.f32 %v404, %v412
    %v415 = vtanh.pop %v414
    %417 = vrot.lane.b32.xlu0 %v415, 64
    %v418 = vpop.permute.xlu0 %417
    %v420 = vmul.f32 %v402, %v418
    %v421 = vxor.u32 %v396, 2147483648
    %v422 = vmul.f32 %v421, 1.442695
    %v423 = vpow.pop %v422
    %v424 = vadd.f32 %v423, 1.0
    %v425 = vrcp.pop %v424
    %v426 = vmul.f32 1.0, %v425
    %v427 = vtanh.pop %v396
    %v428 = vmul.f32 %v426, %v316
    %430 = vrot.lane.b32.xlu0 %v427, 64
    %v431 = vpop.permute.xlu0 %430
    %v433 = vmul.f32 %v426, %v431
    %435 = vrot.lane.b32.xlu0 %v433, 32
    %v436 = vpop.permute.xlu0 %435
    %v438 = vadd.f32 %v428, %v436
    %v439 = vtanh.pop %v438
    %441 = vrot.lane.b32.xlu0 %v439, 64
    %v442 = vpop.permute.xlu0 %441
    %v444 = vmul.f32 %v426, %v442
    %v445 = vpack.c.bf16 %v420, %v420
    %v447 = vunpack.c.l.b16 %v445
    %v448 = vpack.c.b16 %v447, %v447
    %449 = vrot.lane.b32.xlu0 %v448, 32
    %v450 = vpop.permute.xlu0 %449
    %s452 = scalar_lea.vmem %s3, 4
    %453 = vst.msk [vmem:[%s452] sm:$0xf] %vm330, %v450
    %v454 = vpack.c.bf16 %v444, %v444
    %v456 = vunpack.c.l.b16 %v454
    %v457 = vpack.c.b16 %v456, %v456
    %458 = vrot.lane.b32.xlu0 %v457, 32
    %v459 = vpop.permute.xlu0 %458
    %s461 = scalar_lea.vmem %s173, 24
    %462 = vst.msk [vmem:[%s461] sm:$0xf] %vm330, %v459
    %v463 = vpack.c.bf16 %v444, %v420
    %465 = vrot.lane.b32.xlu0 %v463, 32
    %v466 = vpop.permute.xlu0 %465
    %v468 = vsel %vm215, %v466, 0
    %470 = vmatprep.subr.bf16.mxu0 %v208
    %471 = vmatpush1.bf16.msra.mxu0 %v207
    %472 = vmatprep.subr.bf16.mxu0 %v210
    %473 = vmatpush1.bf16.msra.mxu0 %v209
    %474 = vmatprep.subr.bf16.mxu0 0
    %475 = vmatpush1.bf16.msra.mxu0 0
    %476 = vmatprep.subr.bf16.mxu0 0
    %477 = vmatpush1.bf16.msra.mxu0 0
    %478 = vmatprep.subr.bf16.mxu0 0
    %479 = vmatpush1.bf16.msra.mxu0 0
    %480 = vmatprep.subr.bf16.mxu0 0
    %481 = vmatpush1.bf16.msra.mxu0 0
    %482 = vmatprep.subr.bf16.mxu0 0
    %483 = vmatpush1.bf16.msra.mxu0 0
    %484 = vmatprep.subr.bf16.mxu0 0
    %485 = vmatpush1.bf16.msra.mxu0 0
    %486 = vmatprep.subr.bf16.mxu0 0
    %487 = vmatpush1.bf16.msra.mxu0 0
    %488 = vmatprep.subr.bf16.mxu0 0
    %489 = vmatpush1.bf16.msra.mxu0 0
    %490 = vmatprep.subr.bf16.mxu0 0
    %491 = vmatpush1.bf16.msra.mxu0 0
    %492 = vmatprep.subr.bf16.mxu0 0
    %493 = vmatpush1.bf16.msra.mxu0 0
    %494 = vmatprep.subr.bf16.mxu0 0
    %495 = vmatpush1.bf16.msra.mxu0 0
    %496 = vmatprep.subr.bf16.mxu0 0
    %497 = vmatpush1.bf16.msra.mxu0 0
    %498 = vmatprep.subr.bf16.mxu0 0
    %499 = vmatpush1.bf16.msra.mxu0 0
    %500 = vmatprep.subr.bf16.mxu0 0
    %501 = vmatpush1.bf16.msra.mxu0 0
    %502 = vmatprep.mubr.bf16.mxu0 0
    %503 = vmatmul.mubr.bf16.gmra.mrb[0].mxu0 %v468
    %v504 = vpop.f32.mrb[0].mxu0
    %v505 = vadd.f32 0.0, %v504
    %v506 = vpop.f32.mrb[0].mxu0
    %v507 = vpop.f32.mrb[0].mxu0
    %v508 = vpop.f32.mrb[0].mxu0
    %v509 = vadd.f32 0.0, %v508
    %510 = vdwg.mxu0
    %s511 = scalar_lea.vmem [#allocation4], 8
    %v512 = vld [vmem:[%s511] sm:$0xf]
    %v513 = vunpack.c.l.bf16 %v512
    %v514 = vadd.f32 %v513, %v505
    %s515 = scalar_lea.vmem [#allocation5], 20
    %v516 = vld [vmem:[%s515] sm:$0xf]
    %v517 = vunpack.c.l.bf16 %v516
    %v518 = vadd.f32 %v517, %v509
    %v519 = vxor.u32 %v514, 2147483648
    %v520 = vmul.f32 %v519, 1.442695
    %v521 = vpow.pop %v520
    %v522 = vadd.f32 %v521, 1.0
    %v523 = vrcp.pop %v522
    %v524 = vmul.f32 1.0, %v523
    %v525 = vtanh.pop %v514
    %v526 = vmul.f32 %v524, %v414
    %528 = vrot.lane.b32.xlu0 %v525, 64
    %v529 = vpop.permute.xlu0 %528
    %v531 = vmul.f32 %v524, %v529
    %533 = vrot.lane.b32.xlu0 %v531, 32
    %v534 = vpop.permute.xlu0 %533
    %v536 = vadd.f32 %v526, %v534
    %v537 = vtanh.pop %v536
    %539 = vrot.lane.b32.xlu0 %v537, 64
    %v540 = vpop.permute.xlu0 %539
    %v542 = vmul.f32 %v524, %v540
    %v543 = vxor.u32 %v518, 2147483648
    %v544 = vmul.f32 %v543, 1.442695
    %v545 = vpow.pop %v544
    %v546 = vadd.f32 %v545, 1.0
    %v547 = vrcp.pop %v546
    %v548 = vmul.f32 1.0, %v547
    %v549 = vtanh.pop %v518
    %v550 = vmul.f32 %v548, %v438
    %552 = vrot.lane.b32.xlu0 %v549, 64
    %v553 = vpop.permute.xlu0 %552
    %v555 = vmul.f32 %v548, %v553
    %557 = vrot.lane.b32.xlu0 %v555, 32
    %v558 = vpop.permute.xlu0 %557
    %v560 = vadd.f32 %v550, %v558
    %v561 = vtanh.pop %v560
    %563 = vrot.lane.b32.xlu0 %v561, 64
    %v564 = vpop.permute.xlu0 %563
    %v566 = vmul.f32 %v548, %v564
    %v567 = vpack.c.bf16 %v542, %v542
    %v569 = vunpack.c.l.b16 %v567
    %v570 = vpack.c.b16 %v569, %v569
    %571 = vrot.lane.b32.xlu0 %v570, 32
    %v572 = vpop.permute.xlu0 %571
    %s574 = scalar_lea.vmem %s3, 8
    %575 = vst.msk [vmem:[%s574] sm:$0xf] %vm330, %v572
    %v576 = vpack.c.bf16 %v566, %v566
    %v578 = vunpack.c.l.b16 %v576
    %v579 = vpack.c.b16 %v578, %v578
    %580 = vrot.lane.b32.xlu0 %v579, 32
    %v581 = vpop.permute.xlu0 %580
    %s583 = scalar_lea.vmem %s173, 20
    %584 = vst.msk [vmem:[%s583] sm:$0xf] %vm330, %v581
    %v585 = vpack.c.bf16 %v566, %v542
    %587 = vrot.lane.b32.xlu0 %v585, 32
    %v588 = vpop.permute.xlu0 %587
    %v590 = vsel %vm215, %v588, 0
    %592 = vmatprep.subr.bf16.mxu0 %v208
    %593 = vmatpush1.bf16.msra.mxu0 %v207
    %594 = vmatprep.subr.bf16.mxu0 %v210
    %595 = vmatpush1.bf16.msra.mxu0 %v209
    %596 = vmatprep.subr.bf16.mxu0 0
    %597 = vmatpush1.bf16.msra.mxu0 0
    %598 = vmatprep.subr.bf16.mxu0 0
    %599 = vmatpush1.bf16.msra.mxu0 0
    %600 = vmatprep.subr.bf16.mxu0 0
    %601 = vmatpush1.bf16.msra.mxu0 0
    %602 = vmatprep.subr.bf16.mxu0 0
    %603 = vmatpush1.bf16.msra.mxu0 0
    %604 = vmatprep.subr.bf16.mxu0 0
    %605 = vmatpush1.bf16.msra.mxu0 0
    %606 = vmatprep.subr.bf16.mxu0 0
    %607 = vmatpush1.bf16.msra.mxu0 0
    %608 = vmatprep.subr.bf16.mxu0 0
    %609 = vmatpush1.bf16.msra.mxu0 0
    %610 = vmatprep.subr.bf16.mxu0 0
    %611 = vmatpush1.bf16.msra.mxu0 0
    %612 = vmatprep.subr.bf16.mxu0 0
    %613 = vmatpush1.bf16.msra.mxu0 0
    %614 = vmatprep.subr.bf16.mxu0 0
    %615 = vmatpush1.bf16.msra.mxu0 0
    %616 = vmatprep.subr.bf16.mxu0 0
    %617 = vmatpush1.bf16.msra.mxu0 0
    %618 = vmatprep.subr.bf16.mxu0 0
    %619 = vmatpush1.bf16.msra.mxu0 0
    %620 = vmatprep.subr.bf16.mxu0 0
    %621 = vmatpush1.bf16.msra.mxu0 0
    %622 = vmatprep.subr.bf16.mxu0 0
    %623 = vmatpush1.bf16.msra.mxu0 0
    %624 = vmatprep.mubr.bf16.mxu0 0
    %625 = vmatmul.mubr.bf16.gmra.mrb[0].mxu0 %v590
    %v626 = vpop.f32.mrb[0].mxu0
    %v627 = vadd.f32 0.0, %v626
    %v628 = vpop.f32.mrb[0].mxu0
    %v629 = vpop.f32.mrb[0].mxu0
    %v630 = vpop.f32.mrb[0].mxu0
    %v631 = vadd.f32 0.0, %v630
    %632 = vdwg.mxu0
    %s633 = scalar_lea.vmem [#allocation4], 12
    %v634 = vld [vmem:[%s633] sm:$0xf]
    %v635 = vunpack.c.l.bf16 %v634
    %v636 = vadd.f32 %v635, %v627
    %s637 = scalar_lea.vmem [#allocation5], 16
    %v638 = vld [vmem:[%s637] sm:$0xf]
    %v639 = vunpack.c.l.bf16 %v638
    %v640 = vadd.f32 %v639, %v631
    %v641 = vxor.u32 %v636, 2147483648
    %v642 = vmul.f32 %v641, 1.442695
    %v643 = vpow.pop %v642
    %v644 = vadd.f32 %v643, 1.0
    %v645 = vrcp.pop %v644
    %v646 = vmul.f32 1.0, %v645
    %v647 = vtanh.pop %v636
    %v648 = vmul.f32 %v646, %v536
    %650 = vrot.lane.b32.xlu0 %v647, 64
    %v651 = vpop.permute.xlu0 %650
    %v653 = vmul.f32 %v646, %v651
    %655 = vrot.lane.b32.xlu0 %v653, 32
    %v656 = vpop.permute.xlu0 %655
    %v658 = vadd.f32 %v648, %v656
    %v659 = vtanh.pop %v658
    %661 = vrot.lane.b32.xlu0 %v659, 64
    %v662 = vpop.permute.xlu0 %661
    %v664 = vmul.f32 %v646, %v662
    %v665 = vxor.u32 %v640, 2147483648
    %v666 = vmul.f32 %v665, 1.442695
    %v667 = vpow.pop %v666
    %v668 = vadd.f32 %v667, 1.0
    %v669 = vrcp.pop %v668
    %v670 = vmul.f32 1.0, %v669
    %v671 = vtanh.pop %v640
    %v672 = vmul.f32 %v670, %v560
    %674 = vrot.lane.b32.xlu0 %v671, 64
    %v675 = vpop.permute.xlu0 %674
    %v677 = vmul.f32 %v670, %v675
    %679 = vrot.lane.b32.xlu0 %v677, 32
    %v680 = vpop.permute.xlu0 %679
    %v682 = vadd.f32 %v672, %v680
    %v683 = vtanh.pop %v682
    %685 = vrot.lane.b32.xlu0 %v683, 64
    %v686 = vpop.permute.xlu0 %685
    %v688 = vmul.f32 %v670, %v686
    %v689 = vpack.c.bf16 %v664, %v664
    %v691 = vunpack.c.l.b16 %v689
    %v692 = vpack.c.b16 %v691, %v691
    %693 = vrot.lane.b32.xlu0 %v692, 32
    %v694 = vpop.permute.xlu0 %693
    %s696 = scalar_lea.vmem %s3, 12
    %697 = vst.msk [vmem:[%s696] sm:$0xf] %vm330, %v694
    %v698 = vpack.c.bf16 %v688, %v688
    %v700 = vunpack.c.l.b16 %v698
    %v701 = vpack.c.b16 %v700, %v700
    %702 = vrot.lane.b32.xlu0 %v701, 32
    %v703 = vpop.permute.xlu0 %702
    %s705 = scalar_lea.vmem %s173, 16
    %706 = vst.msk [vmem:[%s705] sm:$0xf] %vm330, %v703
    %v707 = vpack.c.bf16 %v688, %v664
    %709 = vrot.lane.b32.xlu0 %v707, 32
    %v710 = vpop.permute.xlu0 %709
    %v712 = vsel %vm215, %v710, 0
    %714 = vmatprep.subr.bf16.mxu0 %v208
    %715 = vmatpush1.bf16.msra.mxu0 %v207
    %716 = vmatprep.subr.bf16.mxu0 %v210
    %717 = vmatpush1.bf16.msra.mxu0 %v209
    %718 = vmatprep.subr.bf16.mxu0 0
    %719 = vmatpush1.bf16.msra.mxu0 0
    %720 = vmatprep.subr.bf16.mxu0 0
    %721 = vmatpush1.bf16.msra.mxu0 0
    %722 = vmatprep.subr.bf16.mxu0 0
    %723 = vmatpush1.bf16.msra.mxu0 0
    %724 = vmatprep.subr.bf16.mxu0 0
    %725 = vmatpush1.bf16.msra.mxu0 0
    %726 = vmatprep.subr.bf16.mxu0 0
    %727 = vmatpush1.bf16.msra.mxu0 0
    %728 = vmatprep.subr.bf16.mxu0 0
    %729 = vmatpush1.bf16.msra.mxu0 0
    %730 = vmatprep.subr.bf16.mxu0 0
    %731 = vmatpush1.bf16.msra.mxu0 0
    %732 = vmatprep.subr.bf16.mxu0 0
    %733 = vmatpush1.bf16.msra.mxu0 0
    %734 = vmatprep.subr.bf16.mxu0 0
    %735 = vmatpush1.bf16.msra.mxu0 0
    %736 = vmatprep.subr.bf16.mxu0 0
    %737 = vmatpush1.bf16.msra.mxu0 0
    %738 = vmatprep.subr.bf16.mxu0 0
    %739 = vmatpush1.bf16.msra.mxu0 0
    %740 = vmatprep.subr.bf16.mxu0 0
    %741 = vmatpush1.bf16.msra.mxu0 0
    %742 = vmatprep.subr.bf16.mxu0 0
    %743 = vmatpush1.bf16.msra.mxu0 0
    %744 = vmatprep.subr.bf16.mxu0 0
    %745 = vmatpush1.bf16.msra.mxu0 0
    %746 = vmatprep.mubr.bf16.mxu0 0
    %747 = vmatmul.mubr.bf16.gmra.mrb[0].mxu0 %v712
    %v748 = vpop.f32.mrb[0].mxu0
    %v749 = vadd.f32 0.0, %v748
    %v750 = vpop.f32.mrb[0].mxu0
    %v751 = vpop.f32.mrb[0].mxu0
    %v752 = vpop.f32.mrb[0].mxu0
    %v753 = vadd.f32 0.0, %v752
    %754 = vdwg.mxu0
    %s755 = scalar_lea.vmem [#allocation4], 16
    %v756 = vld [vmem:[%s755] sm:$0xf]
    %v757 = vunpack.c.l.bf16 %v756
    %v758 = vadd.f32 %v757, %v749
    %s759 = scalar_lea.vmem [#allocation5], 12
    %v760 = vld [vmem:[%s759] sm:$0xf]
    %v761 = vunpack.c.l.bf16 %v760
    %v762 = vadd.f32 %v761, %v753
    %v763 = vxor.u32 %v758, 2147483648
    %v764 = vmul.f32 %v763, 1.442695
    %v765 = vpow.pop %v764
    %v766 = vadd.f32 %v765, 1.0
    %v767 = vrcp.pop %v766
    %v768 = vmul.f32 1.0, %v767
    %v769 = vtanh.pop %v758
    %v770 = vmul.f32 %v768, %v658
    %772 = vrot.lane.b32.xlu0 %v769, 64
    %v773 = vpop.permute.xlu0 %772
    %v775 = vmul.f32 %v768, %v773
    %777 = vrot.lane.b32.xlu0 %v775, 32
    %v778 = vpop.permute.xlu0 %777
    %v780 = vadd.f32 %v770, %v778
    %v781 = vtanh.pop %v780
    %783 = vrot.lane.b32.xlu0 %v781, 64
    %v784 = vpop.permute.xlu0 %783
    %v786 = vmul.f32 %v768, %v784
    %v787 = vxor.u32 %v762, 2147483648
    %v788 = vmul.f32 %v787, 1.442695
    %v789 = vpow.pop %v788
    %v790 = vadd.f32 %v789, 1.0
    %v791 = vrcp.pop %v790
    %v792 = vmul.f32 1.0, %v791
    %v793 = vtanh.pop %v762
    %v794 = vmul.f32 %v792, %v682
    %796 = vrot.lane.b32.xlu0 %v793, 64
    %v797 = vpop.permute.xlu0 %796
    %v799 = vmul.f32 %v792, %v797
    %801 = vrot.lane.b32.xlu0 %v799, 32
    %v802 = vpop.permute.xlu0 %801
    %v804 = vadd.f32 %v794, %v802
    %v805 = vtanh.pop %v804
    %807 = vrot.lane.b32.xlu0 %v805, 64
    %v808 = vpop.permute.xlu0 %807
    %v810 = vmul.f32 %v792, %v808
    %v811 = vpack.c.bf16 %v786, %v786
    %v813 = vunpack.c.l.b16 %v811
    %v814 = vpack.c.b16 %v813, %v813
    %815 = vrot.lane.b32.xlu0 %v814, 32
    %v816 = vpop.permute.xlu0 %815
    %s818 = scalar_lea.vmem %s3, 16
    %819 = vst.msk [vmem:[%s818] sm:$0xf] %vm330, %v816
    %v820 = vpack.c.bf16 %v810, %v810
    %v822 = vunpack.c.l.b16 %v820
    %v823 = vpack.c.b16 %v822, %v822
    %824 = vrot.lane.b32.xlu0 %v823, 32
    %v825 = vpop.permute.xlu0 %824
    %s827 = scalar_lea.vmem %s173, 12
    %828 = vst.msk [vmem:[%s827] sm:$0xf] %vm330, %v825
    %v829 = vpack.c.bf16 %v810, %v786
    %831 = vrot.lane.b32.xlu0 %v829, 32
    %v832 = vpop.permute.xlu0 %831
    %v834 = vsel %vm215, %v832, 0
    %836 = vmatprep.subr.bf16.mxu0 %v208
    %837 = vmatpush1.bf16.msra.mxu0 %v207
    %838 = vmatprep.subr.bf16.mxu0 %v210
    %839 = vmatpush1.bf16.msra.mxu0 %v209
    %840 = vmatprep.subr.bf16.mxu0 0
    %841 = vmatpush1.bf16.msra.mxu0 0
    %842 = vmatprep.subr.bf16.mxu0 0
    %843 = vmatpush1.bf16.msra.mxu0 0
    %844 = vmatprep.subr.bf16.mxu0 0
    %845 = vmatpush1.bf16.msra.mxu0 0
    %846 = vmatprep.subr.bf16.mxu0 0
    %847 = vmatpush1.bf16.msra.mxu0 0
    %848 = vmatprep.subr.bf16.mxu0 0
    %849 = vmatpush1.bf16.msra.mxu0 0
    %850 = vmatprep.subr.bf16.mxu0 0
    %851 = vmatpush1.bf16.msra.mxu0 0
    %852 = vmatprep.subr.bf16.mxu0 0
    %853 = vmatpush1.bf16.msra.mxu0 0
    %854 = vmatprep.subr.bf16.mxu0 0
    %855 = vmatpush1.bf16.msra.mxu0 0
    %856 = vmatprep.subr.bf16.mxu0 0
    %857 = vmatpush1.bf16.msra.mxu0 0
    %858 = vmatprep.subr.bf16.mxu0 0
    %859 = vmatpush1.bf16.msra.mxu0 0
    %860 = vmatprep.subr.bf16.mxu0 0
    %861 = vmatpush1.bf16.msra.mxu0 0
    %862 = vmatprep.subr.bf16.mxu0 0
    %863 = vmatpush1.bf16.msra.mxu0 0
    %864 = vmatprep.subr.bf16.mxu0 0
    %865 = vmatpush1.bf16.msra.mxu0 0
    %866 = vmatprep.subr.bf16.mxu0 0
    %867 = vmatpush1.bf16.msra.mxu0 0
    %868 = vmatprep.mubr.bf16.mxu0 0
    %869 = vmatmul.mubr.bf16.gmra.mrb[0].mxu0 %v834
    %v870 = vpop.f32.mrb[0].mxu0
    %v871 = vadd.f32 0.0, %v870
    %v872 = vpop.f32.mrb[0].mxu0
    %v873 = vpop.f32.mrb[0].mxu0
    %v874 = vpop.f32.mrb[0].mxu0
    %v875 = vadd.f32 0.0, %v874
    %876 = vdwg.mxu0
    %s877 = scalar_lea.vmem [#allocation4], 20
    %v878 = vld [vmem:[%s877] sm:$0xf]
    %v879 = vunpack.c.l.bf16 %v878
    %v880 = vadd.f32 %v879, %v871
    %s881 = scalar_lea.vmem [#allocation5], 8
    %v882 = vld [vmem:[%s881] sm:$0xf]
    %v883 = vunpack.c.l.bf16 %v882
    %v884 = vadd.f32 %v883, %v875
    %v885 = vxor.u32 %v880, 2147483648
    %v886 = vmul.f32 %v885, 1.442695
    %v887 = vpow.pop %v886
    %v888 = vadd.f32 %v887, 1.0
    %v889 = vrcp.pop %v888
    %v890 = vmul.f32 1.0, %v889
    %v891 = vtanh.pop %v880
    %v892 = vmul.f32 %v890, %v780
    %894 = vrot.lane.b32.xlu0 %v891, 64
    %v895 = vpop.permute.xlu0 %894
    %v897 = vmul.f32 %v890, %v895
    %899 = vrot.lane.b32.xlu0 %v897, 32
    %v900 = vpop.permute.xlu0 %899
    %v902 = vadd.f32 %v892, %v900
    %v903 = vtanh.pop %v902
    %905 = vrot.lane.b32.xlu0 %v903, 64
    %v906 = vpop.permute.xlu0 %905
    %v908 = vmul.f32 %v890, %v906
    %v909 = vxor.u32 %v884, 2147483648
    %v910 = vmul.f32 %v909, 1.442695
    %v911 = vpow.pop %v910
    %v912 = vadd.f32 %v911, 1.0
    %v913 = vrcp.pop %v912
    %v914 = vmul.f32 1.0, %v913
    %v915 = vtanh.pop %v884
    %v916 = vmul.f32 %v914, %v804
    %918 = vrot.lane.b32.xlu0 %v915, 64
    %v919 = vpop.permute.xlu0 %918
    %v921 = vmul.f32 %v914, %v919
    %923 = vrot.lane.b32.xlu0 %v921, 32
    %v924 = vpop.permute.xlu0 %923
    %v926 = vadd.f32 %v916, %v924
    %v927 = vtanh.pop %v926
    %929 = vrot.lane.b32.xlu0 %v927, 64
    %v930 = vpop.permute.xlu0 %929
    %v932 = vmul.f32 %v914, %v930
    %v933 = vpack.c.bf16 %v908, %v908
    %v935 = vunpack.c.l.b16 %v933
    %v936 = vpack.c.b16 %v935, %v935
    %937 = vrot.lane.b32.xlu0 %v936, 32
    %v938 = vpop.permute.xlu0 %937
    %s940 = scalar_lea.vmem %s3, 20
    %941 = vst.msk [vmem:[%s940] sm:$0xf] %vm330, %v938
    %v942 = vpack.c.bf16 %v932, %v932
    %v944 = vunpack.c.l.b16 %v942
    %v945 = vpack.c.b16 %v944, %v944
    %946 = vrot.lane.b32.xlu0 %v945, 32
    %v947 = vpop.permute.xlu0 %946
    %s949 = scalar_lea.vmem %s173, 8
    %950 = vst.msk [vmem:[%s949] sm:$0xf] %vm330, %v947
    %v951 = vpack.c.bf16 %v932, %v908
    %953 = vrot.lane.b32.xlu0 %v951, 32
    %v954 = vpop.permute.xlu0 %953
    %v956 = vsel %vm215, %v954, 0
    %958 = vmatprep.subr.bf16.mxu0 %v208
    %959 = vmatpush1.bf16.msra.mxu0 %v207
    %960 = vmatprep.subr.bf16.mxu0 %v210
    %961 = vmatpush1.bf16.msra.mxu0 %v209
    %962 = vmatprep.subr.bf16.mxu0 0
    %963 = vmatpush1.bf16.msra.mxu0 0
    %964 = vmatprep.subr.bf16.mxu0 0
    %965 = vmatpush1.bf16.msra.mxu0 0
    %966 = vmatprep.subr.bf16.mxu0 0
    %967 = vmatpush1.bf16.msra.mxu0 0
    %968 = vmatprep.subr.bf16.mxu0 0
    %969 = vmatpush1.bf16.msra.mxu0 0
    %970 = vmatprep.subr.bf16.mxu0 0
    %971 = vmatpush1.bf16.msra.mxu0 0
    %972 = vmatprep.subr.bf16.mxu0 0
    %973 = vmatpush1.bf16.msra.mxu0 0
    %974 = vmatprep.subr.bf16.mxu0 0
    %975 = vmatpush1.bf16.msra.mxu0 0
    %976 = vmatprep.subr.bf16.mxu0 0
    %977 = vmatpush1.bf16.msra.mxu0 0
    %978 = vmatprep.subr.bf16.mxu0 0
    %979 = vmatpush1.bf16.msra.mxu0 0
    %980 = vmatprep.subr.bf16.mxu0 0
    %981 = vmatpush1.bf16.msra.mxu0 0
    %982 = vmatprep.subr.bf16.mxu0 0
    %983 = vmatpush1.bf16.msra.mxu0 0
    %984 = vmatprep.subr.bf16.mxu0 0
    %985 = vmatpush1.bf16.msra.mxu0 0
    %986 = vmatprep.subr.bf16.mxu0 0
    %987 = vmatpush1.bf16.msra.mxu0 0
    %988 = vmatprep.subr.bf16.mxu0 0
    %989 = vmatpush1.bf16.msra.mxu0 0
    %990 = vmatprep.mubr.bf16.mxu0 0
    %991 = vmatmul.mubr.bf16.gmra.mrb[0].mxu0 %v956
    %v992 = vpop.f32.mrb[0].mxu0
    %v993 = vadd.f32 0.0, %v992
    %v994 = vpop.f32.mrb[0].mxu0
    %v995 = vpop.f32.mrb[0].mxu0
    %v996 = vpop.f32.mrb[0].mxu0
    %v997 = vadd.f32 0.0, %v996
    %998 = vdwg.mxu0
    %s999 = scalar_lea.vmem [#allocation4], 24
    %v1000 = vld [vmem:[%s999] sm:$0xf]
    %v1001 = vunpack.c.l.bf16 %v1000
    %v1002 = vadd.f32 %v1001, %v993
    %s1003 = scalar_lea.vmem [#allocation5], 4
    %v1004 = vld [vmem:[%s1003] sm:$0xf]
    %v1005 = vunpack.c.l.bf16 %v1004
    %v1006 = vadd.f32 %v1005, %v997
    %v1007 = vxor.u32 %v1002, 2147483648
    %v1008 = vmul.f32 %v1007, 1.442695
    %v1009 = vpow.pop %v1008
    %v1010 = vadd.f32 %v1009, 1.0
    %v1011 = vrcp.pop %v1010
    %v1012 = vmul.f32 1.0, %v1011
    %v1013 = vtanh.pop %v1002
    %v1014 = vmul.f32 %v1012, %v902
    %1016 = vrot.lane.b32.xlu0 %v1013, 64
    %v1017 = vpop.permute.xlu0 %1016
    %v1019 = vmul.f32 %v1012, %v1017
    %1021 = vrot.lane.b32.xlu0 %v1019, 32
    %v1022 = vpop.permute.xlu0 %1021
    %v1024 = vadd.f32 %v1014, %v1022
    %v1025 = vtanh.pop %v1024
    %1027 = vrot.lane.b32.xlu0 %v1025, 64
    %v1028 = vpop.permute.xlu0 %1027
    %v1030 = vmul.f32 %v1012, %v1028
    %v1031 = vxor.u32 %v1006, 2147483648
    %v1032 = vmul.f32 %v1031, 1.442695
    %v1033 = vpow.pop %v1032
    %v1034 = vadd.f32 %v1033, 1.0
    %v1035 = vrcp.pop %v1034
    %v1036 = vmul.f32 1.0, %v1035
    %v1037 = vtanh.pop %v1006
    %v1038 = vmul.f32 %v1036, %v926
    %1040 = vrot.lane.b32.xlu0 %v1037, 64
    %v1041 = vpop.permute.xlu0 %1040
    %v1043 = vmul.f32 %v1036, %v1041
    %1045 = vrot.lane.b32.xlu0 %v1043, 32
    %v1046 = vpop.permute.xlu0 %1045
    %v1048 = vadd.f32 %v1038, %v1046
    %v1049 = vtanh.pop %v1048
    %1051 = vrot.lane.b32.xlu0 %v1049, 64
    %v1052 = vpop.permute.xlu0 %1051
    %v1054 = vmul.f32 %v1036, %v1052
    %v1055 = vpack.c.bf16 %v1030, %v1030
    %v1057 = vunpack.c.l.b16 %v1055
    %v1058 = vpack.c.b16 %v1057, %v1057
    %1059 = vrot.lane.b32.xlu0 %v1058, 32
    %v1060 = vpop.permute.xlu0 %1059
    %s1062 = scalar_lea.vmem %s3, 24
    %1063 = vst.msk [vmem:[%s1062] sm:$0xf] %vm330, %v1060
    %v1064 = vpack.c.bf16 %v1054, %v1054
    %v1066 = vunpack.c.l.b16 %v1064
    %v1067 = vpack.c.b16 %v1066, %v1066
    %1068 = vrot.lane.b32.xlu0 %v1067, 32
    %v1069 = vpop.permute.xlu0 %1068
    %s1071 = scalar_lea.vmem %s173, 4
    %1072 = vst.msk [vmem:[%s1071] sm:$0xf] %vm330, %v1069
    %v1073 = vpack.c.bf16 %v1054, %v1030
    %1075 = vrot.lane.b32.xlu0 %v1073, 32
    %v1076 = vpop.permute.xlu0 %1075
    %v1078 = vsel %vm215, %v1076, 0
    %1080 = vmatprep.subr.bf16.mxu0 %v208
    %1081 = vmatpush1.bf16.msra.mxu0 %v207
    %1082 = vmatprep.subr.bf16.mxu0 %v210
    %1083 = vmatpush1.bf16.msra.mxu0 %v209
    %1084 = vmatprep.subr.bf16.mxu0 0
    %1085 = vmatpush1.bf16.msra.mxu0 0
    %1086 = vmatprep.subr.bf16.mxu0 0
    %1087 = vmatpush1.bf16.msra.mxu0 0
    %1088 = vmatprep.subr.bf16.mxu0 0
    %1089 = vmatpush1.bf16.msra.mxu0 0
    %1090 = vmatprep.subr.bf16.mxu0 0
    %1091 = vmatpush1.bf16.msra.mxu0 0
    %1092 = vmatprep.subr.bf16.mxu0 0
    %1093 = vmatpush1.bf16.msra.mxu0 0
    %1094 = vmatprep.subr.bf16.mxu0 0
    %1095 = vmatpush1.bf16.msra.mxu0 0
    %1096 = vmatprep.subr.bf16.mxu0 0
    %1097 = vmatpush1.bf16.msra.mxu0 0
    %1098 = vmatprep.subr.bf16.mxu0 0
    %1099 = vmatpush1.bf16.msra.mxu0 0
    %1100 = vmatprep.subr.bf16.mxu0 0
    %1101 = vmatpush1.bf16.msra.mxu0 0
    %1102 = vmatprep.subr.bf16.mxu0 0
    %1103 = vmatpush1.bf16.msra.mxu0 0
    %1104 = vmatprep.subr.bf16.mxu0 0
    %1105 = vmatpush1.bf16.msra.mxu0 0
    %1106 = vmatprep.subr.bf16.mxu0 0
    %1107 = vmatpush1.bf16.msra.mxu0 0
    %1108 = vmatprep.subr.bf16.mxu0 0
    %1109 = vmatpush1.bf16.msra.mxu0 0
    %1110 = vmatprep.subr.bf16.mxu0 0
    %1111 = vmatpush1.bf16.msra.mxu0 0
    %1112 = vmatprep.mubr.bf16.mxu0 0
    %1113 = vmatmul.mubr.bf16.gmra.mrb[0].mxu0 %v1078
    %v1114 = vpop.f32.mrb[0].mxu0
    %v1115 = vadd.f32 0.0, %v1114
    %v1116 = vpop.f32.mrb[0].mxu0
    %v1117 = vpop.f32.mrb[0].mxu0
    %v1118 = vpop.f32.mrb[0].mxu0
    %v1119 = vadd.f32 0.0, %v1118
    %1120 = vdwg.mxu0
    %s1121 = scalar_lea.vmem [#allocation4], 28
    %v1122 = vld [vmem:[%s1121] sm:$0xf]
    %v1123 = vunpack.c.l.bf16 %v1122
    %v1124 = vadd.f32 %v1123, %v1115
    %v1125 = vld [vmem:[#allocation5] sm:$0xf]
    %v1126 = vunpack.c.l.bf16 %v1125
    %v1127 = vadd.f32 %v1126, %v1119
    %v1128 = vxor.u32 %v1124, 2147483648
    %v1129 = vmul.f32 %v1128, 1.442695
    %v1130 = vpow.pop %v1129
    %v1131 = vadd.f32 %v1130, 1.0
    %v1132 = vrcp.pop %v1131
    %v1133 = vmul.f32 1.0, %v1132
    %v1134 = vtanh.pop %v1124
    %v1135 = vmul.f32 %v1133, %v1024
    %1137 = vrot.lane.b32.xlu0 %v1134, 64
    %v1138 = vpop.permute.xlu0 %1137
    %v1140 = vmul.f32 %v1133, %v1138
    %1142 = vrot.lane.b32.xlu0 %v1140, 32
    %v1143 = vpop.permute.xlu0 %1142
    %v1145 = vadd.f32 %v1135, %v1143
    %v1146 = vtanh.pop %v1145
    %1148 = vrot.lane.b32.xlu0 %v1146, 64
    %v1149 = vpop.permute.xlu0 %1148
    %v1151 = vmul.f32 %v1133, %v1149
    %v1152 = vxor.u32 %v1127, 2147483648
    %v1153 = vmul.f32 %v1152, 1.442695
    %v1154 = vpow.pop %v1153
    %v1155 = vadd.f32 %v1154, 1.0
    %v1156 = vrcp.pop %v1155
    %v1157 = vmul.f32 1.0, %v1156
    %v1158 = vtanh.pop %v1127
    %v1159 = vmul.f32 %v1157, %v1048
    %1161 = vrot.lane.b32.xlu0 %v1158, 64
    %v1162 = vpop.permute.xlu0 %1161
    %v1164 = vmul.f32 %v1157, %v1162
    %1166 = vrot.lane.b32.xlu0 %v1164, 32
    %v1167 = vpop.permute.xlu0 %1166
    %v1169 = vadd.f32 %v1159, %v1167
    %v1170 = vtanh.pop %v1169
    %1172 = vrot.lane.b32.xlu0 %v1170, 64
    %v1173 = vpop.permute.xlu0 %1172
    %v1175 = vmul.f32 %v1157, %v1173
    %v1176 = vpack.c.bf16 %v1151, %v1151
    %v1178 = vunpack.c.l.b16 %v1176
    %v1179 = vpack.c.b16 %v1178, %v1178
    %1180 = vrot.lane.b32.xlu0 %v1179, 32
    %v1181 = vpop.permute.xlu0 %1180
    %s1183 = scalar_lea.vmem %s3, 28
    %1184 = vst.msk [vmem:[%s1183] sm:$0xf] %vm330, %v1181
    %v1185 = vpack.c.bf16 %v1175, %v1175
    %v1187 = vunpack.c.l.b16 %v1185
    %v1188 = vpack.c.b16 %v1187, %v1187
    %1189 = vrot.lane.b32.xlu0 %v1188, 32
    %v1190 = vpop.permute.xlu0 %1189
    %1192 = vst.msk [vmem:[%s173] sm:$0xf] %vm330, %v1190
    %1195 = vrot.lane.b32.xlu0 %v1151, 32
    %v1196 = vpop.permute.xlu0 %1195
    %1197 = vrot.lane.b32.xlu0 %v1175, 32
    %v1198 = vpop.permute.xlu0 %1197
    %1201 = vst.msk [vmem:[#allocation2] sm:$0xff] %vm215, %v1196
    %1202 = vst.msk [vmem:[#allocation2 + $0x8] sm:$0xff] %vm215, %v1198
    %1205 = vrot.lane.b32.xlu0 %v1145, 96
    %v1206 = vpop.permute.xlu0 %1205
    %1207 = vrot.lane.b32.xlu0 %v1169, 96
    %v1208 = vpop.permute.xlu0 %1207
    %1211 = vst.msk [vmem:[#allocation3] sm:$0xff] %vm215, %v1206
    %1212 = vst.msk [vmem:[#allocation3 + $0x8] sm:$0xff] %vm215, %v1208
    %s1213 = ssub.s32 0, 0
    %s1214 = smul.u32 8, %s1213
    %p1215 = scmp.lt.s32.totalorder %s1214, 7
    %s1216 = scalar_select %p1215, %s1214, 7
    %s1217 = smul.addr %s1216, 4
    %s1218 = scalar_lea.vmem %s4, %s1217
    // Predicated region
    $region100: #{blstm_forward.6} parent=1 // pred_check
      _
    $region101: #{blstm_forward.6} parent=1 // pred_check_branch
      %1220 = sbr.rel (0) target = $region103
    $region102: #{blstm_forward.6} parent=1 // pred_region
      _
    $region103: #{blstm_forward.6} parent=1 // pred_fallthru
      _
    // Predicated region
    $region104: #{blstm_forward.6} parent=1 // pred_check
      _
    $region105: #{blstm_forward.6} parent=1 // pred_check_branch
      %1222 = sbr.rel (0) target = $region107
    $region106: #{blstm_forward.6} parent=1 // pred_region
      %s1223 = ssub.s32 0, 0
      %s1224 = smul.u32 8, %s1223
    $region107: #{blstm_forward.6} parent=1 // pred_fallthru
      _
    // Predicated region
    $region108: #{blstm_forward.6} parent=1 // pred_check
      _
    $region109: #{blstm_forward.6} parent=1 // pred_check_branch
      %1226 = sbr.rel (0) target = $region111
    $region110: #{blstm_forward.6} parent=1 // pred_region
      _
    $region111: #{blstm_forward.6} parent=1 // pred_fallthru
      _
    // Predicated region
    $region112: #{blstm_forward.6} parent=1 // pred_check
      _
    $region113: #{blstm_forward.6} parent=1 // pred_check_branch
      %1228 = sbr.rel (0) target = $region115
    $region114: #{blstm_forward.6} parent=1 // pred_region
      %s1229 = ssub.s32 0, 0
      %s1230 = smul.u32 8, %s1229
      %p1231 = scmp.lt.s32.totalorder %s1230, 7
      %s1232 = scalar_select %p1231, %s1230, 7
      %s1233 = smul.addr %s1232, 4
      %s1234 = scalar_lea.vmem %s4, %s1233
    $region115: #{blstm_forward.6} parent=1 // pred_fallthru
      _

</llo_original>
